<compile_context>
chip_gen: v7x
topology: tpu7x:2x2x1
jax: 0.10.0
libtpu: 0.0.40
codegen_flags: <defaults>
</compile_context>

<pallas_src>
import functools

import jax
import jax.numpy as jnp
from jax import lax
from jax.experimental import pallas as pl
from jax.experimental.pallas import tpu as pltpu

EPS = 1e-5
LANE = 128

# 48 MiB: comfortably above the 16/32 MiB scoped defaults on v5e/v6e, and still
# safely below v7x's 64 MiB physical VMEM per TensorCore.
_COMPILER_PARAMS = pltpu.CompilerParams(
    dimension_semantics=("parallel",),
    vmem_limit_bytes=48 * 1024 * 1024,
)


# ------------------------------ small helpers -------------------------------

def _pad_to(n, mult):
    return ((n + mult - 1) // mult) * mult


def _choose_tile_m(m, target=1024):
    """M tile: multiple of 8, <= target.  Ragged last tile handled by padding
    M with zero rows (+ in-kernel row masking where needed), so the tile size
    never silently degrades for awkward M."""
    tm = min(target, _pad_to(m, 8))
    tm -= tm % 8
    return max(tm, 8)


def _stats_to_affine(stats, count, gamma, beta):
    """Fold per-tile (sum, sum_sq) partials into the BN affine (scale, shift)."""
    s = jnp.sum(stats[:, 0, :], axis=0)
    ss = jnp.sum(stats[:, 1, :], axis=0)
    mean = s / count
    var = jnp.maximum(ss / count - mean * mean, 0.0)
    scale = gamma * lax.rsqrt(var + EPS)
    shift = beta - mean * scale
    return scale.reshape(1, -1), shift.reshape(1, -1)


# ----------------------------- Pallas kernels --------------------------------

def _matmul_stats_kernel(x_ref, w_ref, y_ref, st_ref):
    # conv1x1 as matmul; emit raw output + per-channel one-pass (sum, sum_sq).
    y = jnp.dot(x_ref[...], w_ref[...], preferred_element_type=jnp.float32)
    y_ref[...] = y.astype(y_ref.dtype)
    st_ref[0, 0:1, :] = jnp.sum(y, axis=0, keepdims=True)
    st_ref[0, 1:2, :] = jnp.sum(y * y, axis=0, keepdims=True)


def _make_affine_relu_matmul_stats_kernel(tm, m_true, need_mask):
    """Fused: BN-apply (scale/shift, f32) + ReLU prologue, conv1x1 matmul,
    next-stage BN stat partials.  Pad rows (beyond m_true) are zeroed before
    the dot so the stats stay exact under ragged M tiling."""

    def kernel(x_ref, w_ref, sc_ref, sh_ref, y_ref, st_ref):
        a = jnp.maximum(
            x_ref[...].astype(jnp.float32) * sc_ref[...] + sh_ref[...], 0.0)
        if need_mask:
            row = pl.program_id(0) * tm + lax.broadcasted_iota(
                jnp.int32, (tm, 1), 0)
            a = jnp.where(row < m_true, a, 0.0)
        y = jnp.dot(a.astype(w_ref.dtype), w_ref[...],
                    preferred_element_type=jnp.float32)
        y_ref[...] = y.astype(y_ref.dtype)
        st_ref[0, 0:1, :] = jnp.sum(y, axis=0, keepdims=True)
        st_ref[0, 1:2, :] = jnp.sum(y * y, axis=0, keepdims=True)

    return kernel


def _make_conv3x3_kernel(h, w, cin_p, cout_p):
    """conv3x3 (stride=1, pad=1) per image: BN1-apply + ReLU prologue, halo
    built in VMEM (no HBM pad, no iota masks), 9 shifted patches concatenated
    into a single deep-K im2col matmul."""

    def kernel(x_ref, w_ref, sc_ref, sh_ref, y_ref, st_ref, pad_ref):
        # Zero the padded scratch every step (cheap; keeps megacore-safe), then
        # write the BN1+ReLU'd interior.  The 1-px halo stays zero.
        pad_ref[...] = jnp.zeros_like(pad_ref)
        a = jnp.maximum(
            x_ref[0].astype(jnp.float32) * sc_ref[...].reshape(1, 1, cin_p)
            + sh_ref[...].reshape(1, 1, cin_p), 0.0)
        pad_ref[1:h + 1, 1:w + 1, :] = a.astype(pad_ref.dtype)

        # 9 shifted patches -> one K = 9*Cmid MXU dot (deep K fills the MXU).
        patches = [pad_ref[kh:kh + h, kw:kw + w, :]
                   for kh in range(3) for kw in range(3)]
        im2col = jnp.concatenate(patches, axis=-1).reshape(h * w, 9 * cin_p)
        acc = jnp.dot(im2col, w_ref[...], preferred_element_type=jnp.float32)

        y_ref[...] = acc.reshape(1, h, w, cout_p).astype(y_ref.dtype)
        st_ref[0, 0:1, :] = jnp.sum(acc, axis=0, keepdims=True)
        st_ref[0, 1:2, :] = jnp.sum(acc * acc, axis=0, keepdims=True)

    return kernel


def _bn_add_relu_kernel(y_ref, id_ref, sc_ref, sh_ref, o_ref):
    # Epilogue: BN3-apply + residual add + ReLU (all f32 math).
    o = jnp.maximum(
        y_ref[...].astype(jnp.float32) * sc_ref[...] + sh_ref[...]
        + id_ref[...].astype(jnp.float32), 0.0)
    o_ref[...] = o.astype(o_ref.dtype)


# ---------------------------- pallas_call wrappers ---------------------------

def _conv1x1_stats(x2d, wmat, tm):
    m, k = x2d.shape
    c = wmat.shape[1]
    mt = m // tm
    return pl.pallas_call(
        _matmul_stats_kernel,
        out_shape=(jax.ShapeDtypeStruct((m, c), x2d.dtype),
                   jax.ShapeDtypeStruct((mt, 2, c), jnp.float32)),
        grid=(mt,),
        in_specs=[pl.BlockSpec((tm, k), lambda i: (i, 0)),
                  pl.BlockSpec((k, c), lambda i: (0, 0))],
        out_specs=(pl.BlockSpec((tm, c), lambda i: (i, 0)),
                   pl.BlockSpec((1, 2, c), lambda i: (i, 0, 0))),
        compiler_params=_COMPILER_PARAMS,
    )(x2d, wmat)


def _affine_relu_conv1x1_stats(x2d, wmat, scale, shift, tm, m_true):
    m, k = x2d.shape
    c = wmat.shape[1]
    mt = m // tm
    kernel = _make_affine_relu_matmul_stats_kernel(tm, m_true,
                                                   need_mask=(m_true != m))
    return pl.pallas_call(
        kernel,
        out_shape=(jax.ShapeDtypeStruct((m, c), x2d.dtype),
                   jax.ShapeDtypeStruct((mt, 2, c), jnp.float32)),
        grid=(mt,),
        in_specs=[pl.BlockSpec((tm, k), lambda i: (i, 0)),
                  pl.BlockSpec((k, c), lambda i: (0, 0)),
                  pl.BlockSpec((1, k), lambda i: (0, 0)),
                  pl.BlockSpec((1, k), lambda i: (0, 0))],
        out_specs=(pl.BlockSpec((tm, c), lambda i: (i, 0)),
                   pl.BlockSpec((1, 2, c), lambda i: (i, 0, 0))),
        compiler_params=_COMPILER_PARAMS,
    )(x2d, wmat, scale, shift)


def _conv3x3_stats(y1_img, w2m, scale, shift, h, w):
    n, _, _, cin_p = y1_img.shape
    cout_p = w2m.shape[1]
    return pl.pallas_call(
        _make_conv3x3_kernel(h, w, cin_p, cout_p),
        out_shape=(jax.ShapeDtypeStruct((n, h, w, cout_p), y1_img.dtype),
                   jax.ShapeDtypeStruct((n, 2, cout_p), jnp.float32)),
        grid=(n,),
        in_specs=[pl.BlockSpec((1, h, w, cin_p), lambda i: (i, 0, 0, 0)),
                  pl.BlockSpec((9 * cin_p, cout_p), lambda i: (0, 0)),
                  pl.BlockSpec((1, cin_p), lambda i: (0, 0)),
                  pl.BlockSpec((1, cin_p), lambda i: (0, 0))],
        out_specs=(pl.BlockSpec((1, h, w, cout_p), lambda i: (i, 0, 0, 0)),
                   pl.BlockSpec((1, 2, cout_p), lambda i: (i, 0, 0))),
        scratch_shapes=[pltpu.VMEM((h + 2, w + 2, cin_p), y1_img.dtype)],
        compiler_params=_COMPILER_PARAMS,
    )(y1_img, w2m, scale, shift)


def _bn_add_relu(y3, identity, scale, shift, tm):
    m, c = y3.shape
    mt = m // tm
    return pl.pallas_call(
        _bn_add_relu_kernel,
        out_shape=jax.ShapeDtypeStruct((m, c), y3.dtype),
        grid=(mt,),
        in_specs=[pl.BlockSpec((tm, c), lambda i: (i, 0)),
                  pl.BlockSpec((tm, c), lambda i: (i, 0)),
                  pl.BlockSpec((1, c), lambda i: (0, 0)),
                  pl.BlockSpec((1, c), lambda i: (0, 0))],
        out_specs=pl.BlockSpec((tm, c), lambda i: (i, 0)),
        input_output_aliases={0: 0},            # write output over y3's buffer
        compiler_params=_COMPILER_PARAMS,
    )(y3, identity, scale, shift)


# ---------------------------- parameter preparation --------------------------

def prepare_params(params, compute_dtype=jnp.bfloat16):
    """One-time weight prep: transposes, HWIO reorder -> (9*Cmid, Cmid) matrix
    for the deep-K conv3x3, zero-pad to 128 lanes, cast matmul weights to the
    compute dtype (BN params stay f32)."""
    w1, w2, w3 = params["w1"], params["w2"], params["w3"]
    width, cin = w1.shape[0], w1.shape[1]
    cout = w3.shape[0]
    cin_p = _pad_to(cin, LANE)
    width_p = _pad_to(width, LANE)
    cout_p = _pad_to(cout, LANE)

    def pad2(a, r, c):
        return jnp.pad(a, ((0, r - a.shape[0]), (0, c - a.shape[1])))

    def pad1(a, c):
        return jnp.pad(a, (0, c - a.shape[0]))

    w1m = pad2(jnp.transpose(w1[:, :, 0, 0]), cin_p, width_p).astype(compute_dtype)
    w3m = pad2(jnp.transpose(w3[:, :, 0, 0]), width_p, cout_p).astype(compute_dtype)
    w2h = jnp.transpose(w2, (2, 3, 1, 0))                     # (3,3,Cin,Cout) HWIO
    w2h = jnp.pad(w2h, ((0, 0), (0, 0),
                        (0, width_p - width), (0, width_p - width)))
    # Rows ordered (kh, kw, cin) to match the in-kernel patch concat order.
    w2m = w2h.reshape(9 * width_p, width_p).astype(compute_dtype)

    weights = dict(
        w1m=w1m, w2m=w2m, w3m=w3m,
        g1=pad1(params["g1"], width_p).astype(jnp.float32),
        b1=pad1(params["b1"], width_p).astype(jnp.float32),
        g2=pad1(params["g2"], width_p).astype(jnp.float32),
        b2=pad1(params["b2"], width_p).astype(jnp.float32),
        g3=pad1(params["g3"], cout_p).astype(jnp.float32),
        b3=pad1(params["b3"], cout_p).astype(jnp.float32),
    )
    meta = dict(cin=cin, width=width, cout=cout,
                cin_p=cin_p, width_p=width_p, cout_p=cout_p)
    return weights, meta


# -------------------------------- forward pass --------------------------------

def _bottleneck_forward(x_nchw, wts, *, meta, compute_dtype):
    """Bottleneck forward.  Input/Output are NCHW (PyTorch layout)."""
    cin, cout = meta["cin"], meta["cout"]
    cin_p, width_p, cout_p = meta["cin_p"], meta["width_p"], meta["cout_p"]
    assert cin == cout and cin_p == cout_p, \
        "residual path requires in_planes == expansion*out_planes (no downsample)"

    x = jnp.transpose(x_nchw, (0, 2, 3, 1))                   # NHWC
    n, h, w, _ = x.shape
    m = n * h * w
    tm = _choose_tile_m(m)
    m_pad = ((m + tm - 1) // tm) * tm

    # Lane-pad channels + (if ragged) zero-pad rows; compute dtype (bf16) input.
    x2d = x.reshape(m, cin).astype(compute_dtype)
    x2d = jnp.pad(x2d, ((0, m_pad - m), (0, cin_p - cin)))

    # Stage 1: conv1x1 matmul + BN1 one-pass stat partials (pad rows are zero,
    # so they add nothing to the sums; divide by the true count below).
    y1, st1 = _conv1x1_stats(x2d, wts["w1m"], tm)
    sc1, sh1 = _stats_to_affine(st1, m, wts["g1"], wts["b1"])

    # Stage 2: conv3x3 in-kernel (VMEM halo + deep-K im2col dot), BN1+ReLU fused.
    y1_img = y1[:m].reshape(n, h, w, width_p)
    y2, st2 = _conv3x3_stats(y1_img, wts["w2m"], sc1, sh1, h, w)
    sc2, sh2 = _stats_to_affine(st2, m, wts["g2"], wts["b2"])

    # Stage 3: conv1x1 matmul, BN2-apply + ReLU prologue (ragged rows masked).
    y2_2d = jnp.pad(y2.reshape(m, width_p), ((0, m_pad - m), (0, 0)))
    y3, st3 = _affine_relu_conv1x1_stats(y2_2d, wts["w3m"], sc2, sh2, tm, m)
    sc3, sh3 = _stats_to_affine(st3, m, wts["g3"], wts["b3"])

    # Epilogue: BN3-apply + residual add + ReLU, aliased onto y3's buffer.
    out = _bn_add_relu(y3, x2d, sc3, sh3, tm)

    out = out[:m, :cout].astype(jnp.float32).reshape(n, h, w, cout)
    return jnp.transpose(out, (0, 3, 1, 2))                   # NHWC -> NCHW


def make_bottleneck_fn(params, compute_dtype=jnp.bfloat16):
    """Returns a jitted x -> Bottleneck(x) callable (weights pre-packed)."""
    weights, meta = prepare_params(params, compute_dtype)
    fwd = jax.jit(functools.partial(_bottleneck_forward, meta=meta,
                                    compute_dtype=compute_dtype))
    return lambda x: fwd(x, weights)


# ----------------------------- pure-JAX reference -----------------------------

def bottleneck_reference(x_nchw, params):
    w1, g1, b1 = params["w1"], params["g1"], params["b1"]
    w2, g2, b2 = params["w2"], params["g2"], params["b2"]
    w3, g3, b3 = params["w3"], params["g3"], params["b3"]

    def bn(y, g, b):
        mean = jnp.mean(y, axis=(0, 1, 2), keepdims=True)
        var = jnp.mean(jnp.square(y - mean), axis=(0, 1, 2), keepdims=True)
        return (y - mean) * lax.rsqrt(var + EPS) * g + b

    x = jnp.transpose(x_nchw, (0, 2, 3, 1))
    y = jnp.einsum('nhwc,oc->nhwo', x, w1[:, :, 0, 0])
    y = jax.nn.relu(bn(y, g1, b1))
    y = lax.conv_general_dilated(
        y, jnp.transpose(w2, (2, 3, 1, 0)), window_strides=(1, 1),
        padding=((1, 1), (1, 1)), dimension_numbers=('NHWC', 'HWIO', 'NHWC'))
    y = jax.nn.relu(bn(y, g2, b2))
    y = jnp.einsum('nhwc,oc->nhwo', y, w3[:, :, 0, 0])
    y = jax.nn.relu(bn(y, g3, b3) + x)
    return jnp.transpose(y, (0, 3, 1, 2))


# ------------------------------------ main ------------------------------------

if __name__ == "__main__":
    key = jax.random.PRNGKey(0)
    ks = jax.random.split(key, 10)

    # Bottleneck(in_planes=16, out_planes=4): width = 4, expansion*out_planes = 16
    in_planes, out_planes, expansion = 16, 4, 4
    width = out_planes                      # base_width=64, groups=1
    c_out = out_planes * expansion          # == in_planes -> no downsample

    x = jax.random.normal(ks[0], (2, in_planes, 16, 16), jnp.float32)

    params = {
        "w1": 0.1 * jax.random.normal(ks[1], (width, in_planes, 1, 1), jnp.float32),
        "g1": 1.0 + 0.1 * jax.random.normal(ks[2], (width,), jnp.float32),
        "b1": 0.1 * jax.random.normal(ks[3], (width,), jnp.float32),
        "w2": 0.1 * jax.random.normal(ks[4], (width, width, 3, 3), jnp.float32),
        "g2": 1.0 + 0.1 * jax.random.normal(ks[5], (width,), jnp.float32),
        "b2": 0.1 * jax.random.normal(ks[6], (width,), jnp.float32),
        "w3": 0.1 * jax.random.normal(ks[7], (c_out, width, 1, 1), jnp.float32),
        "g3": 1.0 + 0.1 * jax.random.normal(ks[8], (c_out,), jnp.float32),
        "b3": 0.1 * jax.random.normal(ks[9], (c_out,), jnp.float32),
    }

    ref = bottleneck_reference(x, params)

    # f32 path: tight correctness check of the kernel structure and BN math.
    out_f32 = jax.block_until_ready(make_bottleneck_fn(params, jnp.float32)(x))
    assert out_f32.shape == (2, c_out, 16, 16), out_f32.shape
    err_f32 = float(jnp.max(jnp.abs(out_f32 - ref)))
    assert err_f32 < 1e-3, f"f32 mismatch vs reference: {err_f32}"

    # bf16 path (production default: MXU-native operands, half the HBM bytes).
    out_bf16 = jax.block_until_ready(make_bottleneck_fn(params, jnp.bfloat16)(x))
    assert out_bf16.shape == (2, c_out, 16, 16), out_bf16.shape
    err_bf16 = float(jnp.max(jnp.abs(out_bf16 - ref)))
    assert err_bf16 < 1e-1, f"bf16 mismatch vs reference: {err_bf16}"

    print("KERNEL_OK")
</pallas_src>

<mosaic_0001>
module attributes {stable_mosaic.version = 11 : i64} {
  func.func @_matmul_stats_kernel(%arg0: i32, %arg1: memref<512x128xf32, #tpu.memory_space<vmem>>, %arg2: memref<128x128xf32, #tpu.memory_space<vmem>>, %arg3: memref<512x128xf32, #tpu.memory_space<vmem>>, %arg4: memref<1x2x128xf32, #tpu.memory_space<vmem>>) attributes {dimension_semantics = [#tpu.dimension_semantics<parallel>], iteration_bounds = array<i64: 1>, scalar_prefetch = 0 : i64, scratch_operands = 0 : i64, tpu.core_type = #tpu.core_type<tc>, window_params = [{transform_indices = @transform_0, window_bounds = array<i64: 512, 128>}, {pipeline_mode = #tpu.pipeline_mode<synchronous>, transform_indices = @transform_1, window_bounds = array<i64: 128, 128>}, {transform_indices = @transform_2, window_bounds = array<i64: 512, 128>}, {transform_indices = @transform_3, window_bounds = array<i64: 1, 2, 128>}]} {
    %c0 = arith.constant 0 : index
    %c0_0 = arith.constant 0 : index
    %0 = vector.load %arg1[%c0, %c0_0] : memref<512x128xf32, #tpu.memory_space<vmem>>, vector<512x128xf32>
    %c0_1 = arith.constant 0 : index
    %c0_2 = arith.constant 0 : index
    %1 = vector.load %arg2[%c0_1, %c0_2] : memref<128x128xf32, #tpu.memory_space<vmem>>, vector<128x128xf32>
    %cst = arith.constant dense<0.000000e+00> : vector<512x128xf32>
    %2 = tpu.matmul %0, %1, %cst {dimension_numbers = #tpu.dot_dimension_numbers<[1], [0], [0], [1], [0, 0, 1, 1], [], []>} : vector<512x128xf32>, vector<128x128xf32>, vector<512x128xf32> -> vector<512x128xf32>
    %c0_3 = arith.constant 0 : index
    %c0_4 = arith.constant 0 : index
    %3 = vector.load %arg3[%c0_3, %c0_4] : memref<512x128xf32, #tpu.memory_space<vmem>>, vector<512x128xf32>
    tpu.vector_store %arg3[%c0_3, %c0_4], %2 {strides = array<i32>} : memref<512x128xf32, #tpu.memory_space<vmem>>, vector<512x128xf32>,
    %cst_5 = arith.constant dense<0.000000e+00> : vector<128xf32>
    %4 = vector.multi_reduction <add>, %2, %cst_5 [0] : vector<512x128xf32> to vector<128xf32>
    %5 = vector.shape_cast %4 : vector<128xf32> to vector<1x128xf32>
    %c0_6 = arith.constant 0 : index
    %c0_7 = arith.constant 0 : index
    %c0_8 = arith.constant 0 : index
    %6 = vector.load %arg4[%c0_6, %c0_7, %c0_8] : memref<1x2x128xf32, #tpu.memory_space<vmem>>, vector<1x1x128xf32>
    %7 = vector.shape_cast %6 : vector<1x1x128xf32> to vector<1x128xf32>
    %8 = vector.shape_cast %5 : vector<1x128xf32> to vector<1x1x128xf32>
    tpu.vector_store %arg4[%c0_6, %c0_7, %c0_8], %8 {strides = array<i32>} : memref<1x2x128xf32, #tpu.memory_space<vmem>>, vector<1x1x128xf32>,
    %9 = arith.mulf %2, %2 : vector<512x128xf32>
    %cst_9 = arith.constant dense<0.000000e+00> : vector<128xf32>
    %10 = vector.multi_reduction <add>, %9, %cst_9 [0] : vector<512x128xf32> to vector<128xf32>
    %11 = vector.shape_cast %10 : vector<128xf32> to vector<1x128xf32>
    %c0_10 = arith.constant 0 : index
    %c1 = arith.constant 1 : index
    %c0_11 = arith.constant 0 : index
    %12 = vector.load %arg4[%c0_10, %c1, %c0_11] : memref<1x2x128xf32, #tpu.memory_space<vmem>>, vector<1x1x128xf32>
    %13 = vector.shape_cast %12 : vector<1x1x128xf32> to vector<1x128xf32>
    %14 = vector.shape_cast %11 : vector<1x128xf32> to vector<1x1x128xf32>
    tpu.vector_store %arg4[%c0_10, %c1, %c0_11], %14 {strides = array<i32>} : memref<1x2x128xf32, #tpu.memory_space<vmem>>, vector<1x1x128xf32>,
    return
  }
  func.func @transform_0(%arg0: i32) -> (i32, i32) {
    %c0_i32 = arith.constant 0 : i32
    %c0_i32_0 = arith.constant 0 : i32
    return %arg0, %c0_i32 : i32, i32
  }
  func.func @transform_1(%arg0: i32) -> (i32, i32) {
    %c0_i32 = arith.constant 0 : i32
    %c0_i32_0 = arith.constant 0 : i32
    %c0_i32_1 = arith.constant 0 : i32
    return %c0_i32, %c0_i32_0 : i32, i32
  }
  func.func @transform_2(%arg0: i32) -> (i32, i32) {
    %c0_i32 = arith.constant 0 : i32
    %c0_i32_0 = arith.constant 0 : i32
    return %arg0, %c0_i32 : i32, i32
  }
  func.func @transform_3(%arg0: i32) -> (i32, i32, i32) {
    %c0_i32 = arith.constant 0 : i32
    %c0_i32_0 = arith.constant 0 : i32
    %c0_i32_1 = arith.constant 0 : i32
    return %arg0, %c0_i32, %c0_i32_0 : i32, i32, i32
  }
}

module attributes {stable_mosaic.version = 11 : i64} {
  func.func @kernel(%arg0: i32, %arg1: memref<1x16x16x128xf32, #tpu.memory_space<vmem>>, %arg2: memref<1152x128xf32, #tpu.memory_space<vmem>>, %arg3: memref<1x128xf32, #tpu.memory_space<vmem>>, %arg4: memref<1x128xf32, #tpu.memory_space<vmem>>, %arg5: memref<1x16x16x128xf32, #tpu.memory_space<vmem>>, %arg6: memref<1x2x128xf32, #tpu.memory_space<vmem>>, %arg7: memref<18x18x128xf32, #tpu.memory_space<vmem>>) attributes {dimension_semantics = [#tpu.dimension_semantics<parallel>], iteration_bounds = array<i64: 2>, scalar_prefetch = 0 : i64, scratch_operands = 1 : i64, tpu.core_type = #tpu.core_type<tc>, window_params = [{transform_indices = @transform_0, window_bounds = array<i64: 1, 16, 16, 128>}, {pipeline_mode = #tpu.pipeline_mode<synchronous>, transform_indices = @transform_1, window_bounds = array<i64: 1152, 128>}, {pipeline_mode = #tpu.pipeline_mode<synchronous>, transform_indices = @transform_2, window_bounds = array<i64: 1, 128>}, {pipeline_mode = #tpu.pipeline_mode<synchronous>, transform_indices = @transform_3, window_bounds = array<i64: 1, 128>}, {transform_indices = @transform_4, window_bounds = array<i64: 1, 16, 16, 128>}, {transform_indices = @transform_5, window_bounds = array<i64: 1, 2, 128>}]} {
    %cst = arith.constant 0.000000e+00 : f32
    %0 = vector.broadcast %cst : f32 to vector<18x18x128xf32>
    %c0 = arith.constant 0 : index
    %c0_0 = arith.constant 0 : index
    %c0_1 = arith.constant 0 : index
    %1 = vector.load %arg7[%c0, %c0_0, %c0_1] : memref<18x18x128xf32, #tpu.memory_space<vmem>>, vector<18x18x128xf32>
    tpu.vector_store %arg7[%c0, %c0_0, %c0_1], %0 {strides = array<i32>} : memref<18x18x128xf32, #tpu.memory_space<vmem>>, vector<18x18x128xf32>,
    %c0_2 = arith.constant 0 : index
    %c0_3 = arith.constant 0 : index
    %c0_4 = arith.constant 0 : index
    %c0_5 = arith.constant 0 : index
    %2 = vector.load %arg1[%c0_2, %c0_3, %c0_4, %c0_5] : memref<1x16x16x128xf32, #tpu.memory_space<vmem>>, vector<1x16x16x128xf32>
    %3 = vector.shape_cast %2 : vector<1x16x16x128xf32> to vector<16x16x128xf32>
    %c0_6 = arith.constant 0 : index
    %c0_7 = arith.constant 0 : index
    %4 = vector.load %arg3[%c0_6, %c0_7] : memref<1x128xf32, #tpu.memory_space<vmem>>, vector<1x128xf32>
    %5 = vector.shape_cast %4 : vector<1x128xf32> to vector<1x1x128xf32>
    %6 = vector.broadcast %5 : vector<1x1x128xf32> to vector<16x16x128xf32>
    %7 = arith.mulf %3, %6 : vector<16x16x128xf32>
    %c0_8 = arith.constant 0 : index
    %c0_9 = arith.constant 0 : index
    %8 = vector.load %arg4[%c0_8, %c0_9] : memref<1x128xf32, #tpu.memory_space<vmem>>, vector<1x128xf32>
    %9 = vector.shape_cast %8 : vector<1x128xf32> to vector<1x1x128xf32>
    %10 = vector.broadcast %9 : vector<1x1x128xf32> to vector<16x16x128xf32>
    %11 = arith.addf %7, %10 : vector<16x16x128xf32>
    %cst_10 = arith.constant 0.000000e+00 : f32
    %12 = vector.broadcast %cst_10 : f32 to vector<16x16x128xf32>
    %13 = arith.maximumf %11, %12 : vector<16x16x128xf32>
    %c1 = arith.constant 1 : index
    %c1_11 = arith.constant 1 : index
    %c0_12 = arith.constant 0 : index
    %14 = vector.load %arg7[%c1, %c1_11, %c0_12] : memref<18x18x128xf32, #tpu.memory_space<vmem>>, vector<16x16x128xf32>
    tpu.vector_store %arg7[%c1, %c1_11, %c0_12], %13 {strides = array<i32>} : memref<18x18x128xf32, #tpu.memory_space<vmem>>, vector<16x16x128xf32>,
    %c0_13 = arith.constant 0 : index
    %c0_14 = arith.constant 0 : index
    %c0_15 = arith.constant 0 : index
    %15 = vector.load %arg7[%c0_13, %c0_14, %c0_15] : memref<18x18x128xf32, #tpu.memory_space<vmem>>, vector<16x16x128xf32>
    %c0_16 = arith.constant 0 : index
    %c1_17 = arith.constant 1 : index
    %c0_18 = arith.constant 0 : index
    %16 = vector.load %arg7[%c0_16, %c1_17, %c0_18] : memref<18x18x128xf32, #tpu.memory_space<vmem>>, vector<16x16x128xf32>
    %c0_19 = arith.constant 0 : index
    %c2 = arith.constant 2 : index
    %c0_20 = arith.constant 0 : index
    %17 = vector.load %arg7[%c0_19, %c2, %c0_20] : memref<18x18x128xf32, #tpu.memory_space<vmem>>, vector<16x16x128xf32>
    %c1_21 = arith.constant 1 : index
    %c0_22 = arith.constant 0 : index
    %c0_23 = arith.constant 0 : index
    %18 = vector.load %arg7[%c1_21, %c0_22, %c0_23] : memref<18x18x128xf32, #tpu.memory_space<vmem>>, vector<16x16x128xf32>
    %c1_24 = arith.constant 1 : index
    %c1_25 = arith.constant 1 : index
    %c0_26 = arith.constant 0 : index
    %19 = vector.load %arg7[%c1_24, %c1_25, %c0_26] : memref<18x18x128xf32, #tpu.memory_space<vmem>>, vector<16x16x128xf32>
    %c1_27 = arith.constant 1 : index
    %c2_28 = arith.constant 2 : index
    %c0_29 = arith.constant 0 : index
    %20 = vector.load %arg7[%c1_27, %c2_28, %c0_29] : memref<18x18x128xf32, #tpu.memory_space<vmem>>, vector<16x16x128xf32>
    %c2_30 = arith.constant 2 : index
    %c0_31 = arith.constant 0 : index
    %c0_32 = arith.constant 0 : index
    %21 = vector.load %arg7[%c2_30, %c0_31, %c0_32] : memref<18x18x128xf32, #tpu.memory_space<vmem>>, vector<16x16x128xf32>
    %c2_33 = arith.constant 2 : index
    %c1_34 = arith.constant 1 : index
    %c0_35 = arith.constant 0 : index
    %22 = vector.load %arg7[%c2_33, %c1_34, %c0_35] : memref<18x18x128xf32, #tpu.memory_space<vmem>>, vector<16x16x128xf32>
    %c2_36 = arith.constant 2 : index
    %c2_37 = arith.constant 2 : index
    %c0_38 = arith.constant 0 : index
    %23 = vector.load %arg7[%c2_36, %c2_37, %c0_38] : memref<18x18x128xf32, #tpu.memory_space<vmem>>, vector<16x16x128xf32>
    %24 = tpu.concatenate %15, %16, %17, %18, %19, %20, %21, %22, %23 in 2 : vector<16x16x128xf32>, vector<16x16x128xf32>, vector<16x16x128xf32>, vector<16x16x128xf32>, vector<16x16x128xf32>, vector<16x16x128xf32>, vector<16x16x128xf32>, vector<16x16x128xf32>, vector<16x16x128xf32> -> vector<16x16x1152xf32>
    %25 = vector.shape_cast %24 : vector<16x16x1152xf32> to vector<256x1152xf32>
    %c0_39 = arith.constant 0 : index
    %c0_40 = arith.constant 0 : index
    %26 = vector.load %arg2[%c0_39, %c0_40] : memref<1152x128xf32, #tpu.memory_space<vmem>>, vector<1152x128xf32>
    %cst_41 = arith.constant dense<0.000000e+00> : vector<256x128xf32>
    %27 = tpu.matmul %25, %26, %cst_41 {dimension_numbers = #tpu.dot_dimension_numbers<[1], [0], [0], [1], [0, 0, 1, 1], [], []>} : vector<256x1152xf32>, vector<1152x128xf32>, vector<256x128xf32> -> vector<256x128xf32>
    %28 = vector.shape_cast %27 : vector<256x128xf32> to vector<1x16x16x128xf32>
    %c0_42 = arith.constant 0 : index
    %c0_43 = arith.constant 0 : index
    %c0_44 = arith.constant 0 : index
    %c0_45 = arith.constant 0 : index
    %29 = vector.load %arg5[%c0_42, %c0_43, %c0_44, %c0_45] : memref<1x16x16x128xf32, #tpu.memory_space<vmem>>, vector<1x16x16x128xf32>
    tpu.vector_store %arg5[%c0_42, %c0_43, %c0_44, %c0_45], %28 {strides = array<i32>} : memref<1x16x16x128xf32, #tpu.memory_space<vmem>>, vector<1x16x16x128xf32>,
    %cst_46 = arith.constant dense<0.000000e+00> : vector<128xf32>
    %30 = vector.multi_reduction <add>, %27, %cst_46 [0] : vector<256x128xf32> to vector<128xf32>
    %31 = vector.shape_cast %30 : vector<128xf32> to vector<1x128xf32>
    %c0_47 = arith.constant 0 : index
    %c0_48 = arith.constant 0 : index
    %c0_49 = arith.constant 0 : index
    %32 = vector.load %arg6[%c0_47, %c0_48, %c0_49] : memref<1x2x128xf32, #tpu.memory_space<vmem>>, vector<1x1x128xf32>
    %33 = vector.shape_cast %32 : vector<1x1x128xf32> to vector<1x128xf32>
    %34 = vector.shape_cast %31 : vector<1x128xf32> to vector<1x1x128xf32>
    tpu.vector_store %arg6[%c0_47, %c0_48, %c0_49], %34 {strides = array<i32>} : memref<1x2x128xf32, #tpu.memory_space<vmem>>, vector<1x1x128xf32>,
    %35 = arith.mulf %27, %27 : vector<256x128xf32>
    %cst_50 = arith.constant dense<0.000000e+00> : vector<128xf32>
    %36 = vector.multi_reduction <add>, %35, %cst_50 [0] : vector<256x128xf32> to vector<128xf32>
    %37 = vector.shape_cast %36 : vector<128xf32> to vector<1x128xf32>
    %c0_51 = arith.constant 0 : index
    %c1_52 = arith.constant 1 : index
    %c0_53 = arith.constant 0 : index
    %38 = vector.load %arg6[%c0_51, %c1_52, %c0_53] : memref<1x2x128xf32, #tpu.memory_space<vmem>>, vector<1x1x128xf32>
    %39 = vector.shape_cast %38 : vector<1x1x128xf32> to vector<1x128xf32>
    %40 = vector.shape_cast %37 : vector<1x128xf32> to vector<1x1x128xf32>
    tpu.vector_store %arg6[%c0_51, %c1_52, %c0_53], %40 {strides = array<i32>} : memref<1x2x128xf32, #tpu.memory_space<vmem>>, vector<1x1x128xf32>,
    return
  }
  func.func @transform_0(%arg0: i32) -> (i32, i32, i32, i32) {
    %c0_i32 = arith.constant 0 : i32
    %c0_i32_0 = arith.constant 0 : i32
    %c0_i32_1 = arith.constant 0 : i32
    %c0_i32_2 = arith.constant 0 : i32
    return %arg0, %c0_i32, %c0_i32_0, %c0_i32_1 : i32, i32, i32, i32
  }
  func.func @transform_1(%arg0: i32) -> (i32, i32) {
    %c0_i32 = arith.constant 0 : i32
    %c0_i32_0 = arith.constant 0 : i32
    %c0_i32_1 = arith.constant 0 : i32
    return %c0_i32, %c0_i32_0 : i32, i32
  }
  func.func @transform_2(%arg0: i32) -> (i32, i32) {
    %c0_i32 = arith.constant 0 : i32
    %c0_i32_0 = arith.constant 0 : i32
    %c0_i32_1 = arith.constant 0 : i32
    return %c0_i32, %c0_i32_0 : i32, i32
  }
  func.func @transform_3(%arg0: i32) -> (i32, i32) {
    %c0_i32 = arith.constant 0 : i32
    %c0_i32_0 = arith.constant 0 : i32
    %c0_i32_1 = arith.constant 0 : i32
    return %c0_i32, %c0_i32_0 : i32, i32
  }
  func.func @transform_4(%arg0: i32) -> (i32, i32, i32, i32) {
    %c0_i32 = arith.constant 0 : i32
    %c0_i32_0 = arith.constant 0 : i32
    %c0_i32_1 = arith.constant 0 : i32
    %c0_i32_2 = arith.constant 0 : i32
    return %arg0, %c0_i32, %c0_i32_0, %c0_i32_1 : i32, i32, i32, i32
  }
  func.func @transform_5(%arg0: i32) -> (i32, i32, i32) {
    %c0_i32 = arith.constant 0 : i32
    %c0_i32_0 = arith.constant 0 : i32
    %c0_i32_1 = arith.constant 0 : i32
    return %arg0, %c0_i32, %c0_i32_0 : i32, i32, i32
  }
}

module attributes {stable_mosaic.version = 11 : i64} {
  func.func @kernel(%arg0: i32, %arg1: memref<512x128xf32, #tpu.memory_space<vmem>>, %arg2: memref<128x128xf32, #tpu.memory_space<vmem>>, %arg3: memref<1x128xf32, #tpu.memory_space<vmem>>, %arg4: memref<1x128xf32, #tpu.memory_space<vmem>>, %arg5: memref<512x128xf32, #tpu.memory_space<vmem>>, %arg6: memref<1x2x128xf32, #tpu.memory_space<vmem>>) attributes {dimension_semantics = [#tpu.dimension_semantics<parallel>], iteration_bounds = array<i64: 1>, scalar_prefetch = 0 : i64, scratch_operands = 0 : i64, tpu.core_type = #tpu.core_type<tc>, window_params = [{transform_indices = @transform_0, window_bounds = array<i64: 512, 128>}, {pipeline_mode = #tpu.pipeline_mode<synchronous>, transform_indices = @transform_1, window_bounds = array<i64: 128, 128>}, {pipeline_mode = #tpu.pipeline_mode<synchronous>, transform_indices = @transform_2, window_bounds = array<i64: 1, 128>}, {pipeline_mode = #tpu.pipeline_mode<synchronous>, transform_indices = @transform_3, window_bounds = array<i64: 1, 128>}, {transform_indices = @transform_4, window_bounds = array<i64: 512, 128>}, {transform_indices = @transform_5, window_bounds = array<i64: 1, 2, 128>}]} {
    %c0 = arith.constant 0 : index
    %c0_0 = arith.constant 0 : index
    %0 = vector.load %arg1[%c0, %c0_0] : memref<512x128xf32, #tpu.memory_space<vmem>>, vector<512x128xf32>
    %c0_1 = arith.constant 0 : index
    %c0_2 = arith.constant 0 : index
    %1 = vector.load %arg3[%c0_1, %c0_2] : memref<1x128xf32, #tpu.memory_space<vmem>>, vector<1x128xf32>
    %2 = vector.broadcast %1 : vector<1x128xf32> to vector<512x128xf32>
    %3 = arith.mulf %0, %2 : vector<512x128xf32>
    %c0_3 = arith.constant 0 : index
    %c0_4 = arith.constant 0 : index
    %4 = vector.load %arg4[%c0_3, %c0_4] : memref<1x128xf32, #tpu.memory_space<vmem>>, vector<1x128xf32>
    %5 = vector.broadcast %4 : vector<1x128xf32> to vector<512x128xf32>
    %6 = arith.addf %3, %5 : vector<512x128xf32>
    %cst = arith.constant 0.000000e+00 : f32
    %7 = vector.broadcast %cst : f32 to vector<512x128xf32>
    %8 = arith.maximumf %6, %7 : vector<512x128xf32>
    %c0_5 = arith.constant 0 : index
    %c0_6 = arith.constant 0 : index
    %9 = vector.load %arg2[%c0_5, %c0_6] : memref<128x128xf32, #tpu.memory_space<vmem>>, vector<128x128xf32>
    %cst_7 = arith.constant dense<0.000000e+00> : vector<512x128xf32>
    %10 = tpu.matmul %8, %9, %cst_7 {dimension_numbers = #tpu.dot_dimension_numbers<[1], [0], [0], [1], [0, 0, 1, 1], [], []>} : vector<512x128xf32>, vector<128x128xf32>, vector<512x128xf32> -> vector<512x128xf32>
    %c0_8 = arith.constant 0 : index
    %c0_9 = arith.constant 0 : index
    %11 = vector.load %arg5[%c0_8, %c0_9] : memref<512x128xf32, #tpu.memory_space<vmem>>, vector<512x128xf32>
    tpu.vector_store %arg5[%c0_8, %c0_9], %10 {strides = array<i32>} : memref<512x128xf32, #tpu.memory_space<vmem>>, vector<512x128xf32>,
    %cst_10 = arith.constant dense<0.000000e+00> : vector<128xf32>
    %12 = vector.multi_reduction <add>, %10, %cst_10 [0] : vector<512x128xf32> to vector<128xf32>
    %13 = vector.shape_cast %12 : vector<128xf32> to vector<1x128xf32>
    %c0_11 = arith.constant 0 : index
    %c0_12 = arith.constant 0 : index
    %c0_13 = arith.constant 0 : index
    %14 = vector.load %arg6[%c0_11, %c0_12, %c0_13] : memref<1x2x128xf32, #tpu.memory_space<vmem>>, vector<1x1x128xf32>
    %15 = vector.shape_cast %14 : vector<1x1x128xf32> to vector<1x128xf32>
    %16 = vector.shape_cast %13 : vector<1x128xf32> to vector<1x1x128xf32>
    tpu.vector_store %arg6[%c0_11, %c0_12, %c0_13], %16 {strides = array<i32>} : memref<1x2x128xf32, #tpu.memory_space<vmem>>, vector<1x1x128xf32>,
    %17 = arith.mulf %10, %10 : vector<512x128xf32>
    %cst_14 = arith.constant dense<0.000000e+00> : vector<128xf32>
    %18 = vector.multi_reduction <add>, %17, %cst_14 [0] : vector<512x128xf32> to vector<128xf32>
    %19 = vector.shape_cast %18 : vector<128xf32> to vector<1x128xf32>
    %c0_15 = arith.constant 0 : index
    %c1 = arith.constant 1 : index
    %c0_16 = arith.constant 0 : index
    %20 = vector.load %arg6[%c0_15, %c1, %c0_16] : memref<1x2x128xf32, #tpu.memory_space<vmem>>, vector<1x1x128xf32>
    %21 = vector.shape_cast %20 : vector<1x1x128xf32> to vector<1x128xf32>
    %22 = vector.shape_cast %19 : vector<1x128xf32> to vector<1x1x128xf32>
    tpu.vector_store %arg6[%c0_15, %c1, %c0_16], %22 {strides = array<i32>} : memref<1x2x128xf32, #tpu.memory_space<vmem>>, vector<1x1x128xf32>,
    return
  }
  func.func @transform_0(%arg0: i32) -> (i32, i32) {
    %c0_i32 = arith.constant 0 : i32
    %c0_i32_0 = arith.constant 0 : i32
    return %arg0, %c0_i32 : i32, i32
  }
  func.func @transform_1(%arg0: i32) -> (i32, i32) {
    %c0_i32 = arith.constant 0 : i32
    %c0_i32_0 = arith.constant 0 : i32
    %c0_i32_1 = arith.constant 0 : i32
    return %c0_i32, %c0_i32_0 : i32, i32
  }
  func.func @transform_2(%arg0: i32) -> (i32, i32) {
    %c0_i32 = arith.constant 0 : i32
    %c0_i32_0 = arith.constant 0 : i32
    %c0_i32_1 = arith.constant 0 : i32
    return %c0_i32, %c0_i32_0 : i32, i32
  }
  func.func @transform_3(%arg0: i32) -> (i32, i32) {
    %c0_i32 = arith.constant 0 : i32
    %c0_i32_0 = arith.constant 0 : i32
    %c0_i32_1 = arith.constant 0 : i32
    return %c0_i32, %c0_i32_0 : i32, i32
  }
  func.func @transform_4(%arg0: i32) -> (i32, i32) {
    %c0_i32 = arith.constant 0 : i32
    %c0_i32_0 = arith.constant 0 : i32
    return %arg0, %c0_i32 : i32, i32
  }
  func.func @transform_5(%arg0: i32) -> (i32, i32, i32) {
    %c0_i32 = arith.constant 0 : i32
    %c0_i32_0 = arith.constant 0 : i32
    %c0_i32_1 = arith.constant 0 : i32
    return %arg0, %c0_i32, %c0_i32_0 : i32, i32, i32
  }
}

module attributes {stable_mosaic.version = 11 : i64} {
  func.func @_bn_add_relu_kernel(%arg0: i32, %arg1: memref<512x128xf32, #tpu.memory_space<vmem>>, %arg2: memref<512x128xf32, #tpu.memory_space<vmem>>, %arg3: memref<1x128xf32, #tpu.memory_space<vmem>>, %arg4: memref<1x128xf32, #tpu.memory_space<vmem>>, %arg5: memref<512x128xf32, #tpu.memory_space<vmem>>) attributes {dimension_semantics = [#tpu.dimension_semantics<parallel>], iteration_bounds = array<i64: 1>, scalar_prefetch = 0 : i64, scratch_operands = 0 : i64, tpu.core_type = #tpu.core_type<tc>, window_params = [{transform_indices = @transform_0, window_bounds = array<i64: 512, 128>}, {transform_indices = @transform_1, window_bounds = array<i64: 512, 128>}, {pipeline_mode = #tpu.pipeline_mode<synchronous>, transform_indices = @transform_2, window_bounds = array<i64: 1, 128>}, {pipeline_mode = #tpu.pipeline_mode<synchronous>, transform_indices = @transform_3, window_bounds = array<i64: 1, 128>}, {transform_indices = @transform_4, window_bounds = array<i64: 512, 128>}]} {
    %c0 = arith.constant 0 : index
    %c0_0 = arith.constant 0 : index
    %0 = vector.load %arg1[%c0, %c0_0] : memref<512x128xf32, #tpu.memory_space<vmem>>, vector<512x128xf32>
    %c0_1 = arith.constant 0 : index
    %c0_2 = arith.constant 0 : index
    %1 = vector.load %arg3[%c0_1, %c0_2] : memref<1x128xf32, #tpu.memory_space<vmem>>, vector<1x128xf32>
    %2 = vector.broadcast %1 : vector<1x128xf32> to vector<512x128xf32>
    %3 = arith.mulf %0, %2 : vector<512x128xf32>
    %c0_3 = arith.constant 0 : index
    %c0_4 = arith.constant 0 : index
    %4 = vector.load %arg4[%c0_3, %c0_4] : memref<1x128xf32, #tpu.memory_space<vmem>>, vector<1x128xf32>
    %5 = vector.broadcast %4 : vector<1x128xf32> to vector<512x128xf32>
    %6 = arith.addf %3, %5 : vector<512x128xf32>
    %c0_5 = arith.constant 0 : index
    %c0_6 = arith.constant 0 : index
    %7 = vector.load %arg2[%c0_5, %c0_6] : memref<512x128xf32, #tpu.memory_space<vmem>>, vector<512x128xf32>
    %8 = arith.addf %6, %7 : vector<512x128xf32>
    %cst = arith.constant 0.000000e+00 : f32
    %9 = vector.broadcast %cst : f32 to vector<512x128xf32>
    %10 = arith.maximumf %8, %9 : vector<512x128xf32>
    %c0_7 = arith.constant 0 : index
    %c0_8 = arith.constant 0 : index
    %11 = vector.load %arg5[%c0_7, %c0_8] : memref<512x128xf32, #tpu.memory_space<vmem>>, vector<512x128xf32>
    tpu.vector_store %arg5[%c0_7, %c0_8], %10 {strides = array<i32>} : memref<512x128xf32, #tpu.memory_space<vmem>>, vector<512x128xf32>,
    return
  }
  func.func @transform_0(%arg0: i32) -> (i32, i32) {
    %c0_i32 = arith.constant 0 : i32
    %c0_i32_0 = arith.constant 0 : i32
    return %arg0, %c0_i32 : i32, i32
  }
  func.func @transform_1(%arg0: i32) -> (i32, i32) {
    %c0_i32 = arith.constant 0 : i32
    %c0_i32_0 = arith.constant 0 : i32
    return %arg0, %c0_i32 : i32, i32
  }
  func.func @transform_2(%arg0: i32) -> (i32, i32) {
    %c0_i32 = arith.constant 0 : i32
    %c0_i32_0 = arith.constant 0 : i32
    %c0_i32_1 = arith.constant 0 : i32
    return %c0_i32, %c0_i32_0 : i32, i32
  }
  func.func @transform_3(%arg0: i32) -> (i32, i32) {
    %c0_i32 = arith.constant 0 : i32
    %c0_i32_0 = arith.constant 0 : i32
    %c0_i32_1 = arith.constant 0 : i32
    return %c0_i32, %c0_i32_0 : i32, i32
  }
  func.func @transform_4(%arg0: i32) -> (i32, i32) {
    %c0_i32 = arith.constant 0 : i32
    %c0_i32_0 = arith.constant 0 : i32
    return %arg0, %c0_i32 : i32, i32
  }
}

</mosaic_0001>

<llo_original>
// kernel: _bottleneck_forward.4
$region0: #{_bottleneck_forward.4}
  #allocation0 [shape = 'u32[]', space=smem, size = 0x4, offset = 0x4, fixed_abs, tag = 'smem constant byte address 0x4 - core index']
  #allocation1 [shape = 'u32[144,128]{1,0:T(1,128)}', space=vmem, size = 0x12000, scoped, tag = 'internal scratch']
  %s0 = inlined_call_operand.vmem [shape: f32[512,128], index: 0, kind: input, shape index: {}]
  %s1 = inlined_call_operand.vmem [shape: f32[128,128], index: 1, kind: input, shape index: {}]
  %s2 = inlined_call_operand.vmem [shape: f32[512,128], index: 2, kind: output, shape index: {0}]
  %s3 = inlined_call_operand.vmem [shape: f32[1,2,128], index: 3, kind: output, shape index: {1}]
  %4 = xla_tuple %s2, %s3
  %s5 = sld [smem:[#allocation0]]
  $region26: #{_bottleneck_forward.4} parent=0
    _
  %s7 = ssub.s32 1, %s5
  %s8 = scalar_select 0, %s7, %s5
  // Predicated region
  $region2: #{_bottleneck_forward.4} parent=0 // pred_check
    _
  $region3: #{_bottleneck_forward.4} parent=0 // pred_check_branch
    %10 = sbr.rel (0) target = $region5
  $region4: #{_bottleneck_forward.4} parent=0 // pred_region
    _
  $region5: #{_bottleneck_forward.4} parent=0 // pred_fallthru
    _
  // Predicated region
  $region6: #{_bottleneck_forward.4} parent=0 // pred_check
    _
  $region7: #{_bottleneck_forward.4} parent=0 // pred_check_branch
    %12 = sbr.rel (0) target = $region9
  $region8: #{_bottleneck_forward.4} parent=0 // pred_region
    _
  $region9: #{_bottleneck_forward.4} parent=0 // pred_fallthru
    _
  %v13 = vld [vmem:[%s0] sm:$0xff]
  %v14 = vld [vmem:[%s0 + $0x8] sm:$0xff]
  %v15 = vld [vmem:[%s0 + $0x10] sm:$0xff]
  %v16 = vld [vmem:[%s0 + $0x18] sm:$0xff]
  %v17 = vld [vmem:[%s0 + $0x20] sm:$0xff]
  %v18 = vld [vmem:[%s0 + $0x28] sm:$0xff]
  %v19 = vld [vmem:[%s0 + $0x30] sm:$0xff]
  %v20 = vld [vmem:[%s0 + $0x38] sm:$0xff]
  %v21 = vld [vmem:[%s0 + $0x40] sm:$0xff]
  %v22 = vld [vmem:[%s0 + $0x48] sm:$0xff]
  %v23 = vld [vmem:[%s0 + $0x50] sm:$0xff]
  %v24 = vld [vmem:[%s0 + $0x58] sm:$0xff]
  %v25 = vld [vmem:[%s0 + $0x60] sm:$0xff]
  %v26 = vld [vmem:[%s0 + $0x68] sm:$0xff]
  %v27 = vld [vmem:[%s0 + $0x70] sm:$0xff]
  %v28 = vld [vmem:[%s0 + $0x78] sm:$0xff]
  %v29 = vld [vmem:[%s0 + $0x80] sm:$0xff]
  %v30 = vld [vmem:[%s0 + $0x88] sm:$0xff]
  %v31 = vld [vmem:[%s0 + $0x90] sm:$0xff]
  %v32 = vld [vmem:[%s0 + $0x98] sm:$0xff]
  %v33 = vld [vmem:[%s0 + $0xa0] sm:$0xff]
  %v34 = vld [vmem:[%s0 + $0xa8] sm:$0xff]
  %v35 = vld [vmem:[%s0 + $0xb0] sm:$0xff]
  %v36 = vld [vmem:[%s0 + $0xb8] sm:$0xff]
  %v37 = vld [vmem:[%s0 + $0xc0] sm:$0xff]
  %v38 = vld [vmem:[%s0 + $0xc8] sm:$0xff]
  %v39 = vld [vmem:[%s0 + $0xd0] sm:$0xff]
  %v40 = vld [vmem:[%s0 + $0xd8] sm:$0xff]
  %v41 = vld [vmem:[%s0 + $0xe0] sm:$0xff]
  %v42 = vld [vmem:[%s0 + $0xe8] sm:$0xff]
  %v43 = vld [vmem:[%s0 + $0xf0] sm:$0xff]
  %v44 = vld [vmem:[%s0 + $0xf8] sm:$0xff]
  %v45 = vld [vmem:[%s0 + $0x100] sm:$0xff]
  %v46 = vld [vmem:[%s0 + $0x108] sm:$0xff]
  %v47 = vld [vmem:[%s0 + $0x110] sm:$0xff]
  %v48 = vld [vmem:[%s0 + $0x118] sm:$0xff]
  %v49 = vld [vmem:[%s0 + $0x120] sm:$0xff]
  %v50 = vld [vmem:[%s0 + $0x128] sm:$0xff]
  %v51 = vld [vmem:[%s0 + $0x130] sm:$0xff]
  %v52 = vld [vmem:[%s0 + $0x138] sm:$0xff]
  %v53 = vld [vmem:[%s0 + $0x140] sm:$0xff]
  %v54 = vld [vmem:[%s0 + $0x148] sm:$0xff]
  %v55 = vld [vmem:[%s0 + $0x150] sm:$0xff]
  %v56 = vld [vmem:[%s0 + $0x158] sm:$0xff]
  %v57 = vld [vmem:[%s0 + $0x160] sm:$0xff]
  %v58 = vld [vmem:[%s0 + $0x168] sm:$0xff]
  %v59 = vld [vmem:[%s0 + $0x170] sm:$0xff]
  %v60 = vld [vmem:[%s0 + $0x178] sm:$0xff]
  %v61 = vld [vmem:[%s0 + $0x180] sm:$0xff]
  %v62 = vld [vmem:[%s0 + $0x188] sm:$0xff]
  %v63 = vld [vmem:[%s0 + $0x190] sm:$0xff]
  %v64 = vld [vmem:[%s0 + $0x198] sm:$0xff]
  %v65 = vld [vmem:[%s0 + $0x1a0] sm:$0xff]
  %v66 = vld [vmem:[%s0 + $0x1a8] sm:$0xff]
  %v67 = vld [vmem:[%s0 + $0x1b0] sm:$0xff]
  %v68 = vld [vmem:[%s0 + $0x1b8] sm:$0xff]
  %v69 = vld [vmem:[%s0 + $0x1c0] sm:$0xff]
  %v70 = vld [vmem:[%s0 + $0x1c8] sm:$0xff]
  %v71 = vld [vmem:[%s0 + $0x1d0] sm:$0xff]
  %v72 = vld [vmem:[%s0 + $0x1d8] sm:$0xff]
  %v73 = vld [vmem:[%s0 + $0x1e0] sm:$0xff]
  %v74 = vld [vmem:[%s0 + $0x1e8] sm:$0xff]
  %v75 = vld [vmem:[%s0 + $0x1f0] sm:$0xff]
  %v76 = vld [vmem:[%s0 + $0x1f8] sm:$0xff]
  %v77 = vld [vmem:[%s1] sm:$0xff]
  %v78 = vld [vmem:[%s1 + $0x8] sm:$0xff]
  %v79 = vld [vmem:[%s1 + $0x10] sm:$0xff]
  %v80 = vld [vmem:[%s1 + $0x18] sm:$0xff]
  %v81 = vld [vmem:[%s1 + $0x20] sm:$0xff]
  %v82 = vld [vmem:[%s1 + $0x28] sm:$0xff]
  %v83 = vld [vmem:[%s1 + $0x30] sm:$0xff]
  %v84 = vld [vmem:[%s1 + $0x38] sm:$0xff]
  %v85 = vld [vmem:[%s1 + $0x40] sm:$0xff]
  %v86 = vld [vmem:[%s1 + $0x48] sm:$0xff]
  %v87 = vld [vmem:[%s1 + $0x50] sm:$0xff]
  %v88 = vld [vmem:[%s1 + $0x58] sm:$0xff]
  %v89 = vld [vmem:[%s1 + $0x60] sm:$0xff]
  %v90 = vld [vmem:[%s1 + $0x68] sm:$0xff]
  %v91 = vld [vmem:[%s1 + $0x70] sm:$0xff]
  %v92 = vld [vmem:[%s1 + $0x78] sm:$0xff]
  %93 = vmatprep.subr.mxu0 0.0
  %94 = vmatpush1.msra.mxu0 %v77
  %95 = vmatprep.subr.mxu0 0.0
  %96 = vmatpush1.msra.mxu0 %v78
  %97 = vmatprep.subr.mxu0 0.0
  %98 = vmatpush1.msra.mxu0 %v79
  %99 = vmatprep.subr.mxu0 0.0
  %100 = vmatpush1.msra.mxu0 %v80
  %101 = vmatprep.subr.mxu0 0.0
  %102 = vmatpush1.msra.mxu0 %v81
  %103 = vmatprep.subr.mxu0 0.0
  %104 = vmatpush1.msra.mxu0 %v82
  %105 = vmatprep.subr.mxu0 0.0
  %106 = vmatpush1.msra.mxu0 %v83
  %107 = vmatprep.subr.mxu0 0.0
  %108 = vmatpush1.msra.mxu0 %v84
  %109 = vmatprep.subr.mxu0 0.0
  %110 = vmatpush1.msra.mxu0 %v85
  %111 = vmatprep.subr.mxu0 0.0
  %112 = vmatpush1.msra.mxu0 %v86
  %113 = vmatprep.subr.mxu0 0.0
  %114 = vmatpush1.msra.mxu0 %v87
  %115 = vmatprep.subr.mxu0 0.0
  %116 = vmatpush1.msra.mxu0 %v88
  %117 = vmatprep.subr.mxu0 0.0
  %118 = vmatpush1.msra.mxu0 %v89
  %119 = vmatprep.subr.mxu0 0.0
  %120 = vmatpush1.msra.mxu0 %v90
  %121 = vmatprep.subr.mxu0 0.0
  %122 = vmatpush1.msra.mxu0 %v91
  %123 = vmatprep.subr.mxu0 0.0
  %124 = vmatpush1.msra.mxu0 %v92
  %125 = vmatprep.subr.mxu0 0.0
  %126 = vmatpush1.msra.mxu0 0.0
  %127 = vmatprep.subr.mxu0 0.0
  %128 = vmatpush1.msra.mxu0 0.0
  %129 = vmatprep.subr.mxu0 0.0
  %130 = vmatpush1.msra.mxu0 0.0
  %131 = vmatprep.subr.mxu0 0.0
  %132 = vmatpush1.msra.mxu0 0.0
  %133 = vmatprep.subr.mxu0 0.0
  %134 = vmatpush1.msra.mxu0 0.0
  %135 = vmatprep.subr.mxu0 0.0
  %136 = vmatpush1.msra.mxu0 0.0
  %137 = vmatprep.subr.mxu0 0.0
  %138 = vmatpush1.msra.mxu0 0.0
  %139 = vmatprep.subr.mxu0 0.0
  %140 = vmatpush1.msra.mxu0 0.0
  %141 = vmatprep.subr.mxu0 0.0
  %142 = vmatpush1.msra.mxu0 0.0
  %143 = vmatprep.subr.mxu0 0.0
  %144 = vmatpush1.msra.mxu0 0.0
  %145 = vmatprep.subr.mxu0 0.0
  %146 = vmatpush1.msra.mxu0 0.0
  %147 = vmatprep.subr.mxu0 0.0
  %148 = vmatpush1.msra.mxu0 0.0
  %149 = vmatprep.subr.mxu0 0.0
  %150 = vmatpush1.msra.mxu0 0.0
  %151 = vmatprep.subr.mxu0 0.0
  %152 = vmatpush1.msra.mxu0 0.0
  %153 = vmatprep.subr.mxu0 0.0
  %154 = vmatpush1.msra.mxu0 0.0
  %155 = vmatprep.subr.mxu0 0.0
  %156 = vmatpush1.msra.mxu0 0.0
  %157 = vmatprep.mubr.f32.mxu0 0.0
  %158 = vmatmul.mubr.f32.gmra.mrb[0].mxu0 %v13
  %v159 = vpop.f32.mrb[0].mxu0
  %v160 = vadd.f32 0.0, %v159
  %v161 = vpop.f32.mrb[0].mxu0
  %162 = vmatprep.mubr.f32.mxu0 0.0
  %163 = vmatmul.mubr.f32.gmra.mrb[0].mxu0 %v14
  %v164 = vpop.f32.mrb[0].mxu0
  %v165 = vadd.f32 0.0, %v164
  %v166 = vpop.f32.mrb[0].mxu0
  %167 = vmatprep.mubr.f32.mxu0 0.0
  %168 = vmatmul.mubr.f32.gmra.mrb[0].mxu0 %v15
  %v169 = vpop.f32.mrb[0].mxu0
  %v170 = vadd.f32 0.0, %v169
  %v171 = vpop.f32.mrb[0].mxu0
  %172 = vmatprep.mubr.f32.mxu0 0.0
  %173 = vmatmul.mubr.f32.gmra.mrb[0].mxu0 %v16
  %v174 = vpop.f32.mrb[0].mxu0
  %v175 = vadd.f32 0.0, %v174
  %v176 = vpop.f32.mrb[0].mxu0
  %177 = vmatprep.mubr.f32.mxu0 0.0
  %178 = vmatmul.mubr.f32.gmra.mrb[0].mxu0 %v17
  %v179 = vpop.f32.mrb[0].mxu0
  %v180 = vadd.f32 0.0, %v179
  %v181 = vpop.f32.mrb[0].mxu0
  %182 = vmatprep.mubr.f32.mxu0 0.0
  %183 = vmatmul.mubr.f32.gmra.mrb[0].mxu0 %v18
  %v184 = vpop.f32.mrb[0].mxu0
  %v185 = vadd.f32 0.0, %v184
  %v186 = vpop.f32.mrb[0].mxu0
  %187 = vmatprep.mubr.f32.mxu0 0.0
  %188 = vmatmul.mubr.f32.gmra.mrb[0].mxu0 %v19
  %v189 = vpop.f32.mrb[0].mxu0
  %v190 = vadd.f32 0.0, %v189
  %v191 = vpop.f32.mrb[0].mxu0
  %192 = vmatprep.mubr.f32.mxu0 0.0
  %193 = vmatmul.mubr.f32.gmra.mrb[0].mxu0 %v20
  %v194 = vpop.f32.mrb[0].mxu0
  %v195 = vadd.f32 0.0, %v194
  %v196 = vpop.f32.mrb[0].mxu0
  %197 = vmatprep.mubr.f32.mxu0 0.0
  %198 = vmatmul.mubr.f32.gmra.mrb[0].mxu0 %v21
  %v199 = vpop.f32.mrb[0].mxu0
  %v200 = vadd.f32 0.0, %v199
  %v201 = vpop.f32.mrb[0].mxu0
  %202 = vmatprep.mubr.f32.mxu0 0.0
  %203 = vmatmul.mubr.f32.gmra.mrb[0].mxu0 %v22
  %v204 = vpop.f32.mrb[0].mxu0
  %v205 = vadd.f32 0.0, %v204
  %v206 = vpop.f32.mrb[0].mxu0
  %207 = vmatprep.mubr.f32.mxu0 0.0
  %208 = vmatmul.mubr.f32.gmra.mrb[0].mxu0 %v23
  %v209 = vpop.f32.mrb[0].mxu0
  %v210 = vadd.f32 0.0, %v209
  %v211 = vpop.f32.mrb[0].mxu0
  %212 = vmatprep.mubr.f32.mxu0 0.0
  %213 = vmatmul.mubr.f32.gmra.mrb[0].mxu0 %v24
  %v214 = vpop.f32.mrb[0].mxu0
  %v215 = vadd.f32 0.0, %v214
  %v216 = vpop.f32.mrb[0].mxu0
  %217 = vmatprep.mubr.f32.mxu0 0.0
  %218 = vmatmul.mubr.f32.gmra.mrb[0].mxu0 %v25
  %v219 = vpop.f32.mrb[0].mxu0
  %v220 = vadd.f32 0.0, %v219
  %v221 = vpop.f32.mrb[0].mxu0
  %222 = vmatprep.mubr.f32.mxu0 0.0
  %223 = vmatmul.mubr.f32.gmra.mrb[0].mxu0 %v26
  %v224 = vpop.f32.mrb[0].mxu0
  %v225 = vadd.f32 0.0, %v224
  %v226 = vpop.f32.mrb[0].mxu0
  %227 = vmatprep.mubr.f32.mxu0 0.0
  %228 = vmatmul.mubr.f32.gmra.mrb[0].mxu0 %v27
  %v229 = vpop.f32.mrb[0].mxu0
  %v230 = vadd.f32 0.0, %v229
  %v231 = vpop.f32.mrb[0].mxu0
  %232 = vmatprep.mubr.f32.mxu0 0.0
  %233 = vmatmul.mubr.f32.gmra.mrb[0].mxu0 %v28
  %v234 = vpop.f32.mrb[0].mxu0
  %v235 = vadd.f32 0.0, %v234
  %v236 = vpop.f32.mrb[0].mxu0
  %237 = vmatprep.mubr.f32.mxu0 0.0
  %238 = vmatmul.mubr.f32.gmra.mrb[0].mxu0 %v29
  %v239 = vpop.f32.mrb[0].mxu0
  %v240 = vadd.f32 0.0, %v239
  %v241 = vpop.f32.mrb[0].mxu0
  %242 = vmatprep.mubr.f32.mxu0 0.0
  %243 = vmatmul.mubr.f32.gmra.mrb[0].mxu0 %v30
  %v244 = vpop.f32.mrb[0].mxu0
  %v245 = vadd.f32 0.0, %v244
  %v246 = vpop.f32.mrb[0].mxu0
  %247 = vmatprep.mubr.f32.mxu0 0.0
  %248 = vmatmul.mubr.f32.gmra.mrb[0].mxu0 %v31
  %v249 = vpop.f32.mrb[0].mxu0
  %v250 = vadd.f32 0.0, %v249
  %v251 = vpop.f32.mrb[0].mxu0
  %252 = vmatprep.mubr.f32.mxu0 0.0
  %253 = vmatmul.mubr.f32.gmra.mrb[0].mxu0 %v32
  %v254 = vpop.f32.mrb[0].mxu0
  %v255 = vadd.f32 0.0, %v254
  %v256 = vpop.f32.mrb[0].mxu0
  %257 = vmatprep.mubr.f32.mxu0 0.0
  %258 = vmatmul.mubr.f32.gmra.mrb[0].mxu0 %v33
  %v259 = vpop.f32.mrb[0].mxu0
  %v260 = vadd.f32 0.0, %v259
  %v261 = vpop.f32.mrb[0].mxu0
  %262 = vmatprep.mubr.f32.mxu0 0.0
  %263 = vmatmul.mubr.f32.gmra.mrb[0].mxu0 %v34
  %v264 = vpop.f32.mrb[0].mxu0
  %v265 = vadd.f32 0.0, %v264
  %v266 = vpop.f32.mrb[0].mxu0
  %267 = vmatprep.mubr.f32.mxu0 0.0
  %268 = vmatmul.mubr.f32.gmra.mrb[0].mxu0 %v35
  %v269 = vpop.f32.mrb[0].mxu0
  %v270 = vadd.f32 0.0, %v269
  %v271 = vpop.f32.mrb[0].mxu0
  %272 = vmatprep.mubr.f32.mxu0 0.0
  %273 = vmatmul.mubr.f32.gmra.mrb[0].mxu0 %v36
  %v274 = vpop.f32.mrb[0].mxu0
  %v275 = vadd.f32 0.0, %v274
  %v276 = vpop.f32.mrb[0].mxu0
  %277 = vmatprep.mubr.f32.mxu0 0.0
  %278 = vmatmul.mubr.f32.gmra.mrb[0].mxu0 %v37
  %v279 = vpop.f32.mrb[0].mxu0
  %v280 = vadd.f32 0.0, %v279
  %v281 = vpop.f32.mrb[0].mxu0
  %282 = vmatprep.mubr.f32.mxu0 0.0
  %283 = vmatmul.mubr.f32.gmra.mrb[0].mxu0 %v38
  %v284 = vpop.f32.mrb[0].mxu0
  %v285 = vadd.f32 0.0, %v284
  %v286 = vpop.f32.mrb[0].mxu0
  %287 = vmatprep.mubr.f32.mxu0 0.0
  %288 = vmatmul.mubr.f32.gmra.mrb[0].mxu0 %v39
  %v289 = vpop.f32.mrb[0].mxu0
  %v290 = vadd.f32 0.0, %v289
  %v291 = vpop.f32.mrb[0].mxu0
  %292 = vmatprep.mubr.f32.mxu0 0.0
  %293 = vmatmul.mubr.f32.gmra.mrb[0].mxu0 %v40
  %v294 = vpop.f32.mrb[0].mxu0
  %v295 = vadd.f32 0.0, %v294
  %v296 = vpop.f32.mrb[0].mxu0
  %297 = vmatprep.mubr.f32.mxu0 0.0
  %298 = vmatmul.mubr.f32.gmra.mrb[0].mxu0 %v41
  %v299 = vpop.f32.mrb[0].mxu0
  %v300 = vadd.f32 0.0, %v299
  %v301 = vpop.f32.mrb[0].mxu0
  %302 = vmatprep.mubr.f32.mxu0 0.0
  %303 = vmatmul.mubr.f32.gmra.mrb[0].mxu0 %v42
  %v304 = vpop.f32.mrb[0].mxu0
  %v305 = vadd.f32 0.0, %v304
  %v306 = vpop.f32.mrb[0].mxu0
  %307 = vmatprep.mubr.f32.mxu0 0.0
  %308 = vmatmul.mubr.f32.gmra.mrb[0].mxu0 %v43
  %v309 = vpop.f32.mrb[0].mxu0
  %v310 = vadd.f32 0.0, %v309
  %v311 = vpop.f32.mrb[0].mxu0
  %312 = vmatprep.mubr.f32.mxu0 0.0
  %313 = vmatmul.mubr.f32.gmra.mrb[0].mxu0 %v44
  %v314 = vpop.f32.mrb[0].mxu0
  %v315 = vadd.f32 0.0, %v314
  %v316 = vpop.f32.mrb[0].mxu0
  %317 = vmatprep.mubr.f32.mxu0 0.0
  %318 = vmatmul.mubr.f32.gmra.mrb[0].mxu0 %v45
  %v319 = vpop.f32.mrb[0].mxu0
  %v320 = vadd.f32 0.0, %v319
  %v321 = vpop.f32.mrb[0].mxu0
  %322 = vmatprep.mubr.f32.mxu0 0.0
  %323 = vmatmul.mubr.f32.gmra.mrb[0].mxu0 %v46
  %v324 = vpop.f32.mrb[0].mxu0
  %v325 = vadd.f32 0.0, %v324
  %v326 = vpop.f32.mrb[0].mxu0
  %327 = vmatprep.mubr.f32.mxu0 0.0
  %328 = vmatmul.mubr.f32.gmra.mrb[0].mxu0 %v47
  %v329 = vpop.f32.mrb[0].mxu0
  %v330 = vadd.f32 0.0, %v329
  %v331 = vpop.f32.mrb[0].mxu0
  %332 = vmatprep.mubr.f32.mxu0 0.0
  %333 = vmatmul.mubr.f32.gmra.mrb[0].mxu0 %v48
  %v334 = vpop.f32.mrb[0].mxu0
  %v335 = vadd.f32 0.0, %v334
  %v336 = vpop.f32.mrb[0].mxu0
  %337 = vmatprep.mubr.f32.mxu0 0.0
  %338 = vmatmul.mubr.f32.gmra.mrb[0].mxu0 %v49
  %v339 = vpop.f32.mrb[0].mxu0
  %v340 = vadd.f32 0.0, %v339
  %v341 = vpop.f32.mrb[0].mxu0
  %342 = vmatprep.mubr.f32.mxu0 0.0
  %343 = vmatmul.mubr.f32.gmra.mrb[0].mxu0 %v50
  %v344 = vpop.f32.mrb[0].mxu0
  %v345 = vadd.f32 0.0, %v344
  %v346 = vpop.f32.mrb[0].mxu0
  %347 = vmatprep.mubr.f32.mxu0 0.0
  %348 = vmatmul.mubr.f32.gmra.mrb[0].mxu0 %v51
  %v349 = vpop.f32.mrb[0].mxu0
  %v350 = vadd.f32 0.0, %v349
  %v351 = vpop.f32.mrb[0].mxu0
  %352 = vmatprep.mubr.f32.mxu0 0.0
  %353 = vmatmul.mubr.f32.gmra.mrb[0].mxu0 %v52
  %v354 = vpop.f32.mrb[0].mxu0
  %v355 = vadd.f32 0.0, %v354
  %v356 = vpop.f32.mrb[0].mxu0
  %357 = vmatprep.mubr.f32.mxu0 0.0
  %358 = vmatmul.mubr.f32.gmra.mrb[0].mxu0 %v53
  %v359 = vpop.f32.mrb[0].mxu0
  %v360 = vadd.f32 0.0, %v359
  %v361 = vpop.f32.mrb[0].mxu0
  %362 = vmatprep.mubr.f32.mxu0 0.0
  %363 = vmatmul.mubr.f32.gmra.mrb[0].mxu0 %v54
  %v364 = vpop.f32.mrb[0].mxu0
  %v365 = vadd.f32 0.0, %v364
  %v366 = vpop.f32.mrb[0].mxu0
  %367 = vmatprep.mubr.f32.mxu0 0.0
  %368 = vmatmul.mubr.f32.gmra.mrb[0].mxu0 %v55
  %v369 = vpop.f32.mrb[0].mxu0
  %v370 = vadd.f32 0.0, %v369
  %v371 = vpop.f32.mrb[0].mxu0
  %372 = vmatprep.mubr.f32.mxu0 0.0
  %373 = vmatmul.mubr.f32.gmra.mrb[0].mxu0 %v56
  %v374 = vpop.f32.mrb[0].mxu0
  %v375 = vadd.f32 0.0, %v374
  %v376 = vpop.f32.mrb[0].mxu0
  %377 = vmatprep.mubr.f32.mxu0 0.0
  %378 = vmatmul.mubr.f32.gmra.mrb[0].mxu0 %v57
  %v379 = vpop.f32.mrb[0].mxu0
  %v380 = vadd.f32 0.0, %v379
  %v381 = vpop.f32.mrb[0].mxu0
  %382 = vmatprep.mubr.f32.mxu0 0.0
  %383 = vmatmul.mubr.f32.gmra.mrb[0].mxu0 %v58
  %v384 = vpop.f32.mrb[0].mxu0
  %v385 = vadd.f32 0.0, %v384
  %v386 = vpop.f32.mrb[0].mxu0
  %387 = vmatprep.mubr.f32.mxu0 0.0
  %388 = vmatmul.mubr.f32.gmra.mrb[0].mxu0 %v59
  %v389 = vpop.f32.mrb[0].mxu0
  %v390 = vadd.f32 0.0, %v389
  %v391 = vpop.f32.mrb[0].mxu0
  %392 = vmatprep.mubr.f32.mxu0 0.0
  %393 = vmatmul.mubr.f32.gmra.mrb[0].mxu0 %v60
  %v394 = vpop.f32.mrb[0].mxu0
  %v395 = vadd.f32 0.0, %v394
  %v396 = vpop.f32.mrb[0].mxu0
  %397 = vmatprep.mubr.f32.mxu0 0.0
  %398 = vmatmul.mubr.f32.gmra.mrb[0].mxu0 %v61
  %v399 = vpop.f32.mrb[0].mxu0
  %v400 = vadd.f32 0.0, %v399
  %v401 = vpop.f32.mrb[0].mxu0
  %402 = vmatprep.mubr.f32.mxu0 0.0
  %403 = vmatmul.mubr.f32.gmra.mrb[0].mxu0 %v62
  %v404 = vpop.f32.mrb[0].mxu0
  %v405 = vadd.f32 0.0, %v404
  %v406 = vpop.f32.mrb[0].mxu0
  %407 = vmatprep.mubr.f32.mxu0 0.0
  %408 = vmatmul.mubr.f32.gmra.mrb[0].mxu0 %v63
  %v409 = vpop.f32.mrb[0].mxu0
  %v410 = vadd.f32 0.0, %v409
  %v411 = vpop.f32.mrb[0].mxu0
  %412 = vmatprep.mubr.f32.mxu0 0.0
  %413 = vmatmul.mubr.f32.gmra.mrb[0].mxu0 %v64
  %v414 = vpop.f32.mrb[0].mxu0
  %v415 = vadd.f32 0.0, %v414
  %v416 = vpop.f32.mrb[0].mxu0
  %417 = vmatprep.mubr.f32.mxu0 0.0
  %418 = vmatmul.mubr.f32.gmra.mrb[0].mxu0 %v65
  %v419 = vpop.f32.mrb[0].mxu0
  %v420 = vadd.f32 0.0, %v419
  %v421 = vpop.f32.mrb[0].mxu0
  %422 = vmatprep.mubr.f32.mxu0 0.0
  %423 = vmatmul.mubr.f32.gmra.mrb[0].mxu0 %v66
  %v424 = vpop.f32.mrb[0].mxu0
  %v425 = vadd.f32 0.0, %v424
  %v426 = vpop.f32.mrb[0].mxu0
  %427 = vmatprep.mubr.f32.mxu0 0.0
  %428 = vmatmul.mubr.f32.gmra.mrb[0].mxu0 %v67
  %v429 = vpop.f32.mrb[0].mxu0
  %v430 = vadd.f32 0.0, %v429
  %v431 = vpop.f32.mrb[0].mxu0
  %432 = vmatprep.mubr.f32.mxu0 0.0
  %433 = vmatmul.mubr.f32.gmra.mrb[0].mxu0 %v68
  %v434 = vpop.f32.mrb[0].mxu0
  %v435 = vadd.f32 0.0, %v434
  %v436 = vpop.f32.mrb[0].mxu0
  %437 = vmatprep.mubr.f32.mxu0 0.0
  %438 = vmatmul.mubr.f32.gmra.mrb[0].mxu0 %v69
  %v439 = vpop.f32.mrb[0].mxu0
  %v440 = vadd.f32 0.0, %v439
  %v441 = vpop.f32.mrb[0].mxu0
  %442 = vmatprep.mubr.f32.mxu0 0.0
  %443 = vmatmul.mubr.f32.gmra.mrb[0].mxu0 %v70
  %v444 = vpop.f32.mrb[0].mxu0
  %v445 = vadd.f32 0.0, %v444
  %v446 = vpop.f32.mrb[0].mxu0
  %447 = vmatprep.mubr.f32.mxu0 0.0
  %448 = vmatmul.mubr.f32.gmra.mrb[0].mxu0 %v71
  %v449 = vpop.f32.mrb[0].mxu0
  %v450 = vadd.f32 0.0, %v449
  %v451 = vpop.f32.mrb[0].mxu0
  %452 = vmatprep.mubr.f32.mxu0 0.0
  %453 = vmatmul.mubr.f32.gmra.mrb[0].mxu0 %v72
  %v454 = vpop.f32.mrb[0].mxu0
  %v455 = vadd.f32 0.0, %v454
  %v456 = vpop.f32.mrb[0].mxu0
  %457 = vmatprep.mubr.f32.mxu0 0.0
  %458 = vmatmul.mubr.f32.gmra.mrb[0].mxu0 %v73
  %v459 = vpop.f32.mrb[0].mxu0
  %v460 = vadd.f32 0.0, %v459
  %v461 = vpop.f32.mrb[0].mxu0
  %462 = vmatprep.mubr.f32.mxu0 0.0
  %463 = vmatmul.mubr.f32.gmra.mrb[0].mxu0 %v74
  %v464 = vpop.f32.mrb[0].mxu0
  %v465 = vadd.f32 0.0, %v464
  %v466 = vpop.f32.mrb[0].mxu0
  %467 = vmatprep.mubr.f32.mxu0 0.0
  %468 = vmatmul.mubr.f32.gmra.mrb[0].mxu0 %v75
  %v469 = vpop.f32.mrb[0].mxu0
  %v470 = vadd.f32 0.0, %v469
  %v471 = vpop.f32.mrb[0].mxu0
  %472 = vmatprep.mubr.f32.mxu0 0.0
  %473 = vmatmul.mubr.f32.gmra.mrb[0].mxu0 %v76
  %v474 = vpop.f32.mrb[0].mxu0
  %v475 = vadd.f32 0.0, %v474
  %v476 = vpop.f32.mrb[0].mxu0
  %477 = vdwg.mxu0
  %478 = vst [vmem:[%s2] sm:$0xff] %v160
  %479 = vst [vmem:[%s2 + $0x8] sm:$0xff] %v165
  %480 = vst [vmem:[%s2 + $0x10] sm:$0xff] %v170
  %481 = vst [vmem:[%s2 + $0x18] sm:$0xff] %v175
  %482 = vst [vmem:[%s2 + $0x20] sm:$0xff] %v180
  %483 = vst [vmem:[%s2 + $0x28] sm:$0xff] %v185
  %484 = vst [vmem:[%s2 + $0x30] sm:$0xff] %v190
  %485 = vst [vmem:[%s2 + $0x38] sm:$0xff] %v195
  %486 = vst [vmem:[%s2 + $0x40] sm:$0xff] %v200
  %487 = vst [vmem:[%s2 + $0x48] sm:$0xff] %v205
  %488 = vst [vmem:[%s2 + $0x50] sm:$0xff] %v210
  %489 = vst [vmem:[%s2 + $0x58] sm:$0xff] %v215
  %490 = vst [vmem:[%s2 + $0x60] sm:$0xff] %v220
  %491 = vst [vmem:[%s2 + $0x68] sm:$0xff] %v225
  %492 = vst [vmem:[%s2 + $0x70] sm:$0xff] %v230
  %493 = vst [vmem:[%s2 + $0x78] sm:$0xff] %v235
  %494 = vst [vmem:[%s2 + $0x80] sm:$0xff] %v240
  %495 = vst [vmem:[%s2 + $0x88] sm:$0xff] %v245
  %496 = vst [vmem:[%s2 + $0x90] sm:$0xff] %v250
  %497 = vst [vmem:[%s2 + $0x98] sm:$0xff] %v255
  %498 = vst [vmem:[%s2 + $0xa0] sm:$0xff] %v260
  %499 = vst [vmem:[%s2 + $0xa8] sm:$0xff] %v265
  %500 = vst [vmem:[%s2 + $0xb0] sm:$0xff] %v270
  %501 = vst [vmem:[%s2 + $0xb8] sm:$0xff] %v275
  %502 = vst [vmem:[%s2 + $0xc0] sm:$0xff] %v280
  %503 = vst [vmem:[%s2 + $0xc8] sm:$0xff] %v285
  %504 = vst [vmem:[%s2 + $0xd0] sm:$0xff] %v290
  %505 = vst [vmem:[%s2 + $0xd8] sm:$0xff] %v295
  %506 = vst [vmem:[%s2 + $0xe0] sm:$0xff] %v300
  %507 = vst [vmem:[%s2 + $0xe8] sm:$0xff] %v305
  %508 = vst [vmem:[%s2 + $0xf0] sm:$0xff] %v310
  %509 = vst [vmem:[%s2 + $0xf8] sm:$0xff] %v315
  %510 = vst [vmem:[%s2 + $0x100] sm:$0xff] %v320
  %511 = vst [vmem:[%s2 + $0x108] sm:$0xff] %v325
  %512 = vst [vmem:[%s2 + $0x110] sm:$0xff] %v330
  %513 = vst [vmem:[%s2 + $0x118] sm:$0xff] %v335
  %514 = vst [vmem:[%s2 + $0x120] sm:$0xff] %v340
  %515 = vst [vmem:[%s2 + $0x128] sm:$0xff] %v345
  %516 = vst [vmem:[%s2 + $0x130] sm:$0xff] %v350
  %517 = vst [vmem:[%s2 + $0x138] sm:$0xff] %v355
  %518 = vst [vmem:[%s2 + $0x140] sm:$0xff] %v360
  %519 = vst [vmem:[%s2 + $0x148] sm:$0xff] %v365
  %520 = vst [vmem:[%s2 + $0x150] sm:$0xff] %v370
  %521 = vst [vmem:[%s2 + $0x158] sm:$0xff] %v375
  %522 = vst [vmem:[%s2 + $0x160] sm:$0xff] %v380
  %523 = vst [vmem:[%s2 + $0x168] sm:$0xff] %v385
  %524 = vst [vmem:[%s2 + $0x170] sm:$0xff] %v390
  %525 = vst [vmem:[%s2 + $0x178] sm:$0xff] %v395
  %526 = vst [vmem:[%s2 + $0x180] sm:$0xff] %v400
  %527 = vst [vmem:[%s2 + $0x188] sm:$0xff] %v405
  %528 = vst [vmem:[%s2 + $0x190] sm:$0xff] %v410
  %529 = vst [vmem:[%s2 + $0x198] sm:$0xff] %v415
  %530 = vst [vmem:[%s2 + $0x1a0] sm:$0xff] %v420
  %531 = vst [vmem:[%s2 + $0x1a8] sm:$0xff] %v425
  %532 = vst [vmem:[%s2 + $0x1b0] sm:$0xff] %v430
  %533 = vst [vmem:[%s2 + $0x1b8] sm:$0xff] %v435
  %534 = vst [vmem:[%s2 + $0x1c0] sm:$0xff] %v440
  %535 = vst [vmem:[%s2 + $0x1c8] sm:$0xff] %v445
  %536 = vst [vmem:[%s2 + $0x1d0] sm:$0xff] %v450
  %537 = vst [vmem:[%s2 + $0x1d8] sm:$0xff] %v455
  %538 = vst [vmem:[%s2 + $0x1e0] sm:$0xff] %v460
  %539 = vst [vmem:[%s2 + $0x1e8] sm:$0xff] %v465
  %540 = vst [vmem:[%s2 + $0x1f0] sm:$0xff] %v470
  %541 = vst [vmem:[%s2 + $0x1f8] sm:$0xff] %v475
  %v542 = vadd.f32 %v160, %v165
  %v543 = vadd.f32 %v542, %v170
  %v544 = vadd.f32 %v543, %v175
  %v545 = vadd.f32 %v544, %v180
  %v546 = vadd.f32 %v545, %v185
  %v547 = vadd.f32 %v546, %v190
  %v548 = vadd.f32 %v547, %v195
  %v549 = vadd.f32 %v548, %v200
  %v550 = vadd.f32 %v549, %v205
  %v551 = vadd.f32 %v550, %v210
  %v552 = vadd.f32 %v551, %v215
  %v553 = vadd.f32 %v552, %v220
  %v554 = vadd.f32 %v553, %v225
  %v555 = vadd.f32 %v554, %v230
  %v556 = vadd.f32 %v555, %v235
  %v557 = vadd.f32 %v556, %v240
  %v558 = vadd.f32 %v557, %v245
  %v559 = vadd.f32 %v558, %v250
  %v560 = vadd.f32 %v559, %v255
  %v561 = vadd.f32 %v560, %v260
  %v562 = vadd.f32 %v561, %v265
  %v563 = vadd.f32 %v562, %v270
  %v564 = vadd.f32 %v563, %v275
  %v565 = vadd.f32 %v564, %v280
  %v566 = vadd.f32 %v565, %v285
  %v567 = vadd.f32 %v566, %v290
  %v568 = vadd.f32 %v567, %v295
  %v569 = vadd.f32 %v568, %v300
  %v570 = vadd.f32 %v569, %v305
  %v571 = vadd.f32 %v570, %v310
  %v572 = vadd.f32 %v571, %v315
  %v573 = vadd.f32 %v572, %v320
  %v574 = vadd.f32 %v573, %v325
  %v575 = vadd.f32 %v574, %v330
  %v576 = vadd.f32 %v575, %v335
  %v577 = vadd.f32 %v576, %v340
  %v578 = vadd.f32 %v577, %v345
  %v579 = vadd.f32 %v578, %v350
  %v580 = vadd.f32 %v579, %v355
  %v581 = vadd.f32 %v580, %v360
  %v582 = vadd.f32 %v581, %v365
  %v583 = vadd.f32 %v582, %v370
  %v584 = vadd.f32 %v583, %v375
  %v585 = vadd.f32 %v584, %v380
  %v586 = vadd.f32 %v585, %v385
  %v587 = vadd.f32 %v586, %v390
  %v588 = vadd.f32 %v587, %v395
  %v589 = vadd.f32 %v588, %v400
  %v590 = vadd.f32 %v589, %v405
  %v591 = vadd.f32 %v590, %v410
  %v592 = vadd.f32 %v591, %v415
  %v593 = vadd.f32 %v592, %v420
  %v594 = vadd.f32 %v593, %v425
  %v595 = vadd.f32 %v594, %v430
  %v596 = vadd.f32 %v595, %v435
  %v597 = vadd.f32 %v596, %v440
  %v598 = vadd.f32 %v597, %v445
  %v599 = vadd.f32 %v598, %v450
  %v600 = vadd.f32 %v599, %v455
  %v601 = vadd.f32 %v600, %v460
  %v602 = vadd.f32 %v601, %v465
  %v603 = vadd.f32 %v602, %v470
  %v604 = vadd.f32 %v603, %v475
  %v605 = vrot.slane %v604, 4
  %v606 = vadd.f32 %v604, %v605
  %v607 = vrot.slane %v606, 2
  %v608 = vadd.f32 %v606, %v607
  %v609 = vrot.slane %v608, 1
  %v610 = vadd.f32 %v608, %v609
  %611 = vst [vmem:[%s3] sm:$0x1] %v610
  %v612 = vmul.f32 %v160, %v160
  %v613 = vmul.f32 %v165, %v165
  %v614 = vmul.f32 %v170, %v170
  %v615 = vmul.f32 %v175, %v175
  %v616 = vmul.f32 %v180, %v180
  %v617 = vmul.f32 %v185, %v185
  %v618 = vmul.f32 %v190, %v190
  %v619 = vmul.f32 %v195, %v195
  %v620 = vmul.f32 %v200, %v200
  %v621 = vmul.f32 %v205, %v205
  %v622 = vmul.f32 %v210, %v210
  %v623 = vmul.f32 %v215, %v215
  %v624 = vmul.f32 %v220, %v220
  %v625 = vmul.f32 %v225, %v225
  %v626 = vmul.f32 %v230, %v230
  %v627 = vmul.f32 %v235, %v235
  %v628 = vmul.f32 %v240, %v240
  %v629 = vmul.f32 %v245, %v245
  %v630 = vmul.f32 %v250, %v250
  %v631 = vmul.f32 %v255, %v255
  %v632 = vmul.f32 %v260, %v260
  %v633 = vmul.f32 %v265, %v265
  %v634 = vmul.f32 %v270, %v270
  %v635 = vmul.f32 %v275, %v275
  %v636 = vmul.f32 %v280, %v280
  %v637 = vmul.f32 %v285, %v285
  %v638 = vmul.f32 %v290, %v290
  %v639 = vmul.f32 %v295, %v295
  %v640 = vmul.f32 %v300, %v300
  %v641 = vmul.f32 %v305, %v305
  %v642 = vmul.f32 %v310, %v310
  %v643 = vmul.f32 %v315, %v315
  %v644 = vmul.f32 %v320, %v320
  %v645 = vmul.f32 %v325, %v325
  %v646 = vmul.f32 %v330, %v330
  %v647 = vmul.f32 %v335, %v335
  %v648 = vmul.f32 %v340, %v340
  %v649 = vmul.f32 %v345, %v345
  %v650 = vmul.f32 %v350, %v350
  %v651 = vmul.f32 %v355, %v355
  %v652 = vmul.f32 %v360, %v360
  %v653 = vmul.f32 %v365, %v365
  %v654 = vmul.f32 %v370, %v370
  %v655 = vmul.f32 %v375, %v375
  %v656 = vmul.f32 %v380, %v380
  %v657 = vmul.f32 %v385, %v385
  %v658 = vmul.f32 %v390, %v390
  %v659 = vmul.f32 %v395, %v395
  %v660 = vmul.f32 %v400, %v400
  %v661 = vmul.f32 %v405, %v405
  %v662 = vmul.f32 %v410, %v410
  %v663 = vmul.f32 %v415, %v415
  %v664 = vmul.f32 %v420, %v420
  %v665 = vmul.f32 %v425, %v425
  %v666 = vmul.f32 %v430, %v430
  %v667 = vmul.f32 %v435, %v435
  %v668 = vmul.f32 %v440, %v440
  %v669 = vmul.f32 %v445, %v445
  %v670 = vmul.f32 %v450, %v450
  %v671 = vmul.f32 %v455, %v455
  %v672 = vmul.f32 %v460, %v460
  %v673 = vmul.f32 %v465, %v465
  %v674 = vmul.f32 %v470, %v470
  %v675 = vmul.f32 %v475, %v475
  %v676 = vadd.f32 %v612, %v613
  %v677 = vadd.f32 %v676, %v614
  %v678 = vadd.f32 %v677, %v615
  %v679 = vadd.f32 %v678, %v616
  %v680 = vadd.f32 %v679, %v617
  %v681 = vadd.f32 %v680, %v618
  %v682 = vadd.f32 %v681, %v619
  %v683 = vadd.f32 %v682, %v620
  %v684 = vadd.f32 %v683, %v621
  %v685 = vadd.f32 %v684, %v622
  %v686 = vadd.f32 %v685, %v623
  %v687 = vadd.f32 %v686, %v624
  %v688 = vadd.f32 %v687, %v625
  %v689 = vadd.f32 %v688, %v626
  %v690 = vadd.f32 %v689, %v627
  %v691 = vadd.f32 %v690, %v628
  %v692 = vadd.f32 %v691, %v629
  %v693 = vadd.f32 %v692, %v630
  %v694 = vadd.f32 %v693, %v631
  %v695 = vadd.f32 %v694, %v632
  %v696 = vadd.f32 %v695, %v633
  %v697 = vadd.f32 %v696, %v634
  %v698 = vadd.f32 %v697, %v635
  %v699 = vadd.f32 %v698, %v636
  %v700 = vadd.f32 %v699, %v637
  %v701 = vadd.f32 %v700, %v638
  %v702 = vadd.f32 %v701, %v639
  %v703 = vadd.f32 %v702, %v640
  %v704 = vadd.f32 %v703, %v641
  %v705 = vadd.f32 %v704, %v642
  %v706 = vadd.f32 %v705, %v643
  %v707 = vadd.f32 %v706, %v644
  %v708 = vadd.f32 %v707, %v645
  %v709 = vadd.f32 %v708, %v646
  %v710 = vadd.f32 %v709, %v647
  %v711 = vadd.f32 %v710, %v648
  %v712 = vadd.f32 %v711, %v649
  %v713 = vadd.f32 %v712, %v650
  %v714 = vadd.f32 %v713, %v651
  %v715 = vadd.f32 %v714, %v652
  %v716 = vadd.f32 %v715, %v653
  %v717 = vadd.f32 %v716, %v654
  %v718 = vadd.f32 %v717, %v655
  %v719 = vadd.f32 %v718, %v656
  %v720 = vadd.f32 %v719, %v657
  %v721 = vadd.f32 %v720, %v658
  %v722 = vadd.f32 %v721, %v659
  %v723 = vadd.f32 %v722, %v660
  %v724 = vadd.f32 %v723, %v661
  %v725 = vadd.f32 %v724, %v662
  %v726 = vadd.f32 %v725, %v663
  %v727 = vadd.f32 %v726, %v664
  %v728 = vadd.f32 %v727, %v665
  %v729 = vadd.f32 %v728, %v666
  %v730 = vadd.f32 %v729, %v667
  %v731 = vadd.f32 %v730, %v668
  %v732 = vadd.f32 %v731, %v669
  %v733 = vadd.f32 %v732, %v670
  %v734 = vadd.f32 %v733, %v671
  %v735 = vadd.f32 %v734, %v672
  %v736 = vadd.f32 %v735, %v673
  %v737 = vadd.f32 %v736, %v674
  %v738 = vadd.f32 %v737, %v675
  %v739 = vrot.slane %v738, 4
  %v740 = vadd.f32 %v738, %v739
  %v741 = vrot.slane %v740, 2
  %v742 = vadd.f32 %v740, %v741
  %v743 = vrot.slane %v742, 1
  %v744 = vadd.f32 %v742, %v743
  %745 = vst [vmem:[%s3 + $0x1] sm:$0x1] %v744
  // Predicated region
  $region10: #{_bottleneck_forward.4} parent=0 // pred_check
    _
  $region11: #{_bottleneck_forward.4} parent=0 // pred_check_branch
    %747 = sbr.rel (0) target = $region13
  $region12: #{_bottleneck_forward.4} parent=0 // pred_region
    _
  $region13: #{_bottleneck_forward.4} parent=0 // pred_fallthru
    _
  // Predicated region
  $region14: #{_bottleneck_forward.4} parent=0 // pred_check
    _
  $region15: #{_bottleneck_forward.4} parent=0 // pred_check_branch
    %749 = sbr.rel (0) target = $region17
  $region16: #{_bottleneck_forward.4} parent=0 // pred_region
    _
  $region17: #{_bottleneck_forward.4} parent=0 // pred_fallthru
    _
  // Predicated region
  $region18: #{_bottleneck_forward.4} parent=0 // pred_check
    _
  $region19: #{_bottleneck_forward.4} parent=0 // pred_check_branch
    %751 = sbr.rel (0) target = $region21
  $region20: #{_bottleneck_forward.4} parent=0 // pred_region
    _
  $region21: #{_bottleneck_forward.4} parent=0 // pred_fallthru
    _
  // Predicated region
  $region22: #{_bottleneck_forward.4} parent=0 // pred_check
    _
  $region23: #{_bottleneck_forward.4} parent=0 // pred_check_branch
    %753 = sbr.rel (0) target = $region25
  $region24: #{_bottleneck_forward.4} parent=0 // pred_region
    _
  $region25: #{_bottleneck_forward.4} parent=0 // pred_fallthru
    _

// kernel: _bottleneck_forward.7
$region0: #{_bottleneck_forward.7}
  #allocation0 [shape = 'u32[]', space=smem, size = 0x4, offset = 0x4, fixed_abs, tag = 'smem constant byte address 0x4 - core index']
  #allocation1 [shape = 'u32[144,128]{1,0:T(1,128)}', space=vmem, size = 0x12000, scoped, tag = 'internal scratch']
  %s0 = inlined_call_operand.vmem [shape: f32[512,128], index: 0, kind: input, shape index: {}, may-alias: {0,4}]
  %s1 = inlined_call_operand.vmem [shape: f32[512,128], index: 1, kind: input, shape index: {}]
  %s2 = inlined_call_operand.vmem [shape: f32[1,128], index: 2, kind: input, shape index: {}]
  %s3 = inlined_call_operand.vmem [shape: f32[1,128], index: 3, kind: input, shape index: {}]
  %s4 = inlined_call_operand.vmem [shape: f32[512,128], index: 4, kind: output, shape index: {}, may-alias: {0,4}]
  %s5 = sld [smem:[#allocation0]]
  $region26: #{_bottleneck_forward.7} parent=0
    _
  %s7 = ssub.s32 1, %s5
  %s8 = scalar_select 0, %s7, %s5
  // Predicated region
  $region2: #{_bottleneck_forward.7} parent=0 // pred_check
    _
  $region3: #{_bottleneck_forward.7} parent=0 // pred_check_branch
    %10 = sbr.rel (0) target = $region5
  $region4: #{_bottleneck_forward.7} parent=0 // pred_region
    _
  $region5: #{_bottleneck_forward.7} parent=0 // pred_fallthru
    _
  // Predicated region
  $region6: #{_bottleneck_forward.7} parent=0 // pred_check
    _
  $region7: #{_bottleneck_forward.7} parent=0 // pred_check_branch
    %12 = sbr.rel (0) target = $region9
  $region8: #{_bottleneck_forward.7} parent=0 // pred_region
    _
  $region9: #{_bottleneck_forward.7} parent=0 // pred_fallthru
    _
  // Predicated region
  $region10: #{_bottleneck_forward.7} parent=0 // pred_check
    _
  $region11: #{_bottleneck_forward.7} parent=0 // pred_check_branch
    %14 = sbr.rel (0) target = $region13
  $region12: #{_bottleneck_forward.7} parent=0 // pred_region
    _
  $region13: #{_bottleneck_forward.7} parent=0 // pred_fallthru
    _
  // Predicated region
  $region14: #{_bottleneck_forward.7} parent=0 // pred_check
    _
  $region15: #{_bottleneck_forward.7} parent=0 // pred_check_branch
    %16 = sbr.rel (0) target = $region17
  $region16: #{_bottleneck_forward.7} parent=0 // pred_region
    _
  $region17: #{_bottleneck_forward.7} parent=0 // pred_fallthru
    _
  %v17 = vld [vmem:[%s0] sm:$0xff]
  %v18 = vld [vmem:[%s0 + $0x8] sm:$0xff]
  %v19 = vld [vmem:[%s0 + $0x10] sm:$0xff]
  %v20 = vld [vmem:[%s0 + $0x18] sm:$0xff]
  %v21 = vld [vmem:[%s0 + $0x20] sm:$0xff]
  %v22 = vld [vmem:[%s0 + $0x28] sm:$0xff]
  %v23 = vld [vmem:[%s0 + $0x30] sm:$0xff]
  %v24 = vld [vmem:[%s0 + $0x38] sm:$0xff]
  %v25 = vld [vmem:[%s0 + $0x40] sm:$0xff]
  %v26 = vld [vmem:[%s0 + $0x48] sm:$0xff]
  %v27 = vld [vmem:[%s0 + $0x50] sm:$0xff]
  %v28 = vld [vmem:[%s0 + $0x58] sm:$0xff]
  %v29 = vld [vmem:[%s0 + $0x60] sm:$0xff]
  %v30 = vld [vmem:[%s0 + $0x68] sm:$0xff]
  %v31 = vld [vmem:[%s0 + $0x70] sm:$0xff]
  %v32 = vld [vmem:[%s0 + $0x78] sm:$0xff]
  %v33 = vld [vmem:[%s0 + $0x80] sm:$0xff]
  %v34 = vld [vmem:[%s0 + $0x88] sm:$0xff]
  %v35 = vld [vmem:[%s0 + $0x90] sm:$0xff]
  %v36 = vld [vmem:[%s0 + $0x98] sm:$0xff]
  %v37 = vld [vmem:[%s0 + $0xa0] sm:$0xff]
  %v38 = vld [vmem:[%s0 + $0xa8] sm:$0xff]
  %v39 = vld [vmem:[%s0 + $0xb0] sm:$0xff]
  %v40 = vld [vmem:[%s0 + $0xb8] sm:$0xff]
  %v41 = vld [vmem:[%s0 + $0xc0] sm:$0xff]
  %v42 = vld [vmem:[%s0 + $0xc8] sm:$0xff]
  %v43 = vld [vmem:[%s0 + $0xd0] sm:$0xff]
  %v44 = vld [vmem:[%s0 + $0xd8] sm:$0xff]
  %v45 = vld [vmem:[%s0 + $0xe0] sm:$0xff]
  %v46 = vld [vmem:[%s0 + $0xe8] sm:$0xff]
  %v47 = vld [vmem:[%s0 + $0xf0] sm:$0xff]
  %v48 = vld [vmem:[%s0 + $0xf8] sm:$0xff]
  %v49 = vld [vmem:[%s0 + $0x100] sm:$0xff]
  %v50 = vld [vmem:[%s0 + $0x108] sm:$0xff]
  %v51 = vld [vmem:[%s0 + $0x110] sm:$0xff]
  %v52 = vld [vmem:[%s0 + $0x118] sm:$0xff]
  %v53 = vld [vmem:[%s0 + $0x120] sm:$0xff]
  %v54 = vld [vmem:[%s0 + $0x128] sm:$0xff]
  %v55 = vld [vmem:[%s0 + $0x130] sm:$0xff]
  %v56 = vld [vmem:[%s0 + $0x138] sm:$0xff]
  %v57 = vld [vmem:[%s0 + $0x140] sm:$0xff]
  %v58 = vld [vmem:[%s0 + $0x148] sm:$0xff]
  %v59 = vld [vmem:[%s0 + $0x150] sm:$0xff]
  %v60 = vld [vmem:[%s0 + $0x158] sm:$0xff]
  %v61 = vld [vmem:[%s0 + $0x160] sm:$0xff]
  %v62 = vld [vmem:[%s0 + $0x168] sm:$0xff]
  %v63 = vld [vmem:[%s0 + $0x170] sm:$0xff]
  %v64 = vld [vmem:[%s0 + $0x178] sm:$0xff]
  %v65 = vld [vmem:[%s0 + $0x180] sm:$0xff]
  %v66 = vld [vmem:[%s0 + $0x188] sm:$0xff]
  %v67 = vld [vmem:[%s0 + $0x190] sm:$0xff]
  %v68 = vld [vmem:[%s0 + $0x198] sm:$0xff]
  %v69 = vld [vmem:[%s0 + $0x1a0] sm:$0xff]
  %v70 = vld [vmem:[%s0 + $0x1a8] sm:$0xff]
  %v71 = vld [vmem:[%s0 + $0x1b0] sm:$0xff]
  %v72 = vld [vmem:[%s0 + $0x1b8] sm:$0xff]
  %v73 = vld [vmem:[%s0 + $0x1c0] sm:$0xff]
  %v74 = vld [vmem:[%s0 + $0x1c8] sm:$0xff]
  %v75 = vld [vmem:[%s0 + $0x1d0] sm:$0xff]
  %v76 = vld [vmem:[%s0 + $0x1d8] sm:$0xff]
  %v77 = vld [vmem:[%s0 + $0x1e0] sm:$0xff]
  %v78 = vld [vmem:[%s0 + $0x1e8] sm:$0xff]
  %v79 = vld [vmem:[%s0 + $0x1f0] sm:$0xff]
  %v80 = vld [vmem:[%s0 + $0x1f8] sm:$0xff]
  %v81 = vld [vmem:[%s2] sm:$0x1]
  %v83 = vlaneseq
  %v84 = vshrl.u32 %v83, 7
  %v85 = vsub.s32 0, %v84
  %v86 = vrot.slane %v81, %v85
  %v88 = vmul.f32 %v17, %v86
  %v89 = vmul.f32 %v18, %v86
  %v90 = vmul.f32 %v19, %v86
  %v91 = vmul.f32 %v20, %v86
  %v92 = vmul.f32 %v21, %v86
  %v93 = vmul.f32 %v22, %v86
  %v94 = vmul.f32 %v23, %v86
  %v95 = vmul.f32 %v24, %v86
  %v96 = vmul.f32 %v25, %v86
  %v97 = vmul.f32 %v26, %v86
  %v98 = vmul.f32 %v27, %v86
  %v99 = vmul.f32 %v28, %v86
  %v100 = vmul.f32 %v29, %v86
  %v101 = vmul.f32 %v30, %v86
  %v102 = vmul.f32 %v31, %v86
  %v103 = vmul.f32 %v32, %v86
  %v104 = vmul.f32 %v33, %v86
  %v105 = vmul.f32 %v34, %v86
  %v106 = vmul.f32 %v35, %v86
  %v107 = vmul.f32 %v36, %v86
  %v108 = vmul.f32 %v37, %v86
  %v109 = vmul.f32 %v38, %v86
  %v110 = vmul.f32 %v39, %v86
  %v111 = vmul.f32 %v40, %v86
  %v112 = vmul.f32 %v41, %v86
  %v113 = vmul.f32 %v42, %v86
  %v114 = vmul.f32 %v43, %v86
  %v115 = vmul.f32 %v44, %v86
  %v116 = vmul.f32 %v45, %v86
  %v117 = vmul.f32 %v46, %v86
  %v118 = vmul.f32 %v47, %v86
  %v119 = vmul.f32 %v48, %v86
  %v120 = vmul.f32 %v49, %v86
  %v121 = vmul.f32 %v50, %v86
  %v122 = vmul.f32 %v51, %v86
  %v123 = vmul.f32 %v52, %v86
  %v124 = vmul.f32 %v53, %v86
  %v125 = vmul.f32 %v54, %v86
  %v126 = vmul.f32 %v55, %v86
  %v127 = vmul.f32 %v56, %v86
  %v128 = vmul.f32 %v57, %v86
  %v129 = vmul.f32 %v58, %v86
  %v130 = vmul.f32 %v59, %v86
  %v131 = vmul.f32 %v60, %v86
  %v132 = vmul.f32 %v61, %v86
  %v133 = vmul.f32 %v62, %v86
  %v134 = vmul.f32 %v63, %v86
  %v135 = vmul.f32 %v64, %v86
  %v136 = vmul.f32 %v65, %v86
  %v137 = vmul.f32 %v66, %v86
  %v138 = vmul.f32 %v67, %v86
  %v139 = vmul.f32 %v68, %v86
  %v140 = vmul.f32 %v69, %v86
  %v141 = vmul.f32 %v70, %v86
  %v142 = vmul.f32 %v71, %v86
  %v143 = vmul.f32 %v72, %v86
  %v144 = vmul.f32 %v73, %v86
  %v145 = vmul.f32 %v74, %v86
  %v146 = vmul.f32 %v75, %v86
  %v147 = vmul.f32 %v76, %v86
  %v148 = vmul.f32 %v77, %v86
  %v149 = vmul.f32 %v78, %v86
  %v150 = vmul.f32 %v79, %v86
  %v151 = vmul.f32 %v80, %v86
  %v152 = vld [vmem:[%s3] sm:$0x1]
  %v154 = vlaneseq
  %v155 = vshrl.u32 %v154, 7
  %v156 = vsub.s32 0, %v155
  %v157 = vrot.slane %v152, %v156
  %v159 = vadd.f32 %v88, %v157
  %v160 = vadd.f32 %v89, %v157
  %v161 = vadd.f32 %v90, %v157
  %v162 = vadd.f32 %v91, %v157
  %v163 = vadd.f32 %v92, %v157
  %v164 = vadd.f32 %v93, %v157
  %v165 = vadd.f32 %v94, %v157
  %v166 = vadd.f32 %v95, %v157
  %v167 = vadd.f32 %v96, %v157
  %v168 = vadd.f32 %v97, %v157
  %v169 = vadd.f32 %v98, %v157
  %v170 = vadd.f32 %v99, %v157
  %v171 = vadd.f32 %v100, %v157
  %v172 = vadd.f32 %v101, %v157
  %v173 = vadd.f32 %v102, %v157
  %v174 = vadd.f32 %v103, %v157
  %v175 = vadd.f32 %v104, %v157
  %v176 = vadd.f32 %v105, %v157
  %v177 = vadd.f32 %v106, %v157
  %v178 = vadd.f32 %v107, %v157
  %v179 = vadd.f32 %v108, %v157
  %v180 = vadd.f32 %v109, %v157
  %v181 = vadd.f32 %v110, %v157
  %v182 = vadd.f32 %v111, %v157
  %v183 = vadd.f32 %v112, %v157
  %v184 = vadd.f32 %v113, %v157
  %v185 = vadd.f32 %v114, %v157
  %v186 = vadd.f32 %v115, %v157
  %v187 = vadd.f32 %v116, %v157
  %v188 = vadd.f32 %v117, %v157
  %v189 = vadd.f32 %v118, %v157
  %v190 = vadd.f32 %v119, %v157
  %v191 = vadd.f32 %v120, %v157
  %v192 = vadd.f32 %v121, %v157
  %v193 = vadd.f32 %v122, %v157
  %v194 = vadd.f32 %v123, %v157
  %v195 = vadd.f32 %v124, %v157
  %v196 = vadd.f32 %v125, %v157
  %v197 = vadd.f32 %v126, %v157
  %v198 = vadd.f32 %v127, %v157
  %v199 = vadd.f32 %v128, %v157
  %v200 = vadd.f32 %v129, %v157
  %v201 = vadd.f32 %v130, %v157
  %v202 = vadd.f32 %v131, %v157
  %v203 = vadd.f32 %v132, %v157
  %v204 = vadd.f32 %v133, %v157
  %v205 = vadd.f32 %v134, %v157
  %v206 = vadd.f32 %v135, %v157
  %v207 = vadd.f32 %v136, %v157
  %v208 = vadd.f32 %v137, %v157
  %v209 = vadd.f32 %v138, %v157
  %v210 = vadd.f32 %v139, %v157
  %v211 = vadd.f32 %v140, %v157
  %v212 = vadd.f32 %v141, %v157
  %v213 = vadd.f32 %v142, %v157
  %v214 = vadd.f32 %v143, %v157
  %v215 = vadd.f32 %v144, %v157
  %v216 = vadd.f32 %v145, %v157
  %v217 = vadd.f32 %v146, %v157
  %v218 = vadd.f32 %v147, %v157
  %v219 = vadd.f32 %v148, %v157
  %v220 = vadd.f32 %v149, %v157
  %v221 = vadd.f32 %v150, %v157
  %v222 = vadd.f32 %v151, %v157
  %v223 = vld [vmem:[%s1] sm:$0xff]
  %v224 = vld [vmem:[%s1 + $0x8] sm:$0xff]
  %v225 = vld [vmem:[%s1 + $0x10] sm:$0xff]
  %v226 = vld [vmem:[%s1 + $0x18] sm:$0xff]
  %v227 = vld [vmem:[%s1 + $0x20] sm:$0xff]
  %v228 = vld [vmem:[%s1 + $0x28] sm:$0xff]
  %v229 = vld [vmem:[%s1 + $0x30] sm:$0xff]
  %v230 = vld [vmem:[%s1 + $0x38] sm:$0xff]
  %v231 = vld [vmem:[%s1 + $0x40] sm:$0xff]
  %v232 = vld [vmem:[%s1 + $0x48] sm:$0xff]
  %v233 = vld [vmem:[%s1 + $0x50] sm:$0xff]
  %v234 = vld [vmem:[%s1 + $0x58] sm:$0xff]
  %v235 = vld [vmem:[%s1 + $0x60] sm:$0xff]
  %v236 = vld [vmem:[%s1 + $0x68] sm:$0xff]
  %v237 = vld [vmem:[%s1 + $0x70] sm:$0xff]
  %v238 = vld [vmem:[%s1 + $0x78] sm:$0xff]
  %v239 = vld [vmem:[%s1 + $0x80] sm:$0xff]
  %v240 = vld [vmem:[%s1 + $0x88] sm:$0xff]
  %v241 = vld [vmem:[%s1 + $0x90] sm:$0xff]
  %v242 = vld [vmem:[%s1 + $0x98] sm:$0xff]
  %v243 = vld [vmem:[%s1 + $0xa0] sm:$0xff]
  %v244 = vld [vmem:[%s1 + $0xa8] sm:$0xff]
  %v245 = vld [vmem:[%s1 + $0xb0] sm:$0xff]
  %v246 = vld [vmem:[%s1 + $0xb8] sm:$0xff]
  %v247 = vld [vmem:[%s1 + $0xc0] sm:$0xff]
  %v248 = vld [vmem:[%s1 + $0xc8] sm:$0xff]
  %v249 = vld [vmem:[%s1 + $0xd0] sm:$0xff]
  %v250 = vld [vmem:[%s1 + $0xd8] sm:$0xff]
  %v251 = vld [vmem:[%s1 + $0xe0] sm:$0xff]
  %v252 = vld [vmem:[%s1 + $0xe8] sm:$0xff]
  %v253 = vld [vmem:[%s1 + $0xf0] sm:$0xff]
  %v254 = vld [vmem:[%s1 + $0xf8] sm:$0xff]
  %v255 = vld [vmem:[%s1 + $0x100] sm:$0xff]
  %v256 = vld [vmem:[%s1 + $0x108] sm:$0xff]
  %v257 = vld [vmem:[%s1 + $0x110] sm:$0xff]
  %v258 = vld [vmem:[%s1 + $0x118] sm:$0xff]
  %v259 = vld [vmem:[%s1 + $0x120] sm:$0xff]
  %v260 = vld [vmem:[%s1 + $0x128] sm:$0xff]
  %v261 = vld [vmem:[%s1 + $0x130] sm:$0xff]
  %v262 = vld [vmem:[%s1 + $0x138] sm:$0xff]
  %v263 = vld [vmem:[%s1 + $0x140] sm:$0xff]
  %v264 = vld [vmem:[%s1 + $0x148] sm:$0xff]
  %v265 = vld [vmem:[%s1 + $0x150] sm:$0xff]
  %v266 = vld [vmem:[%s1 + $0x158] sm:$0xff]
  %v267 = vld [vmem:[%s1 + $0x160] sm:$0xff]
  %v268 = vld [vmem:[%s1 + $0x168] sm:$0xff]
  %v269 = vld [vmem:[%s1 + $0x170] sm:$0xff]
  %v270 = vld [vmem:[%s1 + $0x178] sm:$0xff]
  %v271 = vld [vmem:[%s1 + $0x180] sm:$0xff]
  %v272 = vld [vmem:[%s1 + $0x188] sm:$0xff]
  %v273 = vld [vmem:[%s1 + $0x190] sm:$0xff]
  %v274 = vld [vmem:[%s1 + $0x198] sm:$0xff]
  %v275 = vld [vmem:[%s1 + $0x1a0] sm:$0xff]
  %v276 = vld [vmem:[%s1 + $0x1a8] sm:$0xff]
  %v277 = vld [vmem:[%s1 + $0x1b0] sm:$0xff]
  %v278 = vld [vmem:[%s1 + $0x1b8] sm:$0xff]
  %v279 = vld [vmem:[%s1 + $0x1c0] sm:$0xff]
  %v280 = vld [vmem:[%s1 + $0x1c8] sm:$0xff]
  %v281 = vld [vmem:[%s1 + $0x1d0] sm:$0xff]
  %v282 = vld [vmem:[%s1 + $0x1d8] sm:$0xff]
  %v283 = vld [vmem:[%s1 + $0x1e0] sm:$0xff]
  %v284 = vld [vmem:[%s1 + $0x1e8] sm:$0xff]
  %v285 = vld [vmem:[%s1 + $0x1f0] sm:$0xff]
  %v286 = vld [vmem:[%s1 + $0x1f8] sm:$0xff]
  %v287 = vadd.f32 %v159, %v223
  %v288 = vadd.f32 %v160, %v224
  %v289 = vadd.f32 %v161, %v225
  %v290 = vadd.f32 %v162, %v226
  %v291 = vadd.f32 %v163, %v227
  %v292 = vadd.f32 %v164, %v228
  %v293 = vadd.f32 %v165, %v229
  %v294 = vadd.f32 %v166, %v230
  %v295 = vadd.f32 %v167, %v231
  %v296 = vadd.f32 %v168, %v232
  %v297 = vadd.f32 %v169, %v233
  %v298 = vadd.f32 %v170, %v234
  %v299 = vadd.f32 %v171, %v235
  %v300 = vadd.f32 %v172, %v236
  %v301 = vadd.f32 %v173, %v237
  %v302 = vadd.f32 %v174, %v238
  %v303 = vadd.f32 %v175, %v239
  %v304 = vadd.f32 %v176, %v240
  %v305 = vadd.f32 %v177, %v241
  %v306 = vadd.f32 %v178, %v242
  %v307 = vadd.f32 %v179, %v243
  %v308 = vadd.f32 %v180, %v244
  %v309 = vadd.f32 %v181, %v245
  %v310 = vadd.f32 %v182, %v246
  %v311 = vadd.f32 %v183, %v247
  %v312 = vadd.f32 %v184, %v248
  %v313 = vadd.f32 %v185, %v249
  %v314 = vadd.f32 %v186, %v250
  %v315 = vadd.f32 %v187, %v251
  %v316 = vadd.f32 %v188, %v252
  %v317 = vadd.f32 %v189, %v253
  %v318 = vadd.f32 %v190, %v254
  %v319 = vadd.f32 %v191, %v255
  %v320 = vadd.f32 %v192, %v256
  %v321 = vadd.f32 %v193, %v257
  %v322 = vadd.f32 %v194, %v258
  %v323 = vadd.f32 %v195, %v259
  %v324 = vadd.f32 %v196, %v260
  %v325 = vadd.f32 %v197, %v261
  %v326 = vadd.f32 %v198, %v262
  %v327 = vadd.f32 %v199, %v263
  %v328 = vadd.f32 %v200, %v264
  %v329 = vadd.f32 %v201, %v265
  %v330 = vadd.f32 %v202, %v266
  %v331 = vadd.f32 %v203, %v267
  %v332 = vadd.f32 %v204, %v268
  %v333 = vadd.f32 %v205, %v269
  %v334 = vadd.f32 %v206, %v270
  %v335 = vadd.f32 %v207, %v271
  %v336 = vadd.f32 %v208, %v272
  %v337 = vadd.f32 %v209, %v273
  %v338 = vadd.f32 %v210, %v274
  %v339 = vadd.f32 %v211, %v275
  %v340 = vadd.f32 %v212, %v276
  %v341 = vadd.f32 %v213, %v277
  %v342 = vadd.f32 %v214, %v278
  %v343 = vadd.f32 %v215, %v279
  %v344 = vadd.f32 %v216, %v280
  %v345 = vadd.f32 %v217, %v281
  %v346 = vadd.f32 %v218, %v282
  %v347 = vadd.f32 %v219, %v283
  %v348 = vadd.f32 %v220, %v284
  %v349 = vadd.f32 %v221, %v285
  %v350 = vadd.f32 %v222, %v286
  %v351 = vmax.f32 %v287, 0.0
  %v352 = vmax.f32 %v288, 0.0
  %v353 = vmax.f32 %v289, 0.0
  %v354 = vmax.f32 %v290, 0.0
  %v355 = vmax.f32 %v291, 0.0
  %v356 = vmax.f32 %v292, 0.0
  %v357 = vmax.f32 %v293, 0.0
  %v358 = vmax.f32 %v294, 0.0
  %v359 = vmax.f32 %v295, 0.0
  %v360 = vmax.f32 %v296, 0.0
  %v361 = vmax.f32 %v297, 0.0
  %v362 = vmax.f32 %v298, 0.0
  %v363 = vmax.f32 %v299, 0.0
  %v364 = vmax.f32 %v300, 0.0
  %v365 = vmax.f32 %v301, 0.0
  %v366 = vmax.f32 %v302, 0.0
  %v367 = vmax.f32 %v303, 0.0
  %v368 = vmax.f32 %v304, 0.0
  %v369 = vmax.f32 %v305, 0.0
  %v370 = vmax.f32 %v306, 0.0
  %v371 = vmax.f32 %v307, 0.0
  %v372 = vmax.f32 %v308, 0.0
  %v373 = vmax.f32 %v309, 0.0
  %v374 = vmax.f32 %v310, 0.0
  %v375 = vmax.f32 %v311, 0.0
  %v376 = vmax.f32 %v312, 0.0
  %v377 = vmax.f32 %v313, 0.0
  %v378 = vmax.f32 %v314, 0.0
  %v379 = vmax.f32 %v315, 0.0
  %v380 = vmax.f32 %v316, 0.0
  %v381 = vmax.f32 %v317, 0.0
  %v382 = vmax.f32 %v318, 0.0
  %v383 = vmax.f32 %v319, 0.0
  %v384 = vmax.f32 %v320, 0.0
  %v385 = vmax.f32 %v321, 0.0
  %v386 = vmax.f32 %v322, 0.0
  %v387 = vmax.f32 %v323, 0.0
  %v388 = vmax.f32 %v324, 0.0
  %v389 = vmax.f32 %v325, 0.0
  %v390 = vmax.f32 %v326, 0.0
  %v391 = vmax.f32 %v327, 0.0
  %v392 = vmax.f32 %v328, 0.0
  %v393 = vmax.f32 %v329, 0.0
  %v394 = vmax.f32 %v330, 0.0
  %v395 = vmax.f32 %v331, 0.0
  %v396 = vmax.f32 %v332, 0.0
  %v397 = vmax.f32 %v333, 0.0
  %v398 = vmax.f32 %v334, 0.0
  %v399 = vmax.f32 %v335, 0.0
  %v400 = vmax.f32 %v336, 0.0
  %v401 = vmax.f32 %v337, 0.0
  %v402 = vmax.f32 %v338, 0.0
  %v403 = vmax.f32 %v339, 0.0
  %v404 = vmax.f32 %v340, 0.0
  %v405 = vmax.f32 %v341, 0.0
  %v406 = vmax.f32 %v342, 0.0
  %v407 = vmax.f32 %v343, 0.0
  %v408 = vmax.f32 %v344, 0.0
  %v409 = vmax.f32 %v345, 0.0
  %v410 = vmax.f32 %v346, 0.0
  %v411 = vmax.f32 %v347, 0.0
  %v412 = vmax.f32 %v348, 0.0
  %v413 = vmax.f32 %v349, 0.0
  %v414 = vmax.f32 %v350, 0.0
  %415 = vst [vmem:[%s4] sm:$0xff] %v351
  %416 = vst [vmem:[%s4 + $0x8] sm:$0xff] %v352
  %417 = vst [vmem:[%s4 + $0x10] sm:$0xff] %v353
  %418 = vst [vmem:[%s4 + $0x18] sm:$0xff] %v354
  %419 = vst [vmem:[%s4 + $0x20] sm:$0xff] %v355
  %420 = vst [vmem:[%s4 + $0x28] sm:$0xff] %v356
  %421 = vst [vmem:[%s4 + $0x30] sm:$0xff] %v357
  %422 = vst [vmem:[%s4 + $0x38] sm:$0xff] %v358
  %423 = vst [vmem:[%s4 + $0x40] sm:$0xff] %v359
  %424 = vst [vmem:[%s4 + $0x48] sm:$0xff] %v360
  %425 = vst [vmem:[%s4 + $0x50] sm:$0xff] %v361
  %426 = vst [vmem:[%s4 + $0x58] sm:$0xff] %v362
  %427 = vst [vmem:[%s4 + $0x60] sm:$0xff] %v363
  %428 = vst [vmem:[%s4 + $0x68] sm:$0xff] %v364
  %429 = vst [vmem:[%s4 + $0x70] sm:$0xff] %v365
  %430 = vst [vmem:[%s4 + $0x78] sm:$0xff] %v366
  %431 = vst [vmem:[%s4 + $0x80] sm:$0xff] %v367
  %432 = vst [vmem:[%s4 + $0x88] sm:$0xff] %v368
  %433 = vst [vmem:[%s4 + $0x90] sm:$0xff] %v369
  %434 = vst [vmem:[%s4 + $0x98] sm:$0xff] %v370
  %435 = vst [vmem:[%s4 + $0xa0] sm:$0xff] %v371
  %436 = vst [vmem:[%s4 + $0xa8] sm:$0xff] %v372
  %437 = vst [vmem:[%s4 + $0xb0] sm:$0xff] %v373
  %438 = vst [vmem:[%s4 + $0xb8] sm:$0xff] %v374
  %439 = vst [vmem:[%s4 + $0xc0] sm:$0xff] %v375
  %440 = vst [vmem:[%s4 + $0xc8] sm:$0xff] %v376
  %441 = vst [vmem:[%s4 + $0xd0] sm:$0xff] %v377
  %442 = vst [vmem:[%s4 + $0xd8] sm:$0xff] %v378
  %443 = vst [vmem:[%s4 + $0xe0] sm:$0xff] %v379
  %444 = vst [vmem:[%s4 + $0xe8] sm:$0xff] %v380
  %445 = vst [vmem:[%s4 + $0xf0] sm:$0xff] %v381
  %446 = vst [vmem:[%s4 + $0xf8] sm:$0xff] %v382
  %447 = vst [vmem:[%s4 + $0x100] sm:$0xff] %v383
  %448 = vst [vmem:[%s4 + $0x108] sm:$0xff] %v384
  %449 = vst [vmem:[%s4 + $0x110] sm:$0xff] %v385
  %450 = vst [vmem:[%s4 + $0x118] sm:$0xff] %v386
  %451 = vst [vmem:[%s4 + $0x120] sm:$0xff] %v387
  %452 = vst [vmem:[%s4 + $0x128] sm:$0xff] %v388
  %453 = vst [vmem:[%s4 + $0x130] sm:$0xff] %v389
  %454 = vst [vmem:[%s4 + $0x138] sm:$0xff] %v390
  %455 = vst [vmem:[%s4 + $0x140] sm:$0xff] %v391
  %456 = vst [vmem:[%s4 + $0x148] sm:$0xff] %v392
  %457 = vst [vmem:[%s4 + $0x150] sm:$0xff] %v393
  %458 = vst [vmem:[%s4 + $0x158] sm:$0xff] %v394
  %459 = vst [vmem:[%s4 + $0x160] sm:$0xff] %v395
  %460 = vst [vmem:[%s4 + $0x168] sm:$0xff] %v396
  %461 = vst [vmem:[%s4 + $0x170] sm:$0xff] %v397
  %462 = vst [vmem:[%s4 + $0x178] sm:$0xff] %v398
  %463 = vst [vmem:[%s4 + $0x180] sm:$0xff] %v399
  %464 = vst [vmem:[%s4 + $0x188] sm:$0xff] %v400
  %465 = vst [vmem:[%s4 + $0x190] sm:$0xff] %v401
  %466 = vst [vmem:[%s4 + $0x198] sm:$0xff] %v402
  %467 = vst [vmem:[%s4 + $0x1a0] sm:$0xff] %v403
  %468 = vst [vmem:[%s4 + $0x1a8] sm:$0xff] %v404
  %469 = vst [vmem:[%s4 + $0x1b0] sm:$0xff] %v405
  %470 = vst [vmem:[%s4 + $0x1b8] sm:$0xff] %v406
  %471 = vst [vmem:[%s4 + $0x1c0] sm:$0xff] %v407
  %472 = vst [vmem:[%s4 + $0x1c8] sm:$0xff] %v408
  %473 = vst [vmem:[%s4 + $0x1d0] sm:$0xff] %v409
  %474 = vst [vmem:[%s4 + $0x1d8] sm:$0xff] %v410
  %475 = vst [vmem:[%s4 + $0x1e0] sm:$0xff] %v411
  %476 = vst [vmem:[%s4 + $0x1e8] sm:$0xff] %v412
  %477 = vst [vmem:[%s4 + $0x1f0] sm:$0xff] %v413
  %478 = vst [vmem:[%s4 + $0x1f8] sm:$0xff] %v414
  // Predicated region
  $region18: #{_bottleneck_forward.7} parent=0 // pred_check
    _
  $region19: #{_bottleneck_forward.7} parent=0 // pred_check_branch
    %480 = sbr.rel (0) target = $region21
  $region20: #{_bottleneck_forward.7} parent=0 // pred_region
    _
  $region21: #{_bottleneck_forward.7} parent=0 // pred_fallthru
    _
  // Predicated region
  $region22: #{_bottleneck_forward.7} parent=0 // pred_check
    _
  $region23: #{_bottleneck_forward.7} parent=0 // pred_check_branch
    %482 = sbr.rel (0) target = $region25
  $region24: #{_bottleneck_forward.7} parent=0 // pred_region
    _
  $region25: #{_bottleneck_forward.7} parent=0 // pred_fallthru
    _

// kernel: _bottleneck_forward.6
$region0: #{_bottleneck_forward.6}
  #allocation0 [shape = 'u32[]', space=smem, size = 0x4, offset = 0x4, fixed_abs, tag = 'smem constant byte address 0x4 - core index']
  #allocation1 [shape = 'u32[144,128]{1,0:T(1,128)}', space=vmem, size = 0x12000, scoped, tag = 'internal scratch']
  %s0 = inlined_call_operand.vmem [shape: f32[512,128], index: 0, kind: input, shape index: {}]
  %s1 = inlined_call_operand.vmem [shape: f32[128,128], index: 1, kind: input, shape index: {}]
  %s2 = inlined_call_operand.vmem [shape: f32[1,128], index: 2, kind: input, shape index: {}]
  %s3 = inlined_call_operand.vmem [shape: f32[1,128], index: 3, kind: input, shape index: {}]
  %s4 = inlined_call_operand.vmem [shape: f32[512,128], index: 4, kind: output, shape index: {0}]
  %s5 = inlined_call_operand.vmem [shape: f32[1,2,128], index: 5, kind: output, shape index: {1}]
  %6 = xla_tuple %s4, %s5
  %s7 = sld [smem:[#allocation0]]
  $region34: #{_bottleneck_forward.6} parent=0
    _
  %s9 = ssub.s32 1, %s7
  %s10 = scalar_select 0, %s9, %s7
  // Predicated region
  $region2: #{_bottleneck_forward.6} parent=0 // pred_check
    _
  $region3: #{_bottleneck_forward.6} parent=0 // pred_check_branch
    %12 = sbr.rel (0) target = $region5
  $region4: #{_bottleneck_forward.6} parent=0 // pred_region
    _
  $region5: #{_bottleneck_forward.6} parent=0 // pred_fallthru
    _
  // Predicated region
  $region6: #{_bottleneck_forward.6} parent=0 // pred_check
    _
  $region7: #{_bottleneck_forward.6} parent=0 // pred_check_branch
    %14 = sbr.rel (0) target = $region9
  $region8: #{_bottleneck_forward.6} parent=0 // pred_region
    _
  $region9: #{_bottleneck_forward.6} parent=0 // pred_fallthru
    _
  // Predicated region
  $region10: #{_bottleneck_forward.6} parent=0 // pred_check
    _
  $region11: #{_bottleneck_forward.6} parent=0 // pred_check_branch
    %16 = sbr.rel (0) target = $region13
  $region12: #{_bottleneck_forward.6} parent=0 // pred_region
    _
  $region13: #{_bottleneck_forward.6} parent=0 // pred_fallthru
    _
  // Predicated region
  $region14: #{_bottleneck_forward.6} parent=0 // pred_check
    _
  $region15: #{_bottleneck_forward.6} parent=0 // pred_check_branch
    %18 = sbr.rel (0) target = $region17
  $region16: #{_bottleneck_forward.6} parent=0 // pred_region
    _
  $region17: #{_bottleneck_forward.6} parent=0 // pred_fallthru
    _
  %v19 = vld [vmem:[%s0] sm:$0xff]
  %v20 = vld [vmem:[%s0 + $0x8] sm:$0xff]
  %v21 = vld [vmem:[%s0 + $0x10] sm:$0xff]
  %v22 = vld [vmem:[%s0 + $0x18] sm:$0xff]
  %v23 = vld [vmem:[%s0 + $0x20] sm:$0xff]
  %v24 = vld [vmem:[%s0 + $0x28] sm:$0xff]
  %v25 = vld [vmem:[%s0 + $0x30] sm:$0xff]
  %v26 = vld [vmem:[%s0 + $0x38] sm:$0xff]
  %v27 = vld [vmem:[%s0 + $0x40] sm:$0xff]
  %v28 = vld [vmem:[%s0 + $0x48] sm:$0xff]
  %v29 = vld [vmem:[%s0 + $0x50] sm:$0xff]
  %v30 = vld [vmem:[%s0 + $0x58] sm:$0xff]
  %v31 = vld [vmem:[%s0 + $0x60] sm:$0xff]
  %v32 = vld [vmem:[%s0 + $0x68] sm:$0xff]
  %v33 = vld [vmem:[%s0 + $0x70] sm:$0xff]
  %v34 = vld [vmem:[%s0 + $0x78] sm:$0xff]
  %v35 = vld [vmem:[%s0 + $0x80] sm:$0xff]
  %v36 = vld [vmem:[%s0 + $0x88] sm:$0xff]
  %v37 = vld [vmem:[%s0 + $0x90] sm:$0xff]
  %v38 = vld [vmem:[%s0 + $0x98] sm:$0xff]
  %v39 = vld [vmem:[%s0 + $0xa0] sm:$0xff]
  %v40 = vld [vmem:[%s0 + $0xa8] sm:$0xff]
  %v41 = vld [vmem:[%s0 + $0xb0] sm:$0xff]
  %v42 = vld [vmem:[%s0 + $0xb8] sm:$0xff]
  %v43 = vld [vmem:[%s0 + $0xc0] sm:$0xff]
  %v44 = vld [vmem:[%s0 + $0xc8] sm:$0xff]
  %v45 = vld [vmem:[%s0 + $0xd0] sm:$0xff]
  %v46 = vld [vmem:[%s0 + $0xd8] sm:$0xff]
  %v47 = vld [vmem:[%s0 + $0xe0] sm:$0xff]
  %v48 = vld [vmem:[%s0 + $0xe8] sm:$0xff]
  %v49 = vld [vmem:[%s0 + $0xf0] sm:$0xff]
  %v50 = vld [vmem:[%s0 + $0xf8] sm:$0xff]
  %v51 = vld [vmem:[%s0 + $0x100] sm:$0xff]
  %v52 = vld [vmem:[%s0 + $0x108] sm:$0xff]
  %v53 = vld [vmem:[%s0 + $0x110] sm:$0xff]
  %v54 = vld [vmem:[%s0 + $0x118] sm:$0xff]
  %v55 = vld [vmem:[%s0 + $0x120] sm:$0xff]
  %v56 = vld [vmem:[%s0 + $0x128] sm:$0xff]
  %v57 = vld [vmem:[%s0 + $0x130] sm:$0xff]
  %v58 = vld [vmem:[%s0 + $0x138] sm:$0xff]
  %v59 = vld [vmem:[%s0 + $0x140] sm:$0xff]
  %v60 = vld [vmem:[%s0 + $0x148] sm:$0xff]
  %v61 = vld [vmem:[%s0 + $0x150] sm:$0xff]
  %v62 = vld [vmem:[%s0 + $0x158] sm:$0xff]
  %v63 = vld [vmem:[%s0 + $0x160] sm:$0xff]
  %v64 = vld [vmem:[%s0 + $0x168] sm:$0xff]
  %v65 = vld [vmem:[%s0 + $0x170] sm:$0xff]
  %v66 = vld [vmem:[%s0 + $0x178] sm:$0xff]
  %v67 = vld [vmem:[%s0 + $0x180] sm:$0xff]
  %v68 = vld [vmem:[%s0 + $0x188] sm:$0xff]
  %v69 = vld [vmem:[%s0 + $0x190] sm:$0xff]
  %v70 = vld [vmem:[%s0 + $0x198] sm:$0xff]
  %v71 = vld [vmem:[%s0 + $0x1a0] sm:$0xff]
  %v72 = vld [vmem:[%s0 + $0x1a8] sm:$0xff]
  %v73 = vld [vmem:[%s0 + $0x1b0] sm:$0xff]
  %v74 = vld [vmem:[%s0 + $0x1b8] sm:$0xff]
  %v75 = vld [vmem:[%s0 + $0x1c0] sm:$0xff]
  %v76 = vld [vmem:[%s0 + $0x1c8] sm:$0xff]
  %v77 = vld [vmem:[%s0 + $0x1d0] sm:$0xff]
  %v78 = vld [vmem:[%s0 + $0x1d8] sm:$0xff]
  %v79 = vld [vmem:[%s0 + $0x1e0] sm:$0xff]
  %v80 = vld [vmem:[%s0 + $0x1e8] sm:$0xff]
  %v81 = vld [vmem:[%s0 + $0x1f0] sm:$0xff]
  %v82 = vld [vmem:[%s0 + $0x1f8] sm:$0xff]
  %v83 = vld [vmem:[%s2] sm:$0x1]
  %v85 = vlaneseq
  %v86 = vshrl.u32 %v85, 7
  %v87 = vsub.s32 0, %v86
  %v88 = vrot.slane %v83, %v87
  %v90 = vmul.f32 %v19, %v88
  %v91 = vmul.f32 %v20, %v88
  %v92 = vmul.f32 %v21, %v88
  %v93 = vmul.f32 %v22, %v88
  %v94 = vmul.f32 %v23, %v88
  %v95 = vmul.f32 %v24, %v88
  %v96 = vmul.f32 %v25, %v88
  %v97 = vmul.f32 %v26, %v88
  %v98 = vmul.f32 %v27, %v88
  %v99 = vmul.f32 %v28, %v88
  %v100 = vmul.f32 %v29, %v88
  %v101 = vmul.f32 %v30, %v88
  %v102 = vmul.f32 %v31, %v88
  %v103 = vmul.f32 %v32, %v88
  %v104 = vmul.f32 %v33, %v88
  %v105 = vmul.f32 %v34, %v88
  %v106 = vmul.f32 %v35, %v88
  %v107 = vmul.f32 %v36, %v88
  %v108 = vmul.f32 %v37, %v88
  %v109 = vmul.f32 %v38, %v88
  %v110 = vmul.f32 %v39, %v88
  %v111 = vmul.f32 %v40, %v88
  %v112 = vmul.f32 %v41, %v88
  %v113 = vmul.f32 %v42, %v88
  %v114 = vmul.f32 %v43, %v88
  %v115 = vmul.f32 %v44, %v88
  %v116 = vmul.f32 %v45, %v88
  %v117 = vmul.f32 %v46, %v88
  %v118 = vmul.f32 %v47, %v88
  %v119 = vmul.f32 %v48, %v88
  %v120 = vmul.f32 %v49, %v88
  %v121 = vmul.f32 %v50, %v88
  %v122 = vmul.f32 %v51, %v88
  %v123 = vmul.f32 %v52, %v88
  %v124 = vmul.f32 %v53, %v88
  %v125 = vmul.f32 %v54, %v88
  %v126 = vmul.f32 %v55, %v88
  %v127 = vmul.f32 %v56, %v88
  %v128 = vmul.f32 %v57, %v88
  %v129 = vmul.f32 %v58, %v88
  %v130 = vmul.f32 %v59, %v88
  %v131 = vmul.f32 %v60, %v88
  %v132 = vmul.f32 %v61, %v88
  %v133 = vmul.f32 %v62, %v88
  %v134 = vmul.f32 %v63, %v88
  %v135 = vmul.f32 %v64, %v88
  %v136 = vmul.f32 %v65, %v88
  %v137 = vmul.f32 %v66, %v88
  %v138 = vmul.f32 %v67, %v88
  %v139 = vmul.f32 %v68, %v88
  %v140 = vmul.f32 %v69, %v88
  %v141 = vmul.f32 %v70, %v88
  %v142 = vmul.f32 %v71, %v88
  %v143 = vmul.f32 %v72, %v88
  %v144 = vmul.f32 %v73, %v88
  %v145 = vmul.f32 %v74, %v88
  %v146 = vmul.f32 %v75, %v88
  %v147 = vmul.f32 %v76, %v88
  %v148 = vmul.f32 %v77, %v88
  %v149 = vmul.f32 %v78, %v88
  %v150 = vmul.f32 %v79, %v88
  %v151 = vmul.f32 %v80, %v88
  %v152 = vmul.f32 %v81, %v88
  %v153 = vmul.f32 %v82, %v88
  %v154 = vld [vmem:[%s3] sm:$0x1]
  %v156 = vlaneseq
  %v157 = vshrl.u32 %v156, 7
  %v158 = vsub.s32 0, %v157
  %v159 = vrot.slane %v154, %v158
  %v161 = vadd.f32 %v90, %v159
  %v162 = vadd.f32 %v91, %v159
  %v163 = vadd.f32 %v92, %v159
  %v164 = vadd.f32 %v93, %v159
  %v165 = vadd.f32 %v94, %v159
  %v166 = vadd.f32 %v95, %v159
  %v167 = vadd.f32 %v96, %v159
  %v168 = vadd.f32 %v97, %v159
  %v169 = vadd.f32 %v98, %v159
  %v170 = vadd.f32 %v99, %v159
  %v171 = vadd.f32 %v100, %v159
  %v172 = vadd.f32 %v101, %v159
  %v173 = vadd.f32 %v102, %v159
  %v174 = vadd.f32 %v103, %v159
  %v175 = vadd.f32 %v104, %v159
  %v176 = vadd.f32 %v105, %v159
  %v177 = vadd.f32 %v106, %v159
  %v178 = vadd.f32 %v107, %v159
  %v179 = vadd.f32 %v108, %v159
  %v180 = vadd.f32 %v109, %v159
  %v181 = vadd.f32 %v110, %v159
  %v182 = vadd.f32 %v111, %v159
  %v183 = vadd.f32 %v112, %v159
  %v184 = vadd.f32 %v113, %v159
  %v185 = vadd.f32 %v114, %v159
  %v186 = vadd.f32 %v115, %v159
  %v187 = vadd.f32 %v116, %v159
  %v188 = vadd.f32 %v117, %v159
  %v189 = vadd.f32 %v118, %v159
  %v190 = vadd.f32 %v119, %v159
  %v191 = vadd.f32 %v120, %v159
  %v192 = vadd.f32 %v121, %v159
  %v193 = vadd.f32 %v122, %v159
  %v194 = vadd.f32 %v123, %v159
  %v195 = vadd.f32 %v124, %v159
  %v196 = vadd.f32 %v125, %v159
  %v197 = vadd.f32 %v126, %v159
  %v198 = vadd.f32 %v127, %v159
  %v199 = vadd.f32 %v128, %v159
  %v200 = vadd.f32 %v129, %v159
  %v201 = vadd.f32 %v130, %v159
  %v202 = vadd.f32 %v131, %v159
  %v203 = vadd.f32 %v132, %v159
  %v204 = vadd.f32 %v133, %v159
  %v205 = vadd.f32 %v134, %v159
  %v206 = vadd.f32 %v135, %v159
  %v207 = vadd.f32 %v136, %v159
  %v208 = vadd.f32 %v137, %v159
  %v209 = vadd.f32 %v138, %v159
  %v210 = vadd.f32 %v139, %v159
  %v211 = vadd.f32 %v140, %v159
  %v212 = vadd.f32 %v141, %v159
  %v213 = vadd.f32 %v142, %v159
  %v214 = vadd.f32 %v143, %v159
  %v215 = vadd.f32 %v144, %v159
  %v216 = vadd.f32 %v145, %v159
  %v217 = vadd.f32 %v146, %v159
  %v218 = vadd.f32 %v147, %v159
  %v219 = vadd.f32 %v148, %v159
  %v220 = vadd.f32 %v149, %v159
  %v221 = vadd.f32 %v150, %v159
  %v222 = vadd.f32 %v151, %v159
  %v223 = vadd.f32 %v152, %v159
  %v224 = vadd.f32 %v153, %v159
  %v225 = vmax.f32 %v161, 0.0
  %v226 = vmax.f32 %v162, 0.0
  %v227 = vmax.f32 %v163, 0.0
  %v228 = vmax.f32 %v164, 0.0
  %v229 = vmax.f32 %v165, 0.0
  %v230 = vmax.f32 %v166, 0.0
  %v231 = vmax.f32 %v167, 0.0
  %v232 = vmax.f32 %v168, 0.0
  %v233 = vmax.f32 %v169, 0.0
  %v234 = vmax.f32 %v170, 0.0
  %v235 = vmax.f32 %v171, 0.0
  %v236 = vmax.f32 %v172, 0.0
  %v237 = vmax.f32 %v173, 0.0
  %v238 = vmax.f32 %v174, 0.0
  %v239 = vmax.f32 %v175, 0.0
  %v240 = vmax.f32 %v176, 0.0
  %v241 = vmax.f32 %v177, 0.0
  %v242 = vmax.f32 %v178, 0.0
  %v243 = vmax.f32 %v179, 0.0
  %v244 = vmax.f32 %v180, 0.0
  %v245 = vmax.f32 %v181, 0.0
  %v246 = vmax.f32 %v182, 0.0
  %v247 = vmax.f32 %v183, 0.0
  %v248 = vmax.f32 %v184, 0.0
  %v249 = vmax.f32 %v185, 0.0
  %v250 = vmax.f32 %v186, 0.0
  %v251 = vmax.f32 %v187, 0.0
  %v252 = vmax.f32 %v188, 0.0
  %v253 = vmax.f32 %v189, 0.0
  %v254 = vmax.f32 %v190, 0.0
  %v255 = vmax.f32 %v191, 0.0
  %v256 = vmax.f32 %v192, 0.0
  %v257 = vmax.f32 %v193, 0.0
  %v258 = vmax.f32 %v194, 0.0
  %v259 = vmax.f32 %v195, 0.0
  %v260 = vmax.f32 %v196, 0.0
  %v261 = vmax.f32 %v197, 0.0
  %v262 = vmax.f32 %v198, 0.0
  %v263 = vmax.f32 %v199, 0.0
  %v264 = vmax.f32 %v200, 0.0
  %v265 = vmax.f32 %v201, 0.0
  %v266 = vmax.f32 %v202, 0.0
  %v267 = vmax.f32 %v203, 0.0
  %v268 = vmax.f32 %v204, 0.0
  %v269 = vmax.f32 %v205, 0.0
  %v270 = vmax.f32 %v206, 0.0
  %v271 = vmax.f32 %v207, 0.0
  %v272 = vmax.f32 %v208, 0.0
  %v273 = vmax.f32 %v209, 0.0
  %v274 = vmax.f32 %v210, 0.0
  %v275 = vmax.f32 %v211, 0.0
  %v276 = vmax.f32 %v212, 0.0
  %v277 = vmax.f32 %v213, 0.0
  %v278 = vmax.f32 %v214, 0.0
  %v279 = vmax.f32 %v215, 0.0
  %v280 = vmax.f32 %v216, 0.0
  %v281 = vmax.f32 %v217, 0.0
  %v282 = vmax.f32 %v218, 0.0
  %v283 = vmax.f32 %v219, 0.0
  %v284 = vmax.f32 %v220, 0.0
  %v285 = vmax.f32 %v221, 0.0
  %v286 = vmax.f32 %v222, 0.0
  %v287 = vmax.f32 %v223, 0.0
  %v288 = vmax.f32 %v224, 0.0
  %v289 = vld [vmem:[%s1] sm:$0xff]
  %v290 = vld [vmem:[%s1 + $0x8] sm:$0xff]
  %v291 = vld [vmem:[%s1 + $0x10] sm:$0xff]
  %v292 = vld [vmem:[%s1 + $0x18] sm:$0xff]
  %v293 = vld [vmem:[%s1 + $0x20] sm:$0xff]
  %v294 = vld [vmem:[%s1 + $0x28] sm:$0xff]
  %v295 = vld [vmem:[%s1 + $0x30] sm:$0xff]
  %v296 = vld [vmem:[%s1 + $0x38] sm:$0xff]
  %v297 = vld [vmem:[%s1 + $0x40] sm:$0xff]
  %v298 = vld [vmem:[%s1 + $0x48] sm:$0xff]
  %v299 = vld [vmem:[%s1 + $0x50] sm:$0xff]
  %v300 = vld [vmem:[%s1 + $0x58] sm:$0xff]
  %v301 = vld [vmem:[%s1 + $0x60] sm:$0xff]
  %v302 = vld [vmem:[%s1 + $0x68] sm:$0xff]
  %v303 = vld [vmem:[%s1 + $0x70] sm:$0xff]
  %v304 = vld [vmem:[%s1 + $0x78] sm:$0xff]
  %305 = vmatprep.subr.mxu0 0.0
  %306 = vmatpush1.msra.mxu0 %v289
  %307 = vmatprep.subr.mxu0 0.0
  %308 = vmatpush1.msra.mxu0 %v290
  %309 = vmatprep.subr.mxu0 0.0
  %310 = vmatpush1.msra.mxu0 %v291
  %311 = vmatprep.subr.mxu0 0.0
  %312 = vmatpush1.msra.mxu0 %v292
  %313 = vmatprep.subr.mxu0 0.0
  %314 = vmatpush1.msra.mxu0 %v293
  %315 = vmatprep.subr.mxu0 0.0
  %316 = vmatpush1.msra.mxu0 %v294
  %317 = vmatprep.subr.mxu0 0.0
  %318 = vmatpush1.msra.mxu0 %v295
  %319 = vmatprep.subr.mxu0 0.0
  %320 = vmatpush1.msra.mxu0 %v296
  %321 = vmatprep.subr.mxu0 0.0
  %322 = vmatpush1.msra.mxu0 %v297
  %323 = vmatprep.subr.mxu0 0.0
  %324 = vmatpush1.msra.mxu0 %v298
  %325 = vmatprep.subr.mxu0 0.0
  %326 = vmatpush1.msra.mxu0 %v299
  %327 = vmatprep.subr.mxu0 0.0
  %328 = vmatpush1.msra.mxu0 %v300
  %329 = vmatprep.subr.mxu0 0.0
  %330 = vmatpush1.msra.mxu0 %v301
  %331 = vmatprep.subr.mxu0 0.0
  %332 = vmatpush1.msra.mxu0 %v302
  %333 = vmatprep.subr.mxu0 0.0
  %334 = vmatpush1.msra.mxu0 %v303
  %335 = vmatprep.subr.mxu0 0.0
  %336 = vmatpush1.msra.mxu0 %v304
  %337 = vmatprep.subr.mxu0 0.0
  %338 = vmatpush1.msra.mxu0 0.0
  %339 = vmatprep.subr.mxu0 0.0
  %340 = vmatpush1.msra.mxu0 0.0
  %341 = vmatprep.subr.mxu0 0.0
  %342 = vmatpush1.msra.mxu0 0.0
  %343 = vmatprep.subr.mxu0 0.0
  %344 = vmatpush1.msra.mxu0 0.0
  %345 = vmatprep.subr.mxu0 0.0
  %346 = vmatpush1.msra.mxu0 0.0
  %347 = vmatprep.subr.mxu0 0.0
  %348 = vmatpush1.msra.mxu0 0.0
  %349 = vmatprep.subr.mxu0 0.0
  %350 = vmatpush1.msra.mxu0 0.0
  %351 = vmatprep.subr.mxu0 0.0
  %352 = vmatpush1.msra.mxu0 0.0
  %353 = vmatprep.subr.mxu0 0.0
  %354 = vmatpush1.msra.mxu0 0.0
  %355 = vmatprep.subr.mxu0 0.0
  %356 = vmatpush1.msra.mxu0 0.0
  %357 = vmatprep.subr.mxu0 0.0
  %358 = vmatpush1.msra.mxu0 0.0
  %359 = vmatprep.subr.mxu0 0.0
  %360 = vmatpush1.msra.mxu0 0.0
  %361 = vmatprep.subr.mxu0 0.0
  %362 = vmatpush1.msra.mxu0 0.0
  %363 = vmatprep.subr.mxu0 0.0
  %364 = vmatpush1.msra.mxu0 0.0
  %365 = vmatprep.subr.mxu0 0.0
  %366 = vmatpush1.msra.mxu0 0.0
  %367 = vmatprep.subr.mxu0 0.0
  %368 = vmatpush1.msra.mxu0 0.0
  %369 = vmatprep.mubr.f32.mxu0 0.0
  %370 = vmatmul.mubr.f32.gmra.mrb[0].mxu0 %v225
  %v371 = vpop.f32.mrb[0].mxu0
  %v372 = vadd.f32 0.0, %v371
  %v373 = vpop.f32.mrb[0].mxu0
  %374 = vmatprep.mubr.f32.mxu0 0.0
  %375 = vmatmul.mubr.f32.gmra.mrb[0].mxu0 %v226
  %v376 = vpop.f32.mrb[0].mxu0
  %v377 = vadd.f32 0.0, %v376
  %v378 = vpop.f32.mrb[0].mxu0
  %379 = vmatprep.mubr.f32.mxu0 0.0
  %380 = vmatmul.mubr.f32.gmra.mrb[0].mxu0 %v227
  %v381 = vpop.f32.mrb[0].mxu0
  %v382 = vadd.f32 0.0, %v381
  %v383 = vpop.f32.mrb[0].mxu0
  %384 = vmatprep.mubr.f32.mxu0 0.0
  %385 = vmatmul.mubr.f32.gmra.mrb[0].mxu0 %v228
  %v386 = vpop.f32.mrb[0].mxu0
  %v387 = vadd.f32 0.0, %v386
  %v388 = vpop.f32.mrb[0].mxu0
  %389 = vmatprep.mubr.f32.mxu0 0.0
  %390 = vmatmul.mubr.f32.gmra.mrb[0].mxu0 %v229
  %v391 = vpop.f32.mrb[0].mxu0
  %v392 = vadd.f32 0.0, %v391
  %v393 = vpop.f32.mrb[0].mxu0
  %394 = vmatprep.mubr.f32.mxu0 0.0
  %395 = vmatmul.mubr.f32.gmra.mrb[0].mxu0 %v230
  %v396 = vpop.f32.mrb[0].mxu0
  %v397 = vadd.f32 0.0, %v396
  %v398 = vpop.f32.mrb[0].mxu0
  %399 = vmatprep.mubr.f32.mxu0 0.0
  %400 = vmatmul.mubr.f32.gmra.mrb[0].mxu0 %v231
  %v401 = vpop.f32.mrb[0].mxu0
  %v402 = vadd.f32 0.0, %v401
  %v403 = vpop.f32.mrb[0].mxu0
  %404 = vmatprep.mubr.f32.mxu0 0.0
  %405 = vmatmul.mubr.f32.gmra.mrb[0].mxu0 %v232
  %v406 = vpop.f32.mrb[0].mxu0
  %v407 = vadd.f32 0.0, %v406
  %v408 = vpop.f32.mrb[0].mxu0
  %409 = vmatprep.mubr.f32.mxu0 0.0
  %410 = vmatmul.mubr.f32.gmra.mrb[0].mxu0 %v233
  %v411 = vpop.f32.mrb[0].mxu0
  %v412 = vadd.f32 0.0, %v411
  %v413 = vpop.f32.mrb[0].mxu0
  %414 = vmatprep.mubr.f32.mxu0 0.0
  %415 = vmatmul.mubr.f32.gmra.mrb[0].mxu0 %v234
  %v416 = vpop.f32.mrb[0].mxu0
  %v417 = vadd.f32 0.0, %v416
  %v418 = vpop.f32.mrb[0].mxu0
  %419 = vmatprep.mubr.f32.mxu0 0.0
  %420 = vmatmul.mubr.f32.gmra.mrb[0].mxu0 %v235
  %v421 = vpop.f32.mrb[0].mxu0
  %v422 = vadd.f32 0.0, %v421
  %v423 = vpop.f32.mrb[0].mxu0
  %424 = vmatprep.mubr.f32.mxu0 0.0
  %425 = vmatmul.mubr.f32.gmra.mrb[0].mxu0 %v236
  %v426 = vpop.f32.mrb[0].mxu0
  %v427 = vadd.f32 0.0, %v426
  %v428 = vpop.f32.mrb[0].mxu0
  %429 = vmatprep.mubr.f32.mxu0 0.0
  %430 = vmatmul.mubr.f32.gmra.mrb[0].mxu0 %v237
  %v431 = vpop.f32.mrb[0].mxu0
  %v432 = vadd.f32 0.0, %v431
  %v433 = vpop.f32.mrb[0].mxu0
  %434 = vmatprep.mubr.f32.mxu0 0.0
  %435 = vmatmul.mubr.f32.gmra.mrb[0].mxu0 %v238
  %v436 = vpop.f32.mrb[0].mxu0
  %v437 = vadd.f32 0.0, %v436
  %v438 = vpop.f32.mrb[0].mxu0
  %439 = vmatprep.mubr.f32.mxu0 0.0
  %440 = vmatmul.mubr.f32.gmra.mrb[0].mxu0 %v239
  %v441 = vpop.f32.mrb[0].mxu0
  %v442 = vadd.f32 0.0, %v441
  %v443 = vpop.f32.mrb[0].mxu0
  %444 = vmatprep.mubr.f32.mxu0 0.0
  %445 = vmatmul.mubr.f32.gmra.mrb[0].mxu0 %v240
  %v446 = vpop.f32.mrb[0].mxu0
  %v447 = vadd.f32 0.0, %v446
  %v448 = vpop.f32.mrb[0].mxu0
  %449 = vmatprep.mubr.f32.mxu0 0.0
  %450 = vmatmul.mubr.f32.gmra.mrb[0].mxu0 %v241
  %v451 = vpop.f32.mrb[0].mxu0
  %v452 = vadd.f32 0.0, %v451
  %v453 = vpop.f32.mrb[0].mxu0
  %454 = vmatprep.mubr.f32.mxu0 0.0
  %455 = vmatmul.mubr.f32.gmra.mrb[0].mxu0 %v242
  %v456 = vpop.f32.mrb[0].mxu0
  %v457 = vadd.f32 0.0, %v456
  %v458 = vpop.f32.mrb[0].mxu0
  %459 = vmatprep.mubr.f32.mxu0 0.0
  %460 = vmatmul.mubr.f32.gmra.mrb[0].mxu0 %v243
  %v461 = vpop.f32.mrb[0].mxu0
  %v462 = vadd.f32 0.0, %v461
  %v463 = vpop.f32.mrb[0].mxu0
  %464 = vmatprep.mubr.f32.mxu0 0.0
  %465 = vmatmul.mubr.f32.gmra.mrb[0].mxu0 %v244
  %v466 = vpop.f32.mrb[0].mxu0
  %v467 = vadd.f32 0.0, %v466
  %v468 = vpop.f32.mrb[0].mxu0
  %469 = vmatprep.mubr.f32.mxu0 0.0
  %470 = vmatmul.mubr.f32.gmra.mrb[0].mxu0 %v245
  %v471 = vpop.f32.mrb[0].mxu0
  %v472 = vadd.f32 0.0, %v471
  %v473 = vpop.f32.mrb[0].mxu0
  %474 = vmatprep.mubr.f32.mxu0 0.0
  %475 = vmatmul.mubr.f32.gmra.mrb[0].mxu0 %v246
  %v476 = vpop.f32.mrb[0].mxu0
  %v477 = vadd.f32 0.0, %v476
  %v478 = vpop.f32.mrb[0].mxu0
  %479 = vmatprep.mubr.f32.mxu0 0.0
  %480 = vmatmul.mubr.f32.gmra.mrb[0].mxu0 %v247
  %v481 = vpop.f32.mrb[0].mxu0
  %v482 = vadd.f32 0.0, %v481
  %v483 = vpop.f32.mrb[0].mxu0
  %484 = vmatprep.mubr.f32.mxu0 0.0
  %485 = vmatmul.mubr.f32.gmra.mrb[0].mxu0 %v248
  %v486 = vpop.f32.mrb[0].mxu0
  %v487 = vadd.f32 0.0, %v486
  %v488 = vpop.f32.mrb[0].mxu0
  %489 = vmatprep.mubr.f32.mxu0 0.0
  %490 = vmatmul.mubr.f32.gmra.mrb[0].mxu0 %v249
  %v491 = vpop.f32.mrb[0].mxu0
  %v492 = vadd.f32 0.0, %v491
  %v493 = vpop.f32.mrb[0].mxu0
  %494 = vmatprep.mubr.f32.mxu0 0.0
  %495 = vmatmul.mubr.f32.gmra.mrb[0].mxu0 %v250
  %v496 = vpop.f32.mrb[0].mxu0
  %v497 = vadd.f32 0.0, %v496
  %v498 = vpop.f32.mrb[0].mxu0
  %499 = vmatprep.mubr.f32.mxu0 0.0
  %500 = vmatmul.mubr.f32.gmra.mrb[0].mxu0 %v251
  %v501 = vpop.f32.mrb[0].mxu0
  %v502 = vadd.f32 0.0, %v501
  %v503 = vpop.f32.mrb[0].mxu0
  %504 = vmatprep.mubr.f32.mxu0 0.0
  %505 = vmatmul.mubr.f32.gmra.mrb[0].mxu0 %v252
  %v506 = vpop.f32.mrb[0].mxu0
  %v507 = vadd.f32 0.0, %v506
  %v508 = vpop.f32.mrb[0].mxu0
  %509 = vmatprep.mubr.f32.mxu0 0.0
  %510 = vmatmul.mubr.f32.gmra.mrb[0].mxu0 %v253
  %v511 = vpop.f32.mrb[0].mxu0
  %v512 = vadd.f32 0.0, %v511
  %v513 = vpop.f32.mrb[0].mxu0
  %514 = vmatprep.mubr.f32.mxu0 0.0
  %515 = vmatmul.mubr.f32.gmra.mrb[0].mxu0 %v254
  %v516 = vpop.f32.mrb[0].mxu0
  %v517 = vadd.f32 0.0, %v516
  %v518 = vpop.f32.mrb[0].mxu0
  %519 = vmatprep.mubr.f32.mxu0 0.0
  %520 = vmatmul.mubr.f32.gmra.mrb[0].mxu0 %v255
  %v521 = vpop.f32.mrb[0].mxu0
  %v522 = vadd.f32 0.0, %v521
  %v523 = vpop.f32.mrb[0].mxu0
  %524 = vmatprep.mubr.f32.mxu0 0.0
  %525 = vmatmul.mubr.f32.gmra.mrb[0].mxu0 %v256
  %v526 = vpop.f32.mrb[0].mxu0
  %v527 = vadd.f32 0.0, %v526
  %v528 = vpop.f32.mrb[0].mxu0
  %529 = vmatprep.mubr.f32.mxu0 0.0
  %530 = vmatmul.mubr.f32.gmra.mrb[0].mxu0 %v257
  %v531 = vpop.f32.mrb[0].mxu0
  %v532 = vadd.f32 0.0, %v531
  %v533 = vpop.f32.mrb[0].mxu0
  %534 = vmatprep.mubr.f32.mxu0 0.0
  %535 = vmatmul.mubr.f32.gmra.mrb[0].mxu0 %v258
  %v536 = vpop.f32.mrb[0].mxu0
  %v537 = vadd.f32 0.0, %v536
  %v538 = vpop.f32.mrb[0].mxu0
  %539 = vmatprep.mubr.f32.mxu0 0.0
  %540 = vmatmul.mubr.f32.gmra.mrb[0].mxu0 %v259
  %v541 = vpop.f32.mrb[0].mxu0
  %v542 = vadd.f32 0.0, %v541
  %v543 = vpop.f32.mrb[0].mxu0
  %544 = vmatprep.mubr.f32.mxu0 0.0
  %545 = vmatmul.mubr.f32.gmra.mrb[0].mxu0 %v260
  %v546 = vpop.f32.mrb[0].mxu0
  %v547 = vadd.f32 0.0, %v546
  %v548 = vpop.f32.mrb[0].mxu0
  %549 = vmatprep.mubr.f32.mxu0 0.0
  %550 = vmatmul.mubr.f32.gmra.mrb[0].mxu0 %v261
  %v551 = vpop.f32.mrb[0].mxu0
  %v552 = vadd.f32 0.0, %v551
  %v553 = vpop.f32.mrb[0].mxu0
  %554 = vmatprep.mubr.f32.mxu0 0.0
  %555 = vmatmul.mubr.f32.gmra.mrb[0].mxu0 %v262
  %v556 = vpop.f32.mrb[0].mxu0
  %v557 = vadd.f32 0.0, %v556
  %v558 = vpop.f32.mrb[0].mxu0
  %559 = vmatprep.mubr.f32.mxu0 0.0
  %560 = vmatmul.mubr.f32.gmra.mrb[0].mxu0 %v263
  %v561 = vpop.f32.mrb[0].mxu0
  %v562 = vadd.f32 0.0, %v561
  %v563 = vpop.f32.mrb[0].mxu0
  %564 = vmatprep.mubr.f32.mxu0 0.0
  %565 = vmatmul.mubr.f32.gmra.mrb[0].mxu0 %v264
  %v566 = vpop.f32.mrb[0].mxu0
  %v567 = vadd.f32 0.0, %v566
  %v568 = vpop.f32.mrb[0].mxu0
  %569 = vmatprep.mubr.f32.mxu0 0.0
  %570 = vmatmul.mubr.f32.gmra.mrb[0].mxu0 %v265
  %v571 = vpop.f32.mrb[0].mxu0
  %v572 = vadd.f32 0.0, %v571
  %v573 = vpop.f32.mrb[0].mxu0
  %574 = vmatprep.mubr.f32.mxu0 0.0
  %575 = vmatmul.mubr.f32.gmra.mrb[0].mxu0 %v266
  %v576 = vpop.f32.mrb[0].mxu0
  %v577 = vadd.f32 0.0, %v576
  %v578 = vpop.f32.mrb[0].mxu0
  %579 = vmatprep.mubr.f32.mxu0 0.0
  %580 = vmatmul.mubr.f32.gmra.mrb[0].mxu0 %v267
  %v581 = vpop.f32.mrb[0].mxu0
  %v582 = vadd.f32 0.0, %v581
  %v583 = vpop.f32.mrb[0].mxu0
  %584 = vmatprep.mubr.f32.mxu0 0.0
  %585 = vmatmul.mubr.f32.gmra.mrb[0].mxu0 %v268
  %v586 = vpop.f32.mrb[0].mxu0
  %v587 = vadd.f32 0.0, %v586
  %v588 = vpop.f32.mrb[0].mxu0
  %589 = vmatprep.mubr.f32.mxu0 0.0
  %590 = vmatmul.mubr.f32.gmra.mrb[0].mxu0 %v269
  %v591 = vpop.f32.mrb[0].mxu0
  %v592 = vadd.f32 0.0, %v591
  %v593 = vpop.f32.mrb[0].mxu0
  %594 = vmatprep.mubr.f32.mxu0 0.0
  %595 = vmatmul.mubr.f32.gmra.mrb[0].mxu0 %v270
  %v596 = vpop.f32.mrb[0].mxu0
  %v597 = vadd.f32 0.0, %v596
  %v598 = vpop.f32.mrb[0].mxu0
  %599 = vmatprep.mubr.f32.mxu0 0.0
  %600 = vmatmul.mubr.f32.gmra.mrb[0].mxu0 %v271
  %v601 = vpop.f32.mrb[0].mxu0
  %v602 = vadd.f32 0.0, %v601
  %v603 = vpop.f32.mrb[0].mxu0
  %604 = vmatprep.mubr.f32.mxu0 0.0
  %605 = vmatmul.mubr.f32.gmra.mrb[0].mxu0 %v272
  %v606 = vpop.f32.mrb[0].mxu0
  %v607 = vadd.f32 0.0, %v606
  %v608 = vpop.f32.mrb[0].mxu0
  %609 = vmatprep.mubr.f32.mxu0 0.0
  %610 = vmatmul.mubr.f32.gmra.mrb[0].mxu0 %v273
  %v611 = vpop.f32.mrb[0].mxu0
  %v612 = vadd.f32 0.0, %v611
  %v613 = vpop.f32.mrb[0].mxu0
  %614 = vmatprep.mubr.f32.mxu0 0.0
  %615 = vmatmul.mubr.f32.gmra.mrb[0].mxu0 %v274
  %v616 = vpop.f32.mrb[0].mxu0
  %v617 = vadd.f32 0.0, %v616
  %v618 = vpop.f32.mrb[0].mxu0
  %619 = vmatprep.mubr.f32.mxu0 0.0
  %620 = vmatmul.mubr.f32.gmra.mrb[0].mxu0 %v275
  %v621 = vpop.f32.mrb[0].mxu0
  %v622 = vadd.f32 0.0, %v621
  %v623 = vpop.f32.mrb[0].mxu0
  %624 = vmatprep.mubr.f32.mxu0 0.0
  %625 = vmatmul.mubr.f32.gmra.mrb[0].mxu0 %v276
  %v626 = vpop.f32.mrb[0].mxu0
  %v627 = vadd.f32 0.0, %v626
  %v628 = vpop.f32.mrb[0].mxu0
  %629 = vmatprep.mubr.f32.mxu0 0.0
  %630 = vmatmul.mubr.f32.gmra.mrb[0].mxu0 %v277
  %v631 = vpop.f32.mrb[0].mxu0
  %v632 = vadd.f32 0.0, %v631
  %v633 = vpop.f32.mrb[0].mxu0
  %634 = vmatprep.mubr.f32.mxu0 0.0
  %635 = vmatmul.mubr.f32.gmra.mrb[0].mxu0 %v278
  %v636 = vpop.f32.mrb[0].mxu0
  %v637 = vadd.f32 0.0, %v636
  %v638 = vpop.f32.mrb[0].mxu0
  %639 = vmatprep.mubr.f32.mxu0 0.0
  %640 = vmatmul.mubr.f32.gmra.mrb[0].mxu0 %v279
  %v641 = vpop.f32.mrb[0].mxu0
  %v642 = vadd.f32 0.0, %v641
  %v643 = vpop.f32.mrb[0].mxu0
  %644 = vmatprep.mubr.f32.mxu0 0.0
  %645 = vmatmul.mubr.f32.gmra.mrb[0].mxu0 %v280
  %v646 = vpop.f32.mrb[0].mxu0
  %v647 = vadd.f32 0.0, %v646
  %v648 = vpop.f32.mrb[0].mxu0
  %649 = vmatprep.mubr.f32.mxu0 0.0
  %650 = vmatmul.mubr.f32.gmra.mrb[0].mxu0 %v281
  %v651 = vpop.f32.mrb[0].mxu0
  %v652 = vadd.f32 0.0, %v651
  %v653 = vpop.f32.mrb[0].mxu0
  %654 = vmatprep.mubr.f32.mxu0 0.0
  %655 = vmatmul.mubr.f32.gmra.mrb[0].mxu0 %v282
  %v656 = vpop.f32.mrb[0].mxu0
  %v657 = vadd.f32 0.0, %v656
  %v658 = vpop.f32.mrb[0].mxu0
  %659 = vmatprep.mubr.f32.mxu0 0.0
  %660 = vmatmul.mubr.f32.gmra.mrb[0].mxu0 %v283
  %v661 = vpop.f32.mrb[0].mxu0
  %v662 = vadd.f32 0.0, %v661
  %v663 = vpop.f32.mrb[0].mxu0
  %664 = vmatprep.mubr.f32.mxu0 0.0
  %665 = vmatmul.mubr.f32.gmra.mrb[0].mxu0 %v284
  %v666 = vpop.f32.mrb[0].mxu0
  %v667 = vadd.f32 0.0, %v666
  %v668 = vpop.f32.mrb[0].mxu0
  %669 = vmatprep.mubr.f32.mxu0 0.0
  %670 = vmatmul.mubr.f32.gmra.mrb[0].mxu0 %v285
  %v671 = vpop.f32.mrb[0].mxu0
  %v672 = vadd.f32 0.0, %v671
  %v673 = vpop.f32.mrb[0].mxu0
  %674 = vmatprep.mubr.f32.mxu0 0.0
  %675 = vmatmul.mubr.f32.gmra.mrb[0].mxu0 %v286
  %v676 = vpop.f32.mrb[0].mxu0
  %v677 = vadd.f32 0.0, %v676
  %v678 = vpop.f32.mrb[0].mxu0
  %679 = vmatprep.mubr.f32.mxu0 0.0
  %680 = vmatmul.mubr.f32.gmra.mrb[0].mxu0 %v287
  %v681 = vpop.f32.mrb[0].mxu0
  %v682 = vadd.f32 0.0, %v681
  %v683 = vpop.f32.mrb[0].mxu0
  %684 = vmatprep.mubr.f32.mxu0 0.0
  %685 = vmatmul.mubr.f32.gmra.mrb[0].mxu0 %v288
  %v686 = vpop.f32.mrb[0].mxu0
  %v687 = vadd.f32 0.0, %v686
  %v688 = vpop.f32.mrb[0].mxu0
  %689 = vdwg.mxu0
  %690 = vst [vmem:[%s4] sm:$0xff] %v372
  %691 = vst [vmem:[%s4 + $0x8] sm:$0xff] %v377
  %692 = vst [vmem:[%s4 + $0x10] sm:$0xff] %v382
  %693 = vst [vmem:[%s4 + $0x18] sm:$0xff] %v387
  %694 = vst [vmem:[%s4 + $0x20] sm:$0xff] %v392
  %695 = vst [vmem:[%s4 + $0x28] sm:$0xff] %v397
  %696 = vst [vmem:[%s4 + $0x30] sm:$0xff] %v402
  %697 = vst [vmem:[%s4 + $0x38] sm:$0xff] %v407
  %698 = vst [vmem:[%s4 + $0x40] sm:$0xff] %v412
  %699 = vst [vmem:[%s4 + $0x48] sm:$0xff] %v417
  %700 = vst [vmem:[%s4 + $0x50] sm:$0xff] %v422
  %701 = vst [vmem:[%s4 + $0x58] sm:$0xff] %v427
  %702 = vst [vmem:[%s4 + $0x60] sm:$0xff] %v432
  %703 = vst [vmem:[%s4 + $0x68] sm:$0xff] %v437
  %704 = vst [vmem:[%s4 + $0x70] sm:$0xff] %v442
  %705 = vst [vmem:[%s4 + $0x78] sm:$0xff] %v447
  %706 = vst [vmem:[%s4 + $0x80] sm:$0xff] %v452
  %707 = vst [vmem:[%s4 + $0x88] sm:$0xff] %v457
  %708 = vst [vmem:[%s4 + $0x90] sm:$0xff] %v462
  %709 = vst [vmem:[%s4 + $0x98] sm:$0xff] %v467
  %710 = vst [vmem:[%s4 + $0xa0] sm:$0xff] %v472
  %711 = vst [vmem:[%s4 + $0xa8] sm:$0xff] %v477
  %712 = vst [vmem:[%s4 + $0xb0] sm:$0xff] %v482
  %713 = vst [vmem:[%s4 + $0xb8] sm:$0xff] %v487
  %714 = vst [vmem:[%s4 + $0xc0] sm:$0xff] %v492
  %715 = vst [vmem:[%s4 + $0xc8] sm:$0xff] %v497
  %716 = vst [vmem:[%s4 + $0xd0] sm:$0xff] %v502
  %717 = vst [vmem:[%s4 + $0xd8] sm:$0xff] %v507
  %718 = vst [vmem:[%s4 + $0xe0] sm:$0xff] %v512
  %719 = vst [vmem:[%s4 + $0xe8] sm:$0xff] %v517
  %720 = vst [vmem:[%s4 + $0xf0] sm:$0xff] %v522
  %721 = vst [vmem:[%s4 + $0xf8] sm:$0xff] %v527
  %722 = vst [vmem:[%s4 + $0x100] sm:$0xff] %v532
  %723 = vst [vmem:[%s4 + $0x108] sm:$0xff] %v537
  %724 = vst [vmem:[%s4 + $0x110] sm:$0xff] %v542
  %725 = vst [vmem:[%s4 + $0x118] sm:$0xff] %v547
  %726 = vst [vmem:[%s4 + $0x120] sm:$0xff] %v552
  %727 = vst [vmem:[%s4 + $0x128] sm:$0xff] %v557
  %728 = vst [vmem:[%s4 + $0x130] sm:$0xff] %v562
  %729 = vst [vmem:[%s4 + $0x138] sm:$0xff] %v567
  %730 = vst [vmem:[%s4 + $0x140] sm:$0xff] %v572
  %731 = vst [vmem:[%s4 + $0x148] sm:$0xff] %v577
  %732 = vst [vmem:[%s4 + $0x150] sm:$0xff] %v582
  %733 = vst [vmem:[%s4 + $0x158] sm:$0xff] %v587
  %734 = vst [vmem:[%s4 + $0x160] sm:$0xff] %v592
  %735 = vst [vmem:[%s4 + $0x168] sm:$0xff] %v597
  %736 = vst [vmem:[%s4 + $0x170] sm:$0xff] %v602
  %737 = vst [vmem:[%s4 + $0x178] sm:$0xff] %v607
  %738 = vst [vmem:[%s4 + $0x180] sm:$0xff] %v612
  %739 = vst [vmem:[%s4 + $0x188] sm:$0xff] %v617
  %740 = vst [vmem:[%s4 + $0x190] sm:$0xff] %v622
  %741 = vst [vmem:[%s4 + $0x198] sm:$0xff] %v627
  %742 = vst [vmem:[%s4 + $0x1a0] sm:$0xff] %v632
  %743 = vst [vmem:[%s4 + $0x1a8] sm:$0xff] %v637
  %744 = vst [vmem:[%s4 + $0x1b0] sm:$0xff] %v642
  %745 = vst [vmem:[%s4 + $0x1b8] sm:$0xff] %v647
  %746 = vst [vmem:[%s4 + $0x1c0] sm:$0xff] %v652
  %747 = vst [vmem:[%s4 + $0x1c8] sm:$0xff] %v657
  %748 = vst [vmem:[%s4 + $0x1d0] sm:$0xff] %v662
  %749 = vst [vmem:[%s4 + $0x1d8] sm:$0xff] %v667
  %750 = vst [vmem:[%s4 + $0x1e0] sm:$0xff] %v672
  %751 = vst [vmem:[%s4 + $0x1e8] sm:$0xff] %v677
  %752 = vst [vmem:[%s4 + $0x1f0] sm:$0xff] %v682
  %753 = vst [vmem:[%s4 + $0x1f8] sm:$0xff] %v687
  %v754 = vadd.f32 %v372, %v377
  %v755 = vadd.f32 %v754, %v382
  %v756 = vadd.f32 %v755, %v387
  %v757 = vadd.f32 %v756, %v392
  %v758 = vadd.f32 %v757, %v397
  %v759 = vadd.f32 %v758, %v402
  %v760 = vadd.f32 %v759, %v407
  %v761 = vadd.f32 %v760, %v412
  %v762 = vadd.f32 %v761, %v417
  %v763 = vadd.f32 %v762, %v422
  %v764 = vadd.f32 %v763, %v427
  %v765 = vadd.f32 %v764, %v432
  %v766 = vadd.f32 %v765, %v437
  %v767 = vadd.f32 %v766, %v442
  %v768 = vadd.f32 %v767, %v447
  %v769 = vadd.f32 %v768, %v452
  %v770 = vadd.f32 %v769, %v457
  %v771 = vadd.f32 %v770, %v462
  %v772 = vadd.f32 %v771, %v467
  %v773 = vadd.f32 %v772, %v472
  %v774 = vadd.f32 %v773, %v477
  %v775 = vadd.f32 %v774, %v482
  %v776 = vadd.f32 %v775, %v487
  %v777 = vadd.f32 %v776, %v492
  %v778 = vadd.f32 %v777, %v497
  %v779 = vadd.f32 %v778, %v502
  %v780 = vadd.f32 %v779, %v507
  %v781 = vadd.f32 %v780, %v512
  %v782 = vadd.f32 %v781, %v517
  %v783 = vadd.f32 %v782, %v522
  %v784 = vadd.f32 %v783, %v527
  %v785 = vadd.f32 %v784, %v532
  %v786 = vadd.f32 %v785, %v537
  %v787 = vadd.f32 %v786, %v542
  %v788 = vadd.f32 %v787, %v547
  %v789 = vadd.f32 %v788, %v552
  %v790 = vadd.f32 %v789, %v557
  %v791 = vadd.f32 %v790, %v562
  %v792 = vadd.f32 %v791, %v567
  %v793 = vadd.f32 %v792, %v572
  %v794 = vadd.f32 %v793, %v577
  %v795 = vadd.f32 %v794, %v582
  %v796 = vadd.f32 %v795, %v587
  %v797 = vadd.f32 %v796, %v592
  %v798 = vadd.f32 %v797, %v597
  %v799 = vadd.f32 %v798, %v602
  %v800 = vadd.f32 %v799, %v607
  %v801 = vadd.f32 %v800, %v612
  %v802 = vadd.f32 %v801, %v617
  %v803 = vadd.f32 %v802, %v622
  %v804 = vadd.f32 %v803, %v627
  %v805 = vadd.f32 %v804, %v632
  %v806 = vadd.f32 %v805, %v637
  %v807 = vadd.f32 %v806, %v642
  %v808 = vadd.f32 %v807, %v647
  %v809 = vadd.f32 %v808, %v652
  %v810 = vadd.f32 %v809, %v657
  %v811 = vadd.f32 %v810, %v662
  %v812 = vadd.f32 %v811, %v667
  %v813 = vadd.f32 %v812, %v672
  %v814 = vadd.f32 %v813, %v677
  %v815 = vadd.f32 %v814, %v682
  %v816 = vadd.f32 %v815, %v687
  %v817 = vrot.slane %v816, 4
  %v818 = vadd.f32 %v816, %v817
  %v819 = vrot.slane %v818, 2
  %v820 = vadd.f32 %v818, %v819
  %v821 = vrot.slane %v820, 1
  %v822 = vadd.f32 %v820, %v821
  %823 = vst [vmem:[%s5] sm:$0x1] %v822
  %v824 = vmul.f32 %v372, %v372
  %v825 = vmul.f32 %v377, %v377
  %v826 = vmul.f32 %v382, %v382
  %v827 = vmul.f32 %v387, %v387
  %v828 = vmul.f32 %v392, %v392
  %v829 = vmul.f32 %v397, %v397
  %v830 = vmul.f32 %v402, %v402
  %v831 = vmul.f32 %v407, %v407
  %v832 = vmul.f32 %v412, %v412
  %v833 = vmul.f32 %v417, %v417
  %v834 = vmul.f32 %v422, %v422
  %v835 = vmul.f32 %v427, %v427
  %v836 = vmul.f32 %v432, %v432
  %v837 = vmul.f32 %v437, %v437
  %v838 = vmul.f32 %v442, %v442
  %v839 = vmul.f32 %v447, %v447
  %v840 = vmul.f32 %v452, %v452
  %v841 = vmul.f32 %v457, %v457
  %v842 = vmul.f32 %v462, %v462
  %v843 = vmul.f32 %v467, %v467
  %v844 = vmul.f32 %v472, %v472
  %v845 = vmul.f32 %v477, %v477
  %v846 = vmul.f32 %v482, %v482
  %v847 = vmul.f32 %v487, %v487
  %v848 = vmul.f32 %v492, %v492
  %v849 = vmul.f32 %v497, %v497
  %v850 = vmul.f32 %v502, %v502
  %v851 = vmul.f32 %v507, %v507
  %v852 = vmul.f32 %v512, %v512
  %v853 = vmul.f32 %v517, %v517
  %v854 = vmul.f32 %v522, %v522
  %v855 = vmul.f32 %v527, %v527
  %v856 = vmul.f32 %v532, %v532
  %v857 = vmul.f32 %v537, %v537
  %v858 = vmul.f32 %v542, %v542
  %v859 = vmul.f32 %v547, %v547
  %v860 = vmul.f32 %v552, %v552
  %v861 = vmul.f32 %v557, %v557
  %v862 = vmul.f32 %v562, %v562
  %v863 = vmul.f32 %v567, %v567
  %v864 = vmul.f32 %v572, %v572
  %v865 = vmul.f32 %v577, %v577
  %v866 = vmul.f32 %v582, %v582
  %v867 = vmul.f32 %v587, %v587
  %v868 = vmul.f32 %v592, %v592
  %v869 = vmul.f32 %v597, %v597
  %v870 = vmul.f32 %v602, %v602
  %v871 = vmul.f32 %v607, %v607
  %v872 = vmul.f32 %v612, %v612
  %v873 = vmul.f32 %v617, %v617
  %v874 = vmul.f32 %v622, %v622
  %v875 = vmul.f32 %v627, %v627
  %v876 = vmul.f32 %v632, %v632
  %v877 = vmul.f32 %v637, %v637
  %v878 = vmul.f32 %v642, %v642
  %v879 = vmul.f32 %v647, %v647
  %v880 = vmul.f32 %v652, %v652
  %v881 = vmul.f32 %v657, %v657
  %v882 = vmul.f32 %v662, %v662
  %v883 = vmul.f32 %v667, %v667
  %v884 = vmul.f32 %v672, %v672
  %v885 = vmul.f32 %v677, %v677
  %v886 = vmul.f32 %v682, %v682
  %v887 = vmul.f32 %v687, %v687
  %v888 = vadd.f32 %v824, %v825
  %v889 = vadd.f32 %v888, %v826
  %v890 = vadd.f32 %v889, %v827
  %v891 = vadd.f32 %v890, %v828
  %v892 = vadd.f32 %v891, %v829
  %v893 = vadd.f32 %v892, %v830
  %v894 = vadd.f32 %v893, %v831
  %v895 = vadd.f32 %v894, %v832
  %v896 = vadd.f32 %v895, %v833
  %v897 = vadd.f32 %v896, %v834
  %v898 = vadd.f32 %v897, %v835
  %v899 = vadd.f32 %v898, %v836
  %v900 = vadd.f32 %v899, %v837
  %v901 = vadd.f32 %v900, %v838
  %v902 = vadd.f32 %v901, %v839
  %v903 = vadd.f32 %v902, %v840
  %v904 = vadd.f32 %v903, %v841
  %v905 = vadd.f32 %v904, %v842
  %v906 = vadd.f32 %v905, %v843
  %v907 = vadd.f32 %v906, %v844
  %v908 = vadd.f32 %v907, %v845
  %v909 = vadd.f32 %v908, %v846
  %v910 = vadd.f32 %v909, %v847
  %v911 = vadd.f32 %v910, %v848
  %v912 = vadd.f32 %v911, %v849
  %v913 = vadd.f32 %v912, %v850
  %v914 = vadd.f32 %v913, %v851
  %v915 = vadd.f32 %v914, %v852
  %v916 = vadd.f32 %v915, %v853
  %v917 = vadd.f32 %v916, %v854
  %v918 = vadd.f32 %v917, %v855
  %v919 = vadd.f32 %v918, %v856
  %v920 = vadd.f32 %v919, %v857
  %v921 = vadd.f32 %v920, %v858
  %v922 = vadd.f32 %v921, %v859
  %v923 = vadd.f32 %v922, %v860
  %v924 = vadd.f32 %v923, %v861
  %v925 = vadd.f32 %v924, %v862
  %v926 = vadd.f32 %v925, %v863
  %v927 = vadd.f32 %v926, %v864
  %v928 = vadd.f32 %v927, %v865
  %v929 = vadd.f32 %v928, %v866
  %v930 = vadd.f32 %v929, %v867
  %v931 = vadd.f32 %v930, %v868
  %v932 = vadd.f32 %v931, %v869
  %v933 = vadd.f32 %v932, %v870
  %v934 = vadd.f32 %v933, %v871
  %v935 = vadd.f32 %v934, %v872
  %v936 = vadd.f32 %v935, %v873
  %v937 = vadd.f32 %v936, %v874
  %v938 = vadd.f32 %v937, %v875
  %v939 = vadd.f32 %v938, %v876
  %v940 = vadd.f32 %v939, %v877
  %v941 = vadd.f32 %v940, %v878
  %v942 = vadd.f32 %v941, %v879
  %v943 = vadd.f32 %v942, %v880
  %v944 = vadd.f32 %v943, %v881
  %v945 = vadd.f32 %v944, %v882
  %v946 = vadd.f32 %v945, %v883
  %v947 = vadd.f32 %v946, %v884
  %v948 = vadd.f32 %v947, %v885
  %v949 = vadd.f32 %v948, %v886
  %v950 = vadd.f32 %v949, %v887
  %v951 = vrot.slane %v950, 4
  %v952 = vadd.f32 %v950, %v951
  %v953 = vrot.slane %v952, 2
  %v954 = vadd.f32 %v952, %v953
  %v955 = vrot.slane %v954, 1
  %v956 = vadd.f32 %v954, %v955
  %957 = vst [vmem:[%s5 + $0x1] sm:$0x1] %v956
  // Predicated region
  $region18: #{_bottleneck_forward.6} parent=0 // pred_check
    _
  $region19: #{_bottleneck_forward.6} parent=0 // pred_check_branch
    %959 = sbr.rel (0) target = $region21
  $region20: #{_bottleneck_forward.6} parent=0 // pred_region
    _
  $region21: #{_bottleneck_forward.6} parent=0 // pred_fallthru
    _
  // Predicated region
  $region22: #{_bottleneck_forward.6} parent=0 // pred_check
    _
  $region23: #{_bottleneck_forward.6} parent=0 // pred_check_branch
    %961 = sbr.rel (0) target = $region25
  $region24: #{_bottleneck_forward.6} parent=0 // pred_region
    _
  $region25: #{_bottleneck_forward.6} parent=0 // pred_fallthru
    _
  // Predicated region
  $region26: #{_bottleneck_forward.6} parent=0 // pred_check
    _
  $region27: #{_bottleneck_forward.6} parent=0 // pred_check_branch
    %963 = sbr.rel (0) target = $region29
  $region28: #{_bottleneck_forward.6} parent=0 // pred_region
    _
  $region29: #{_bottleneck_forward.6} parent=0 // pred_fallthru
    _
  // Predicated region
  $region30: #{_bottleneck_forward.6} parent=0 // pred_check
    _
  $region31: #{_bottleneck_forward.6} parent=0 // pred_check_branch
    %965 = sbr.rel (0) target = $region33
  $region32: #{_bottleneck_forward.6} parent=0 // pred_region
    _
  $region33: #{_bottleneck_forward.6} parent=0 // pred_fallthru
    _

// kernel: _bottleneck_forward.5
$region0: #{_bottleneck_forward.5}
  #allocation0 [shape = 'u32[]', space=smem, size = 0x4, offset = 0x4, fixed_abs, tag = 'smem constant byte address 0x4 - core index']
  #allocation1 [shape = 'u32[144,128]{1,0:T(1,128)}', space=vmem, size = 0x12000, scoped, tag = 'internal scratch']
  #allocation2 [shape = 'f32[18,18,128]{2,1,0:T(8,128)}', space=vmem, size = 0x36000, scoped, tag = 'scratch operand']
  %s0 = inlined_call_operand.vmem [shape: f32[2,16,16,128], index: 0, kind: input, shape index: {}]
  %s1 = inlined_call_operand.vmem [shape: f32[1152,128], index: 1, kind: input, shape index: {}]
  %s2 = inlined_call_operand.vmem [shape: f32[1,128], index: 2, kind: input, shape index: {}]
  %s3 = inlined_call_operand.vmem [shape: f32[1,128], index: 3, kind: input, shape index: {}]
  %s4 = inlined_call_operand.vmem [shape: f32[2,16,16,128], index: 4, kind: output, shape index: {0}]
  %s5 = inlined_call_operand.vmem [shape: f32[2,2,128], index: 5, kind: output, shape index: {1}]
  %6 = xla_tuple %s4, %s5
  %s7 = sld [smem:[#allocation0]]
  $region57: #{_bottleneck_forward.5} parent=0
    _
  %s9 = ssub.s32 1, %s7
  %s10 = scalar_select 0, %s9, %s7
  loop: start=0, step=1, limit=4
  $region2: #{_bottleneck_forward.5} parent=0 // loop_pre_header
    _
  $region3: #{_bottleneck_forward.5} parent=0 // loop_header
    %s12 = sphi 0, %s16
    %p13 = scmp.ge.s32.totalorder %s12, 4
    %s22 = sphi 0, %s24
    %s25 = sphi 0, %s22
    %s26 = sphi 0, %s25
    %s42 = sphi 0, %s26
    %s46 = sphi 0, %s46
    %s48 = sphi 0, %s46
    %s49 = sphi 0, %s48
    %s63 = sphi 0, %s49
    %s67 = sphi 0, %s67
    %s69 = sphi 0, %s67
    %s70 = sphi 0, %s69
    %s84 = sphi 0, %s70
    %s88 = sphi 0, %s88
    %s90 = sphi 0, %s88
    %s91 = sphi 0, %s90
    %s105 = sphi 0, %s91
    %s111 = sphi 0, %s113
    %s114 = sphi 0, %s111
    %s115 = sphi 0, %s114
    %s131 = sphi 0, %s115
    %s137 = sphi 0, %s139
    %s140 = sphi 0, %s137
    %s141 = sphi 0, %s140
    %s157 = sphi 0, %s141
  $region4: #{_bottleneck_forward.5} parent=0 // loop_header_branch
    %15 = sbr.rel (%p13) target = $region8
  $region5: #{_bottleneck_forward.5} parent=0 // loop_body
    %s17 = ssub.s32 %s12, 1
    %s18 = ssub.s32 %s12, 2
    %s19 = sadd.s32 %s12, 1
    %s20 = ssub.s32 %s12, %s19
    %p21 = scmp.eq.s32.totalorder %s20, 0
    %s23 = sadd.s32 %s22, 1
    %s24 = scalar_select %p21, %s22, %s23
    %p27 = pneg %p21
    %p28 = scmp.eq.s32.totalorder %s12, 1
    %p29 = por %p27, %p28
    %p30 = scmp.ne.s32.totalorder %s22, %s25
    %p31 = scmp.eq.s32.totalorder %s12, 0
    %p32 = por %p30, %p31
    %p33 = scmp.ne.s32.totalorder %s22, %s25
    %p34 = scmp.eq.s32.totalorder %s17, 1
    %p35 = por %p33, %p34
    %p36 = scmp.ne.s32.totalorder %s25, %s26
    %p37 = scmp.eq.s32.totalorder %s17, 0
    %p38 = por %p36, %p37
    %p39 = scmp.ne.s32.totalorder %s25, %s26
    %p40 = scmp.eq.s32.totalorder %s18, 1
    %p41 = por %p39, %p40
    %p43 = scmp.ne.s32.totalorder %s26, %s42
    %p44 = scmp.eq.s32.totalorder %s18, 0
    %p45 = por %p43, %p44
    %s47 = sadd.s32 %s46, 1
    %p50 = scmp.eq.s32.totalorder %s12, 1
    %p51 = scmp.ne.s32.totalorder %s46, %s48
    %p52 = scmp.eq.s32.totalorder %s12, 0
    %p53 = por %p51, %p52
    %p54 = scmp.ne.s32.totalorder %s46, %s48
    %p55 = scmp.eq.s32.totalorder %s17, 1
    %p56 = por %p54, %p55
    %p57 = scmp.ne.s32.totalorder %s48, %s49
    %p58 = scmp.eq.s32.totalorder %s17, 0
    %p59 = por %p57, %p58
    %p60 = scmp.ne.s32.totalorder %s48, %s49
    %p61 = scmp.eq.s32.totalorder %s18, 1
    %p62 = por %p60, %p61
    %p64 = scmp.ne.s32.totalorder %s49, %s63
    %p65 = scmp.eq.s32.totalorder %s18, 0
    %p66 = por %p64, %p65
    %s68 = sadd.s32 %s67, 1
    %p71 = scmp.eq.s32.totalorder %s12, 1
    %p72 = scmp.ne.s32.totalorder %s67, %s69
    %p73 = scmp.eq.s32.totalorder %s12, 0
    %p74 = por %p72, %p73
    %p75 = scmp.ne.s32.totalorder %s67, %s69
    %p76 = scmp.eq.s32.totalorder %s17, 1
    %p77 = por %p75, %p76
    %p78 = scmp.ne.s32.totalorder %s69, %s70
    %p79 = scmp.eq.s32.totalorder %s17, 0
    %p80 = por %p78, %p79
    %p81 = scmp.ne.s32.totalorder %s69, %s70
    %p82 = scmp.eq.s32.totalorder %s18, 1
    %p83 = por %p81, %p82
    %p85 = scmp.ne.s32.totalorder %s70, %s84
    %p86 = scmp.eq.s32.totalorder %s18, 0
    %p87 = por %p85, %p86
    %s89 = sadd.s32 %s88, 1
    %p92 = scmp.eq.s32.totalorder %s12, 1
    %p93 = scmp.ne.s32.totalorder %s88, %s90
    %p94 = scmp.eq.s32.totalorder %s12, 0
    %p95 = por %p93, %p94
    %p96 = scmp.ne.s32.totalorder %s88, %s90
    %p97 = scmp.eq.s32.totalorder %s17, 1
    %p98 = por %p96, %p97
    %p99 = scmp.ne.s32.totalorder %s90, %s91
    %p100 = scmp.eq.s32.totalorder %s17, 0
    %p101 = por %p99, %p100
    %p102 = scmp.ne.s32.totalorder %s90, %s91
    %p103 = scmp.eq.s32.totalorder %s18, 1
    %p104 = por %p102, %p103
    %p106 = scmp.ne.s32.totalorder %s91, %s105
    %p107 = scmp.eq.s32.totalorder %s18, 0
    %p108 = por %p106, %p107
    %s109 = ssub.s32 %s12, %s19
    %p110 = scmp.eq.s32.totalorder %s109, 0
    %s112 = sadd.s32 %s111, 1
    %s113 = scalar_select %p110, %s111, %s112
    %p116 = pneg %p110
    %p117 = scmp.eq.s32.totalorder %s12, 1
    %p118 = por %p116, %p117
    %p119 = scmp.ne.s32.totalorder %s111, %s114
    %p120 = scmp.eq.s32.totalorder %s12, 0
    %p121 = por %p119, %p120
    %p122 = scmp.ne.s32.totalorder %s111, %s114
    %p123 = scmp.eq.s32.totalorder %s17, 1
    %p124 = por %p122, %p123
    %p125 = scmp.ne.s32.totalorder %s114, %s115
    %p126 = scmp.eq.s32.totalorder %s17, 0
    %p127 = por %p125, %p126
    %p128 = scmp.ne.s32.totalorder %s114, %s115
    %p129 = scmp.eq.s32.totalorder %s18, 1
    %p130 = por %p128, %p129
    %p132 = scmp.ne.s32.totalorder %s115, %s131
    %p133 = scmp.eq.s32.totalorder %s18, 0
    %p134 = por %p132, %p133
    %s135 = ssub.s32 %s12, %s19
    %p136 = scmp.eq.s32.totalorder %s135, 0
    %s138 = sadd.s32 %s137, 1
    %s139 = scalar_select %p136, %s137, %s138
    %p142 = pneg %p136
    %p143 = scmp.eq.s32.totalorder %s12, 1
    %p144 = por %p142, %p143
    %p145 = scmp.ne.s32.totalorder %s137, %s140
    %p146 = scmp.eq.s32.totalorder %s12, 0
    %p147 = por %p145, %p146
    %p148 = scmp.ne.s32.totalorder %s137, %s140
    %p149 = scmp.eq.s32.totalorder %s17, 1
    %p150 = por %p148, %p149
    %p151 = scmp.ne.s32.totalorder %s140, %s141
    %p152 = scmp.eq.s32.totalorder %s17, 0
    %p153 = por %p151, %p152
    %p154 = scmp.ne.s32.totalorder %s140, %s141
    %p155 = scmp.eq.s32.totalorder %s18, 1
    %p156 = por %p154, %p155
    %p158 = scmp.ne.s32.totalorder %s141, %s157
    %p159 = scmp.eq.s32.totalorder %s18, 0
    %p160 = por %p158, %p159
    %p161 = scmp.le.s32.totalorder 1, %s12
    %p162 = scmp.lt.s32.totalorder %s12, 3
    %p163 = pnand %p161, %p162
    %p164 = pneg %p163
    // Predicated region
    $region9: #{_bottleneck_forward.5} parent=5 // pred_check
      _
    $region10: #{_bottleneck_forward.5} parent=5 // pred_check_branch
      %166 = sbr.rel (%p163) target = $region12
    $region11: #{_bottleneck_forward.5} parent=5 // pred_region
      %s167 = ssub.s32 %s12, 1
      // Predicated region
      $region13: #{_bottleneck_forward.5} parent=11 // pred_check
        %p168 = pneg %p59
      $region14: #{_bottleneck_forward.5} parent=11 // pred_check_branch
        %170 = sbr.rel (%p168) target = $region16
      $region15: #{_bottleneck_forward.5} parent=11 // pred_region
        _
      $region16: #{_bottleneck_forward.5} parent=11 // pred_fallthru
        _
      // Predicated region
      $region17: #{_bottleneck_forward.5} parent=11 // pred_check
        %p171 = pneg %p80
      $region18: #{_bottleneck_forward.5} parent=11 // pred_check_branch
        %173 = sbr.rel (%p171) target = $region20
      $region19: #{_bottleneck_forward.5} parent=11 // pred_region
        _
      $region20: #{_bottleneck_forward.5} parent=11 // pred_fallthru
        _
      // Predicated region
      $region21: #{_bottleneck_forward.5} parent=11 // pred_check
        %p174 = pneg %p101
      $region22: #{_bottleneck_forward.5} parent=11 // pred_check_branch
        %176 = sbr.rel (%p174) target = $region24
      $region23: #{_bottleneck_forward.5} parent=11 // pred_region
        _
      $region24: #{_bottleneck_forward.5} parent=11 // pred_fallthru
        _
    $region12: #{_bottleneck_forward.5} parent=5 // pred_fallthru
      _
    %p177 = scmp.lt.s32.totalorder %s12, 2
    // Predicated region
    $region25: #{_bottleneck_forward.5} parent=5 // pred_check
      %p178 = pneg %p177
    $region26: #{_bottleneck_forward.5} parent=5 // pred_check_branch
      %180 = sbr.rel (%p178) target = $region28
    $region27: #{_bottleneck_forward.5} parent=5 // pred_region
      // Predicated region
      $region29: #{_bottleneck_forward.5} parent=27 // pred_check
        %p181 = pneg %p32
      $region30: #{_bottleneck_forward.5} parent=27 // pred_check_branch
        %183 = sbr.rel (%p181) target = $region32
      $region31: #{_bottleneck_forward.5} parent=27 // pred_region
        %p184 = scmp.lt.s32.totalorder %s12, 1
        %s185 = scalar_select %p184, %s12, 1
        %s186 = smul.addr %s185, 32
        %s187 = smul.addr %s186, 8
        %s188 = scalar_lea.vmem %s0, %s187
      $region32: #{_bottleneck_forward.5} parent=27 // pred_fallthru
        _
    $region28: #{_bottleneck_forward.5} parent=5 // pred_fallthru
      _
    %p189 = scmp.le.s32.totalorder 1, %s12
    %p190 = scmp.lt.s32.totalorder %s12, 3
    %p191 = pnand %p189, %p190
    %p192 = pneg %p191
    // Predicated region
    $region33: #{_bottleneck_forward.5} parent=5 // pred_check
      _
    $region34: #{_bottleneck_forward.5} parent=5 // pred_check_branch
      %194 = sbr.rel (%p191) target = $region36
    $region35: #{_bottleneck_forward.5} parent=5 // pred_region
      %s195 = ssub.s32 %s12, 1
      %p196 = scmp.lt.s32.totalorder %s17, 1
      %s197 = scalar_select %p196, %s17, 1
      %s198 = smul.addr %s197, 32
      %s199 = smul.addr %s198, 8
      %s200 = scalar_lea.vmem %s0, %s199
      %p201 = pneg %p38
      %p202 = pneg %p35
      %p203 = pneg %p59
      %p204 = pneg %p56
      %p205 = pneg %p80
      %p206 = pneg %p77
      %p207 = pneg %p101
      %p208 = pneg %p98
      %p209 = pneg %p127
      %p210 = pneg %p124
      %p211 = scmp.lt.s32.totalorder %s17, 1
      %s212 = scalar_select %p211, %s17, 1
      %s213 = smul.addr %s212, 32
      %s214 = smul.addr %s213, 8
      %s215 = scalar_lea.vmem %s4, %s214
      %p216 = pneg %p153
      %p217 = pneg %p150
      %p218 = scmp.lt.s32.totalorder %s17, 1
      %s219 = scalar_select %p218, %s17, 1
      %s220 = smul.addr %s219, 2
      %s221 = scalar_lea.vmem %s5, %s220
      %p222 = scmp.lt.s32.totalorder %s17, 1
      %s223 = scalar_select %p222, %s17, 1
      %s224 = smul.addr %s223, 32
      %s225 = smul.addr %s224, 8
      %s226 = scalar_lea.vmem %s0, %s225
      %p227 = scmp.lt.s32.totalorder %s17, 1
      %s228 = scalar_select %p227, %s17, 1
      %s229 = smul.addr %s228, 32
      %s230 = smul.addr %s229, 8
      %s231 = scalar_lea.vmem %s4, %s230
      %p232 = scmp.lt.s32.totalorder %s17, 1
      %s233 = scalar_select %p232, %s17, 1
      %s234 = smul.addr %s233, 2
      %s235 = scalar_lea.vmem %s5, %s234
      %236 = vst [vmem:[#allocation2] sm:$0xff] 0.0
      %237 = vst [vmem:[#allocation2 + $0x8] sm:$0xff] 0.0
      %238 = vst [vmem:[#allocation2 + $0x10] sm:$0x3] 0.0
      %239 = vst [vmem:[#allocation2 + $0x18] sm:$0xff] 0.0
      %240 = vst [vmem:[#allocation2 + $0x20] sm:$0xff] 0.0
      %241 = vst [vmem:[#allocation2 + $0x28] sm:$0x3] 0.0
      %242 = vst [vmem:[#allocation2 + $0x30] sm:$0xff] 0.0
      %243 = vst [vmem:[#allocation2 + $0x38] sm:$0xff] 0.0
      %244 = vst [vmem:[#allocation2 + $0x40] sm:$0x3] 0.0
      %245 = vst [vmem:[#allocation2 + $0x48] sm:$0xff] 0.0
      %246 = vst [vmem:[#allocation2 + $0x50] sm:$0xff] 0.0
      %247 = vst [vmem:[#allocation2 + $0x58] sm:$0x3] 0.0
      %248 = vst [vmem:[#allocation2 + $0x60] sm:$0xff] 0.0
      %249 = vst [vmem:[#allocation2 + $0x68] sm:$0xff] 0.0
      %250 = vst [vmem:[#allocation2 + $0x70] sm:$0x3] 0.0
      %251 = vst [vmem:[#allocation2 + $0x78] sm:$0xff] 0.0
      %252 = vst [vmem:[#allocation2 + $0x80] sm:$0xff] 0.0
      %253 = vst [vmem:[#allocation2 + $0x88] sm:$0x3] 0.0
      %254 = vst [vmem:[#allocation2 + $0x90] sm:$0xff] 0.0
      %255 = vst [vmem:[#allocation2 + $0x98] sm:$0xff] 0.0
      %256 = vst [vmem:[#allocation2 + $0xa0] sm:$0x3] 0.0
      %257 = vst [vmem:[#allocation2 + $0xa8] sm:$0xff] 0.0
      %258 = vst [vmem:[#allocation2 + $0xb0] sm:$0xff] 0.0
      %259 = vst [vmem:[#allocation2 + $0xb8] sm:$0x3] 0.0
      %260 = vst [vmem:[#allocation2 + $0xc0] sm:$0xff] 0.0
      %261 = vst [vmem:[#allocation2 + $0xc8] sm:$0xff] 0.0
      %262 = vst [vmem:[#allocation2 + $0xd0] sm:$0x3] 0.0
      %263 = vst [vmem:[#allocation2 + $0xd8] sm:$0xff] 0.0
      %264 = vst [vmem:[#allocation2 + $0xe0] sm:$0xff] 0.0
      %265 = vst [vmem:[#allocation2 + $0xe8] sm:$0x3] 0.0
      %266 = vst [vmem:[#allocation2 + $0xf0] sm:$0xff] 0.0
      %267 = vst [vmem:[#allocation2 + $0xf8] sm:$0xff] 0.0
      %268 = vst [vmem:[#allocation2 + $0x100] sm:$0x3] 0.0
      %269 = vst [vmem:[#allocation2 + $0x108] sm:$0xff] 0.0
      %270 = vst [vmem:[#allocation2 + $0x110] sm:$0xff] 0.0
      %271 = vst [vmem:[#allocation2 + $0x118] sm:$0x3] 0.0
      %272 = vst [vmem:[#allocation2 + $0x120] sm:$0xff] 0.0
      %273 = vst [vmem:[#allocation2 + $0x128] sm:$0xff] 0.0
      %274 = vst [vmem:[#allocation2 + $0x130] sm:$0x3] 0.0
      %275 = vst [vmem:[#allocation2 + $0x138] sm:$0xff] 0.0
      %276 = vst [vmem:[#allocation2 + $0x140] sm:$0xff] 0.0
      %277 = vst [vmem:[#allocation2 + $0x148] sm:$0x3] 0.0
      %278 = vst [vmem:[#allocation2 + $0x150] sm:$0xff] 0.0
      %279 = vst [vmem:[#allocation2 + $0x158] sm:$0xff] 0.0
      %280 = vst [vmem:[#allocation2 + $0x160] sm:$0x3] 0.0
      %281 = vst [vmem:[#allocation2 + $0x168] sm:$0xff] 0.0
      %282 = vst [vmem:[#allocation2 + $0x170] sm:$0xff] 0.0
      %283 = vst [vmem:[#allocation2 + $0x178] sm:$0x3] 0.0
      %284 = vst [vmem:[#allocation2 + $0x180] sm:$0xff] 0.0
      %285 = vst [vmem:[#allocation2 + $0x188] sm:$0xff] 0.0
      %286 = vst [vmem:[#allocation2 + $0x190] sm:$0x3] 0.0
      %287 = vst [vmem:[#allocation2 + $0x198] sm:$0xff] 0.0
      %288 = vst [vmem:[#allocation2 + $0x1a0] sm:$0xff] 0.0
      %289 = vst [vmem:[#allocation2 + $0x1a8] sm:$0x3] 0.0
      %v290 = vld [vmem:[%s226] sm:$0xff]
      %v291 = vld [vmem:[%s226 + $0x8] sm:$0xff]
      %v292 = vld [vmem:[%s226 + $0x10] sm:$0xff]
      %v293 = vld [vmem:[%s226 + $0x18] sm:$0xff]
      %v294 = vld [vmem:[%s226 + $0x20] sm:$0xff]
      %v295 = vld [vmem:[%s226 + $0x28] sm:$0xff]
      %v296 = vld [vmem:[%s226 + $0x30] sm:$0xff]
      %v297 = vld [vmem:[%s226 + $0x38] sm:$0xff]
      %v298 = vld [vmem:[%s226 + $0x40] sm:$0xff]
      %v299 = vld [vmem:[%s226 + $0x48] sm:$0xff]
      %v300 = vld [vmem:[%s226 + $0x50] sm:$0xff]
      %v301 = vld [vmem:[%s226 + $0x58] sm:$0xff]
      %v302 = vld [vmem:[%s226 + $0x60] sm:$0xff]
      %v303 = vld [vmem:[%s226 + $0x68] sm:$0xff]
      %v304 = vld [vmem:[%s226 + $0x70] sm:$0xff]
      %v305 = vld [vmem:[%s226 + $0x78] sm:$0xff]
      %v306 = vld [vmem:[%s226 + $0x80] sm:$0xff]
      %v307 = vld [vmem:[%s226 + $0x88] sm:$0xff]
      %v308 = vld [vmem:[%s226 + $0x90] sm:$0xff]
      %v309 = vld [vmem:[%s226 + $0x98] sm:$0xff]
      %v310 = vld [vmem:[%s226 + $0xa0] sm:$0xff]
      %v311 = vld [vmem:[%s226 + $0xa8] sm:$0xff]
      %v312 = vld [vmem:[%s226 + $0xb0] sm:$0xff]
      %v313 = vld [vmem:[%s226 + $0xb8] sm:$0xff]
      %v314 = vld [vmem:[%s226 + $0xc0] sm:$0xff]
      %v315 = vld [vmem:[%s226 + $0xc8] sm:$0xff]
      %v316 = vld [vmem:[%s226 + $0xd0] sm:$0xff]
      %v317 = vld [vmem:[%s226 + $0xd8] sm:$0xff]
      %v318 = vld [vmem:[%s226 + $0xe0] sm:$0xff]
      %v319 = vld [vmem:[%s226 + $0xe8] sm:$0xff]
      %v320 = vld [vmem:[%s226 + $0xf0] sm:$0xff]
      %v321 = vld [vmem:[%s226 + $0xf8] sm:$0xff]
      %v322 = vld [vmem:[%s2] sm:$0x1]
      %v324 = vlaneseq
      %v325 = vshrl.u32 %v324, 7
      %v326 = vsub.s32 0, %v325
      %v327 = vrot.slane %v322, %v326
      %v329 = vmul.f32 %v290, %v327
      %v330 = vmul.f32 %v291, %v327
      %v331 = vmul.f32 %v292, %v327
      %v332 = vmul.f32 %v293, %v327
      %v333 = vmul.f32 %v294, %v327
      %v334 = vmul.f32 %v295, %v327
      %v335 = vmul.f32 %v296, %v327
      %v336 = vmul.f32 %v297, %v327
      %v337 = vmul.f32 %v298, %v327
      %v338 = vmul.f32 %v299, %v327
      %v339 = vmul.f32 %v300, %v327
      %v340 = vmul.f32 %v301, %v327
      %v341 = vmul.f32 %v302, %v327
      %v342 = vmul.f32 %v303, %v327
      %v343 = vmul.f32 %v304, %v327
      %v344 = vmul.f32 %v305, %v327
      %v345 = vmul.f32 %v306, %v327
      %v346 = vmul.f32 %v307, %v327
      %v347 = vmul.f32 %v308, %v327
      %v348 = vmul.f32 %v309, %v327
      %v349 = vmul.f32 %v310, %v327
      %v350 = vmul.f32 %v311, %v327
      %v351 = vmul.f32 %v312, %v327
      %v352 = vmul.f32 %v313, %v327
      %v353 = vmul.f32 %v314, %v327
      %v354 = vmul.f32 %v315, %v327
      %v355 = vmul.f32 %v316, %v327
      %v356 = vmul.f32 %v317, %v327
      %v357 = vmul.f32 %v318, %v327
      %v358 = vmul.f32 %v319, %v327
      %v359 = vmul.f32 %v320, %v327
      %v360 = vmul.f32 %v321, %v327
      %v361 = vld [vmem:[%s3] sm:$0x1]
      %v363 = vlaneseq
      %v364 = vshrl.u32 %v363, 7
      %v365 = vsub.s32 0, %v364
      %v366 = vrot.slane %v361, %v365
      %v368 = vadd.f32 %v329, %v366
      %v369 = vadd.f32 %v330, %v366
      %v370 = vadd.f32 %v331, %v366
      %v371 = vadd.f32 %v332, %v366
      %v372 = vadd.f32 %v333, %v366
      %v373 = vadd.f32 %v334, %v366
      %v374 = vadd.f32 %v335, %v366
      %v375 = vadd.f32 %v336, %v366
      %v376 = vadd.f32 %v337, %v366
      %v377 = vadd.f32 %v338, %v366
      %v378 = vadd.f32 %v339, %v366
      %v379 = vadd.f32 %v340, %v366
      %v380 = vadd.f32 %v341, %v366
      %v381 = vadd.f32 %v342, %v366
      %v382 = vadd.f32 %v343, %v366
      %v383 = vadd.f32 %v344, %v366
      %v384 = vadd.f32 %v345, %v366
      %v385 = vadd.f32 %v346, %v366
      %v386 = vadd.f32 %v347, %v366
      %v387 = vadd.f32 %v348, %v366
      %v388 = vadd.f32 %v349, %v366
      %v389 = vadd.f32 %v350, %v366
      %v390 = vadd.f32 %v351, %v366
      %v391 = vadd.f32 %v352, %v366
      %v392 = vadd.f32 %v353, %v366
      %v393 = vadd.f32 %v354, %v366
      %v394 = vadd.f32 %v355, %v366
      %v395 = vadd.f32 %v356, %v366
      %v396 = vadd.f32 %v357, %v366
      %v397 = vadd.f32 %v358, %v366
      %v398 = vadd.f32 %v359, %v366
      %v399 = vadd.f32 %v360, %v366
      %v400 = vmax.f32 %v368, 0.0
      %v401 = vmax.f32 %v369, 0.0
      %v402 = vmax.f32 %v370, 0.0
      %v403 = vmax.f32 %v371, 0.0
      %v404 = vmax.f32 %v372, 0.0
      %v405 = vmax.f32 %v373, 0.0
      %v406 = vmax.f32 %v374, 0.0
      %v407 = vmax.f32 %v375, 0.0
      %v408 = vmax.f32 %v376, 0.0
      %v409 = vmax.f32 %v377, 0.0
      %v410 = vmax.f32 %v378, 0.0
      %v411 = vmax.f32 %v379, 0.0
      %v412 = vmax.f32 %v380, 0.0
      %v413 = vmax.f32 %v381, 0.0
      %v414 = vmax.f32 %v382, 0.0
      %v415 = vmax.f32 %v383, 0.0
      %v416 = vmax.f32 %v384, 0.0
      %v417 = vmax.f32 %v385, 0.0
      %v418 = vmax.f32 %v386, 0.0
      %v419 = vmax.f32 %v387, 0.0
      %v420 = vmax.f32 %v388, 0.0
      %v421 = vmax.f32 %v389, 0.0
      %v422 = vmax.f32 %v390, 0.0
      %v423 = vmax.f32 %v391, 0.0
      %v424 = vmax.f32 %v392, 0.0
      %v425 = vmax.f32 %v393, 0.0
      %v426 = vmax.f32 %v394, 0.0
      %v427 = vmax.f32 %v395, 0.0
      %v428 = vmax.f32 %v396, 0.0
      %v429 = vmax.f32 %v397, 0.0
      %v430 = vmax.f32 %v398, 0.0
      %v431 = vmax.f32 %v399, 0.0
      %s432 = scalar_lea.vmem [#allocation2], 24
      %433 = vst [vmem:[%s432 + $0x1] sm:$0xff] %v400
      %434 = vst [vmem:[%s432 + $0x9] sm:$0xff] %v401
      %435 = vst [vmem:[%s432 + $0x19] sm:$0xff] %v402
      %436 = vst [vmem:[%s432 + $0x21] sm:$0xff] %v403
      %437 = vst [vmem:[%s432 + $0x31] sm:$0xff] %v404
      %438 = vst [vmem:[%s432 + $0x39] sm:$0xff] %v405
      %439 = vst [vmem:[%s432 + $0x49] sm:$0xff] %v406
      %440 = vst [vmem:[%s432 + $0x51] sm:$0xff] %v407
      %441 = vst [vmem:[%s432 + $0x61] sm:$0xff] %v408
      %442 = vst [vmem:[%s432 + $0x69] sm:$0xff] %v409
      %443 = vst [vmem:[%s432 + $0x79] sm:$0xff] %v410
      %444 = vst [vmem:[%s432 + $0x81] sm:$0xff] %v411
      %445 = vst [vmem:[%s432 + $0x91] sm:$0xff] %v412
      %446 = vst [vmem:[%s432 + $0x99] sm:$0xff] %v413
      %447 = vst [vmem:[%s432 + $0xa9] sm:$0xff] %v414
      %448 = vst [vmem:[%s432 + $0xb1] sm:$0xff] %v415
      %449 = vst [vmem:[%s432 + $0xc1] sm:$0xff] %v416
      %450 = vst [vmem:[%s432 + $0xc9] sm:$0xff] %v417
      %451 = vst [vmem:[%s432 + $0xd9] sm:$0xff] %v418
      %452 = vst [vmem:[%s432 + $0xe1] sm:$0xff] %v419
      %453 = vst [vmem:[%s432 + $0xf1] sm:$0xff] %v420
      %454 = vst [vmem:[%s432 + $0xf9] sm:$0xff] %v421
      %455 = vst [vmem:[%s432 + $0x109] sm:$0xff] %v422
      %456 = vst [vmem:[%s432 + $0x111] sm:$0xff] %v423
      %457 = vst [vmem:[%s432 + $0x121] sm:$0xff] %v424
      %458 = vst [vmem:[%s432 + $0x129] sm:$0xff] %v425
      %459 = vst [vmem:[%s432 + $0x139] sm:$0xff] %v426
      %460 = vst [vmem:[%s432 + $0x141] sm:$0xff] %v427
      %461 = vst [vmem:[%s432 + $0x151] sm:$0xff] %v428
      %462 = vst [vmem:[%s432 + $0x159] sm:$0xff] %v429
      %463 = vst [vmem:[%s432 + $0x169] sm:$0xff] %v430
      %464 = vst [vmem:[%s432 + $0x171] sm:$0xff] %v431
      %v465 = vld [vmem:[#allocation2] sm:$0xff]
      %v466 = vld [vmem:[#allocation2 + $0x8] sm:$0xff]
      %v467 = vld [vmem:[#allocation2 + $0x18] sm:$0xff]
      %v468 = vld [vmem:[#allocation2 + $0x20] sm:$0xff]
      %v469 = vld [vmem:[#allocation2 + $0x30] sm:$0xff]
      %v470 = vld [vmem:[#allocation2 + $0x38] sm:$0xff]
      %v471 = vld [vmem:[#allocation2 + $0x48] sm:$0xff]
      %v472 = vld [vmem:[#allocation2 + $0x50] sm:$0xff]
      %v473 = vld [vmem:[#allocation2 + $0x60] sm:$0xff]
      %v474 = vld [vmem:[#allocation2 + $0x68] sm:$0xff]
      %v475 = vld [vmem:[#allocation2 + $0x78] sm:$0xff]
      %v476 = vld [vmem:[#allocation2 + $0x80] sm:$0xff]
      %v477 = vld [vmem:[#allocation2 + $0x90] sm:$0xff]
      %v478 = vld [vmem:[#allocation2 + $0x98] sm:$0xff]
      %v479 = vld [vmem:[#allocation2 + $0xa8] sm:$0xff]
      %v480 = vld [vmem:[#allocation2 + $0xb0] sm:$0xff]
      %v481 = vld [vmem:[#allocation2 + $0xc0] sm:$0xff]
      %v482 = vld [vmem:[#allocation2 + $0xc8] sm:$0xff]
      %v483 = vld [vmem:[#allocation2 + $0xd8] sm:$0xff]
      %v484 = vld [vmem:[#allocation2 + $0xe0] sm:$0xff]
      %v485 = vld [vmem:[#allocation2 + $0xf0] sm:$0xff]
      %v486 = vld [vmem:[#allocation2 + $0xf8] sm:$0xff]
      %v487 = vld [vmem:[#allocation2 + $0x108] sm:$0xff]
      %v488 = vld [vmem:[#allocation2 + $0x110] sm:$0xff]
      %v489 = vld [vmem:[#allocation2 + $0x120] sm:$0xff]
      %v490 = vld [vmem:[#allocation2 + $0x128] sm:$0xff]
      %v491 = vld [vmem:[#allocation2 + $0x138] sm:$0xff]
      %v492 = vld [vmem:[#allocation2 + $0x140] sm:$0xff]
      %v493 = vld [vmem:[#allocation2 + $0x150] sm:$0xff]
      %v494 = vld [vmem:[#allocation2 + $0x158] sm:$0xff]
      %v495 = vld [vmem:[#allocation2 + $0x168] sm:$0xff]
      %v496 = vld [vmem:[#allocation2 + $0x170] sm:$0xff]
      %v497 = vld [vmem:[#allocation2 + $0x1] sm:$0xff]
      %v498 = vld [vmem:[#allocation2 + $0x9] sm:$0xff]
      %v499 = vld [vmem:[#allocation2 + $0x19] sm:$0xff]
      %v500 = vld [vmem:[#allocation2 + $0x21] sm:$0xff]
      %v501 = vld [vmem:[#allocation2 + $0x31] sm:$0xff]
      %v502 = vld [vmem:[#allocation2 + $0x39] sm:$0xff]
      %v503 = vld [vmem:[#allocation2 + $0x49] sm:$0xff]
      %v504 = vld [vmem:[#allocation2 + $0x51] sm:$0xff]
      %v505 = vld [vmem:[#allocation2 + $0x61] sm:$0xff]
      %v506 = vld [vmem:[#allocation2 + $0x69] sm:$0xff]
      %v507 = vld [vmem:[#allocation2 + $0x79] sm:$0xff]
      %v508 = vld [vmem:[#allocation2 + $0x81] sm:$0xff]
      %v509 = vld [vmem:[#allocation2 + $0x91] sm:$0xff]
      %v510 = vld [vmem:[#allocation2 + $0x99] sm:$0xff]
      %v511 = vld [vmem:[#allocation2 + $0xa9] sm:$0xff]
      %v512 = vld [vmem:[#allocation2 + $0xb1] sm:$0xff]
      %v513 = vld [vmem:[#allocation2 + $0xc1] sm:$0xff]
      %v514 = vld [vmem:[#allocation2 + $0xc9] sm:$0xff]
      %v515 = vld [vmem:[#allocation2 + $0xd9] sm:$0xff]
      %v516 = vld [vmem:[#allocation2 + $0xe1] sm:$0xff]
      %v517 = vld [vmem:[#allocation2 + $0xf1] sm:$0xff]
      %v518 = vld [vmem:[#allocation2 + $0xf9] sm:$0xff]
      %v519 = vld [vmem:[#allocation2 + $0x109] sm:$0xff]
      %v520 = vld [vmem:[#allocation2 + $0x111] sm:$0xff]
      %v521 = vld [vmem:[#allocation2 + $0x121] sm:$0xff]
      %v522 = vld [vmem:[#allocation2 + $0x129] sm:$0xff]
      %v523 = vld [vmem:[#allocation2 + $0x139] sm:$0xff]
      %v524 = vld [vmem:[#allocation2 + $0x141] sm:$0xff]
      %v525 = vld [vmem:[#allocation2 + $0x151] sm:$0xff]
      %v526 = vld [vmem:[#allocation2 + $0x159] sm:$0xff]
      %v527 = vld [vmem:[#allocation2 + $0x169] sm:$0xff]
      %v528 = vld [vmem:[#allocation2 + $0x171] sm:$0xff]
      %v529 = vld [vmem:[#allocation2 + $0x2] sm:$0xff]
      %v530 = vld [vmem:[#allocation2 + $0xa] sm:$0xff]
      %v531 = vld [vmem:[#allocation2 + $0x1a] sm:$0xff]
      %v532 = vld [vmem:[#allocation2 + $0x22] sm:$0xff]
      %v533 = vld [vmem:[#allocation2 + $0x32] sm:$0xff]
      %v534 = vld [vmem:[#allocation2 + $0x3a] sm:$0xff]
      %v535 = vld [vmem:[#allocation2 + $0x4a] sm:$0xff]
      %v536 = vld [vmem:[#allocation2 + $0x52] sm:$0xff]
      %v537 = vld [vmem:[#allocation2 + $0x62] sm:$0xff]
      %v538 = vld [vmem:[#allocation2 + $0x6a] sm:$0xff]
      %v539 = vld [vmem:[#allocation2 + $0x7a] sm:$0xff]
      %v540 = vld [vmem:[#allocation2 + $0x82] sm:$0xff]
      %v541 = vld [vmem:[#allocation2 + $0x92] sm:$0xff]
      %v542 = vld [vmem:[#allocation2 + $0x9a] sm:$0xff]
      %v543 = vld [vmem:[#allocation2 + $0xaa] sm:$0xff]
      %v544 = vld [vmem:[#allocation2 + $0xb2] sm:$0xff]
      %v545 = vld [vmem:[#allocation2 + $0xc2] sm:$0xff]
      %v546 = vld [vmem:[#allocation2 + $0xca] sm:$0xff]
      %v547 = vld [vmem:[#allocation2 + $0xda] sm:$0xff]
      %v548 = vld [vmem:[#allocation2 + $0xe2] sm:$0xff]
      %v549 = vld [vmem:[#allocation2 + $0xf2] sm:$0xff]
      %v550 = vld [vmem:[#allocation2 + $0xfa] sm:$0xff]
      %v551 = vld [vmem:[#allocation2 + $0x10a] sm:$0xff]
      %v552 = vld [vmem:[#allocation2 + $0x112] sm:$0xff]
      %v553 = vld [vmem:[#allocation2 + $0x122] sm:$0xff]
      %v554 = vld [vmem:[#allocation2 + $0x12a] sm:$0xff]
      %v555 = vld [vmem:[#allocation2 + $0x13a] sm:$0xff]
      %v556 = vld [vmem:[#allocation2 + $0x142] sm:$0xff]
      %v557 = vld [vmem:[#allocation2 + $0x152] sm:$0xff]
      %v558 = vld [vmem:[#allocation2 + $0x15a] sm:$0xff]
      %v559 = vld [vmem:[#allocation2 + $0x16a] sm:$0xff]
      %v560 = vld [vmem:[#allocation2 + $0x172] sm:$0xff]
      %v561 = vld [vmem:[%s432] sm:$0xff]
      %v562 = vld [vmem:[%s432 + $0x8] sm:$0xff]
      %v563 = vld [vmem:[%s432 + $0x18] sm:$0xff]
      %v564 = vld [vmem:[%s432 + $0x20] sm:$0xff]
      %v565 = vld [vmem:[%s432 + $0x30] sm:$0xff]
      %v566 = vld [vmem:[%s432 + $0x38] sm:$0xff]
      %v567 = vld [vmem:[%s432 + $0x48] sm:$0xff]
      %v568 = vld [vmem:[%s432 + $0x50] sm:$0xff]
      %v569 = vld [vmem:[%s432 + $0x60] sm:$0xff]
      %v570 = vld [vmem:[%s432 + $0x68] sm:$0xff]
      %v571 = vld [vmem:[%s432 + $0x78] sm:$0xff]
      %v572 = vld [vmem:[%s432 + $0x80] sm:$0xff]
      %v573 = vld [vmem:[%s432 + $0x90] sm:$0xff]
      %v574 = vld [vmem:[%s432 + $0x98] sm:$0xff]
      %v575 = vld [vmem:[%s432 + $0xa8] sm:$0xff]
      %v576 = vld [vmem:[%s432 + $0xb0] sm:$0xff]
      %v577 = vld [vmem:[%s432 + $0xc0] sm:$0xff]
      %v578 = vld [vmem:[%s432 + $0xc8] sm:$0xff]
      %v579 = vld [vmem:[%s432 + $0xd8] sm:$0xff]
      %v580 = vld [vmem:[%s432 + $0xe0] sm:$0xff]
      %v581 = vld [vmem:[%s432 + $0xf0] sm:$0xff]
      %v582 = vld [vmem:[%s432 + $0xf8] sm:$0xff]
      %v583 = vld [vmem:[%s432 + $0x108] sm:$0xff]
      %v584 = vld [vmem:[%s432 + $0x110] sm:$0xff]
      %v585 = vld [vmem:[%s432 + $0x120] sm:$0xff]
      %v586 = vld [vmem:[%s432 + $0x128] sm:$0xff]
      %v587 = vld [vmem:[%s432 + $0x138] sm:$0xff]
      %v588 = vld [vmem:[%s432 + $0x140] sm:$0xff]
      %v589 = vld [vmem:[%s432 + $0x150] sm:$0xff]
      %v590 = vld [vmem:[%s432 + $0x158] sm:$0xff]
      %v591 = vld [vmem:[%s432 + $0x168] sm:$0xff]
      %v592 = vld [vmem:[%s432 + $0x170] sm:$0xff]
      %v593 = vld [vmem:[%s432 + $0x1] sm:$0xff]
      %v594 = vld [vmem:[%s432 + $0x9] sm:$0xff]
      %v595 = vld [vmem:[%s432 + $0x19] sm:$0xff]
      %v596 = vld [vmem:[%s432 + $0x21] sm:$0xff]
      %v597 = vld [vmem:[%s432 + $0x31] sm:$0xff]
      %v598 = vld [vmem:[%s432 + $0x39] sm:$0xff]
      %v599 = vld [vmem:[%s432 + $0x49] sm:$0xff]
      %v600 = vld [vmem:[%s432 + $0x51] sm:$0xff]
      %v601 = vld [vmem:[%s432 + $0x61] sm:$0xff]
      %v602 = vld [vmem:[%s432 + $0x69] sm:$0xff]
      %v603 = vld [vmem:[%s432 + $0x79] sm:$0xff]
      %v604 = vld [vmem:[%s432 + $0x81] sm:$0xff]
      %v605 = vld [vmem:[%s432 + $0x91] sm:$0xff]
      %v606 = vld [vmem:[%s432 + $0x99] sm:$0xff]
      %v607 = vld [vmem:[%s432 + $0xa9] sm:$0xff]
      %v608 = vld [vmem:[%s432 + $0xb1] sm:$0xff]
      %v609 = vld [vmem:[%s432 + $0xc1] sm:$0xff]
      %v610 = vld [vmem:[%s432 + $0xc9] sm:$0xff]
      %v611 = vld [vmem:[%s432 + $0xd9] sm:$0xff]
      %v612 = vld [vmem:[%s432 + $0xe1] sm:$0xff]
      %v613 = vld [vmem:[%s432 + $0xf1] sm:$0xff]
      %v614 = vld [vmem:[%s432 + $0xf9] sm:$0xff]
      %v615 = vld [vmem:[%s432 + $0x109] sm:$0xff]
      %v616 = vld [vmem:[%s432 + $0x111] sm:$0xff]
      %v617 = vld [vmem:[%s432 + $0x121] sm:$0xff]
      %v618 = vld [vmem:[%s432 + $0x129] sm:$0xff]
      %v619 = vld [vmem:[%s432 + $0x139] sm:$0xff]
      %v620 = vld [vmem:[%s432 + $0x141] sm:$0xff]
      %v621 = vld [vmem:[%s432 + $0x151] sm:$0xff]
      %v622 = vld [vmem:[%s432 + $0x159] sm:$0xff]
      %v623 = vld [vmem:[%s432 + $0x169] sm:$0xff]
      %v624 = vld [vmem:[%s432 + $0x171] sm:$0xff]
      %v625 = vld [vmem:[%s432 + $0x2] sm:$0xff]
      %v626 = vld [vmem:[%s432 + $0xa] sm:$0xff]
      %v627 = vld [vmem:[%s432 + $0x1a] sm:$0xff]
      %v628 = vld [vmem:[%s432 + $0x22] sm:$0xff]
      %v629 = vld [vmem:[%s432 + $0x32] sm:$0xff]
      %v630 = vld [vmem:[%s432 + $0x3a] sm:$0xff]
      %v631 = vld [vmem:[%s432 + $0x4a] sm:$0xff]
      %v632 = vld [vmem:[%s432 + $0x52] sm:$0xff]
      %v633 = vld [vmem:[%s432 + $0x62] sm:$0xff]
      %v634 = vld [vmem:[%s432 + $0x6a] sm:$0xff]
      %v635 = vld [vmem:[%s432 + $0x7a] sm:$0xff]
      %v636 = vld [vmem:[%s432 + $0x82] sm:$0xff]
      %v637 = vld [vmem:[%s432 + $0x92] sm:$0xff]
      %v638 = vld [vmem:[%s432 + $0x9a] sm:$0xff]
      %v639 = vld [vmem:[%s432 + $0xaa] sm:$0xff]
      %v640 = vld [vmem:[%s432 + $0xb2] sm:$0xff]
      %v641 = vld [vmem:[%s432 + $0xc2] sm:$0xff]
      %v642 = vld [vmem:[%s432 + $0xca] sm:$0xff]
      %v643 = vld [vmem:[%s432 + $0xda] sm:$0xff]
      %v644 = vld [vmem:[%s432 + $0xe2] sm:$0xff]
      %v645 = vld [vmem:[%s432 + $0xf2] sm:$0xff]
      %v646 = vld [vmem:[%s432 + $0xfa] sm:$0xff]
      %v647 = vld [vmem:[%s432 + $0x10a] sm:$0xff]
      %v648 = vld [vmem:[%s432 + $0x112] sm:$0xff]
      %v649 = vld [vmem:[%s432 + $0x122] sm:$0xff]
      %v650 = vld [vmem:[%s432 + $0x12a] sm:$0xff]
      %v651 = vld [vmem:[%s432 + $0x13a] sm:$0xff]
      %v652 = vld [vmem:[%s432 + $0x142] sm:$0xff]
      %v653 = vld [vmem:[%s432 + $0x152] sm:$0xff]
      %v654 = vld [vmem:[%s432 + $0x15a] sm:$0xff]
      %v655 = vld [vmem:[%s432 + $0x16a] sm:$0xff]
      %v656 = vld [vmem:[%s432 + $0x172] sm:$0xff]
      %s657 = scalar_lea.vmem [#allocation2], 48
      %v658 = vld [vmem:[%s657] sm:$0xff]
      %v659 = vld [vmem:[%s657 + $0x8] sm:$0xff]
      %v660 = vld [vmem:[%s657 + $0x18] sm:$0xff]
      %v661 = vld [vmem:[%s657 + $0x20] sm:$0xff]
      %v662 = vld [vmem:[%s657 + $0x30] sm:$0xff]
      %v663 = vld [vmem:[%s657 + $0x38] sm:$0xff]
      %v664 = vld [vmem:[%s657 + $0x48] sm:$0xff]
      %v665 = vld [vmem:[%s657 + $0x50] sm:$0xff]
      %v666 = vld [vmem:[%s657 + $0x60] sm:$0xff]
      %v667 = vld [vmem:[%s657 + $0x68] sm:$0xff]
      %v668 = vld [vmem:[%s657 + $0x78] sm:$0xff]
      %v669 = vld [vmem:[%s657 + $0x80] sm:$0xff]
      %v670 = vld [vmem:[%s657 + $0x90] sm:$0xff]
      %v671 = vld [vmem:[%s657 + $0x98] sm:$0xff]
      %v672 = vld [vmem:[%s657 + $0xa8] sm:$0xff]
      %v673 = vld [vmem:[%s657 + $0xb0] sm:$0xff]
      %v674 = vld [vmem:[%s657 + $0xc0] sm:$0xff]
      %v675 = vld [vmem:[%s657 + $0xc8] sm:$0xff]
      %v676 = vld [vmem:[%s657 + $0xd8] sm:$0xff]
      %v677 = vld [vmem:[%s657 + $0xe0] sm:$0xff]
      %v678 = vld [vmem:[%s657 + $0xf0] sm:$0xff]
      %v679 = vld [vmem:[%s657 + $0xf8] sm:$0xff]
      %v680 = vld [vmem:[%s657 + $0x108] sm:$0xff]
      %v681 = vld [vmem:[%s657 + $0x110] sm:$0xff]
      %v682 = vld [vmem:[%s657 + $0x120] sm:$0xff]
      %v683 = vld [vmem:[%s657 + $0x128] sm:$0xff]
      %v684 = vld [vmem:[%s657 + $0x138] sm:$0xff]
      %v685 = vld [vmem:[%s657 + $0x140] sm:$0xff]
      %v686 = vld [vmem:[%s657 + $0x150] sm:$0xff]
      %v687 = vld [vmem:[%s657 + $0x158] sm:$0xff]
      %v688 = vld [vmem:[%s657 + $0x168] sm:$0xff]
      %v689 = vld [vmem:[%s657 + $0x170] sm:$0xff]
      %v690 = vld [vmem:[%s657 + $0x1] sm:$0xff]
      %v691 = vld [vmem:[%s657 + $0x9] sm:$0xff]
      %v692 = vld [vmem:[%s657 + $0x19] sm:$0xff]
      %v693 = vld [vmem:[%s657 + $0x21] sm:$0xff]
      %v694 = vld [vmem:[%s657 + $0x31] sm:$0xff]
      %v695 = vld [vmem:[%s657 + $0x39] sm:$0xff]
      %v696 = vld [vmem:[%s657 + $0x49] sm:$0xff]
      %v697 = vld [vmem:[%s657 + $0x51] sm:$0xff]
      %v698 = vld [vmem:[%s657 + $0x61] sm:$0xff]
      %v699 = vld [vmem:[%s657 + $0x69] sm:$0xff]
      %v700 = vld [vmem:[%s657 + $0x79] sm:$0xff]
      %v701 = vld [vmem:[%s657 + $0x81] sm:$0xff]
      %v702 = vld [vmem:[%s657 + $0x91] sm:$0xff]
      %v703 = vld [vmem:[%s657 + $0x99] sm:$0xff]
      %v704 = vld [vmem:[%s657 + $0xa9] sm:$0xff]
      %v705 = vld [vmem:[%s657 + $0xb1] sm:$0xff]
      %v706 = vld [vmem:[%s657 + $0xc1] sm:$0xff]
      %v707 = vld [vmem:[%s657 + $0xc9] sm:$0xff]
      %v708 = vld [vmem:[%s657 + $0xd9] sm:$0xff]
      %v709 = vld [vmem:[%s657 + $0xe1] sm:$0xff]
      %v710 = vld [vmem:[%s657 + $0xf1] sm:$0xff]
      %v711 = vld [vmem:[%s657 + $0xf9] sm:$0xff]
      %v712 = vld [vmem:[%s657 + $0x109] sm:$0xff]
      %v713 = vld [vmem:[%s657 + $0x111] sm:$0xff]
      %v714 = vld [vmem:[%s657 + $0x121] sm:$0xff]
      %v715 = vld [vmem:[%s657 + $0x129] sm:$0xff]
      %v716 = vld [vmem:[%s657 + $0x139] sm:$0xff]
      %v717 = vld [vmem:[%s657 + $0x141] sm:$0xff]
      %v718 = vld [vmem:[%s657 + $0x151] sm:$0xff]
      %v719 = vld [vmem:[%s657 + $0x159] sm:$0xff]
      %v720 = vld [vmem:[%s657 + $0x169] sm:$0xff]
      %v721 = vld [vmem:[%s657 + $0x171] sm:$0xff]
      %v722 = vld [vmem:[%s657 + $0x2] sm:$0xff]
      %v723 = vld [vmem:[%s657 + $0xa] sm:$0xff]
      %v724 = vld [vmem:[%s657 + $0x1a] sm:$0xff]
      %v725 = vld [vmem:[%s657 + $0x22] sm:$0xff]
      %v726 = vld [vmem:[%s657 + $0x32] sm:$0xff]
      %v727 = vld [vmem:[%s657 + $0x3a] sm:$0xff]
      %v728 = vld [vmem:[%s657 + $0x4a] sm:$0xff]
      %v729 = vld [vmem:[%s657 + $0x52] sm:$0xff]
      %v730 = vld [vmem:[%s657 + $0x62] sm:$0xff]
      %v731 = vld [vmem:[%s657 + $0x6a] sm:$0xff]
      %v732 = vld [vmem:[%s657 + $0x7a] sm:$0xff]
      %v733 = vld [vmem:[%s657 + $0x82] sm:$0xff]
      %v734 = vld [vmem:[%s657 + $0x92] sm:$0xff]
      %v735 = vld [vmem:[%s657 + $0x9a] sm:$0xff]
      %v736 = vld [vmem:[%s657 + $0xaa] sm:$0xff]
      %v737 = vld [vmem:[%s657 + $0xb2] sm:$0xff]
      %v738 = vld [vmem:[%s657 + $0xc2] sm:$0xff]
      %v739 = vld [vmem:[%s657 + $0xca] sm:$0xff]
      %v740 = vld [vmem:[%s657 + $0xda] sm:$0xff]
      %v741 = vld [vmem:[%s657 + $0xe2] sm:$0xff]
      %v742 = vld [vmem:[%s657 + $0xf2] sm:$0xff]
      %v743 = vld [vmem:[%s657 + $0xfa] sm:$0xff]
      %v744 = vld [vmem:[%s657 + $0x10a] sm:$0xff]
      %v745 = vld [vmem:[%s657 + $0x112] sm:$0xff]
      %v746 = vld [vmem:[%s657 + $0x122] sm:$0xff]
      %v747 = vld [vmem:[%s657 + $0x12a] sm:$0xff]
      %v748 = vld [vmem:[%s657 + $0x13a] sm:$0xff]
      %v749 = vld [vmem:[%s657 + $0x142] sm:$0xff]
      %v750 = vld [vmem:[%s657 + $0x152] sm:$0xff]
      %v751 = vld [vmem:[%s657 + $0x15a] sm:$0xff]
      %v752 = vld [vmem:[%s657 + $0x16a] sm:$0xff]
      %v753 = vld [vmem:[%s657 + $0x172] sm:$0xff]
      %v754 = vld [vmem:[%s1] sm:$0xff]
      %v755 = vld [vmem:[%s1 + $0x8] sm:$0xff]
      %v756 = vld [vmem:[%s1 + $0x10] sm:$0xff]
      %v757 = vld [vmem:[%s1 + $0x18] sm:$0xff]
      %v758 = vld [vmem:[%s1 + $0x20] sm:$0xff]
      %v759 = vld [vmem:[%s1 + $0x28] sm:$0xff]
      %v760 = vld [vmem:[%s1 + $0x30] sm:$0xff]
      %v761 = vld [vmem:[%s1 + $0x38] sm:$0xff]
      %v762 = vld [vmem:[%s1 + $0x40] sm:$0xff]
      %v763 = vld [vmem:[%s1 + $0x48] sm:$0xff]
      %v764 = vld [vmem:[%s1 + $0x50] sm:$0xff]
      %v765 = vld [vmem:[%s1 + $0x58] sm:$0xff]
      %v766 = vld [vmem:[%s1 + $0x60] sm:$0xff]
      %v767 = vld [vmem:[%s1 + $0x68] sm:$0xff]
      %v768 = vld [vmem:[%s1 + $0x70] sm:$0xff]
      %v769 = vld [vmem:[%s1 + $0x78] sm:$0xff]
      %v770 = vld [vmem:[%s1 + $0x80] sm:$0xff]
      %v771 = vld [vmem:[%s1 + $0x88] sm:$0xff]
      %v772 = vld [vmem:[%s1 + $0x90] sm:$0xff]
      %v773 = vld [vmem:[%s1 + $0x98] sm:$0xff]
      %v774 = vld [vmem:[%s1 + $0xa0] sm:$0xff]
      %v775 = vld [vmem:[%s1 + $0xa8] sm:$0xff]
      %v776 = vld [vmem:[%s1 + $0xb0] sm:$0xff]
      %v777 = vld [vmem:[%s1 + $0xb8] sm:$0xff]
      %v778 = vld [vmem:[%s1 + $0xc0] sm:$0xff]
      %v779 = vld [vmem:[%s1 + $0xc8] sm:$0xff]
      %v780 = vld [vmem:[%s1 + $0xd0] sm:$0xff]
      %v781 = vld [vmem:[%s1 + $0xd8] sm:$0xff]
      %v782 = vld [vmem:[%s1 + $0xe0] sm:$0xff]
      %v783 = vld [vmem:[%s1 + $0xe8] sm:$0xff]
      %v784 = vld [vmem:[%s1 + $0xf0] sm:$0xff]
      %v785 = vld [vmem:[%s1 + $0xf8] sm:$0xff]
      %v786 = vld [vmem:[%s1 + $0x100] sm:$0xff]
      %v787 = vld [vmem:[%s1 + $0x108] sm:$0xff]
      %v788 = vld [vmem:[%s1 + $0x110] sm:$0xff]
      %v789 = vld [vmem:[%s1 + $0x118] sm:$0xff]
      %v790 = vld [vmem:[%s1 + $0x120] sm:$0xff]
      %v791 = vld [vmem:[%s1 + $0x128] sm:$0xff]
      %v792 = vld [vmem:[%s1 + $0x130] sm:$0xff]
      %v793 = vld [vmem:[%s1 + $0x138] sm:$0xff]
      %v794 = vld [vmem:[%s1 + $0x140] sm:$0xff]
      %v795 = vld [vmem:[%s1 + $0x148] sm:$0xff]
      %v796 = vld [vmem:[%s1 + $0x150] sm:$0xff]
      %v797 = vld [vmem:[%s1 + $0x158] sm:$0xff]
      %v798 = vld [vmem:[%s1 + $0x160] sm:$0xff]
      %v799 = vld [vmem:[%s1 + $0x168] sm:$0xff]
      %v800 = vld [vmem:[%s1 + $0x170] sm:$0xff]
      %v801 = vld [vmem:[%s1 + $0x178] sm:$0xff]
      %v802 = vld [vmem:[%s1 + $0x180] sm:$0xff]
      %v803 = vld [vmem:[%s1 + $0x188] sm:$0xff]
      %v804 = vld [vmem:[%s1 + $0x190] sm:$0xff]
      %v805 = vld [vmem:[%s1 + $0x198] sm:$0xff]
      %v806 = vld [vmem:[%s1 + $0x1a0] sm:$0xff]
      %v807 = vld [vmem:[%s1 + $0x1a8] sm:$0xff]
      %v808 = vld [vmem:[%s1 + $0x1b0] sm:$0xff]
      %v809 = vld [vmem:[%s1 + $0x1b8] sm:$0xff]
      %v810 = vld [vmem:[%s1 + $0x1c0] sm:$0xff]
      %v811 = vld [vmem:[%s1 + $0x1c8] sm:$0xff]
      %v812 = vld [vmem:[%s1 + $0x1d0] sm:$0xff]
      %v813 = vld [vmem:[%s1 + $0x1d8] sm:$0xff]
      %v814 = vld [vmem:[%s1 + $0x1e0] sm:$0xff]
      %v815 = vld [vmem:[%s1 + $0x1e8] sm:$0xff]
      %v816 = vld [vmem:[%s1 + $0x1f0] sm:$0xff]
      %v817 = vld [vmem:[%s1 + $0x1f8] sm:$0xff]
      %v818 = vld [vmem:[%s1 + $0x200] sm:$0xff]
      %v819 = vld [vmem:[%s1 + $0x208] sm:$0xff]
      %v820 = vld [vmem:[%s1 + $0x210] sm:$0xff]
      %v821 = vld [vmem:[%s1 + $0x218] sm:$0xff]
      %v822 = vld [vmem:[%s1 + $0x220] sm:$0xff]
      %v823 = vld [vmem:[%s1 + $0x228] sm:$0xff]
      %v824 = vld [vmem:[%s1 + $0x230] sm:$0xff]
      %v825 = vld [vmem:[%s1 + $0x238] sm:$0xff]
      %v826 = vld [vmem:[%s1 + $0x240] sm:$0xff]
      %v827 = vld [vmem:[%s1 + $0x248] sm:$0xff]
      %v828 = vld [vmem:[%s1 + $0x250] sm:$0xff]
      %v829 = vld [vmem:[%s1 + $0x258] sm:$0xff]
      %v830 = vld [vmem:[%s1 + $0x260] sm:$0xff]
      %v831 = vld [vmem:[%s1 + $0x268] sm:$0xff]
      %v832 = vld [vmem:[%s1 + $0x270] sm:$0xff]
      %v833 = vld [vmem:[%s1 + $0x278] sm:$0xff]
      %v834 = vld [vmem:[%s1 + $0x280] sm:$0xff]
      %v835 = vld [vmem:[%s1 + $0x288] sm:$0xff]
      %v836 = vld [vmem:[%s1 + $0x290] sm:$0xff]
      %v837 = vld [vmem:[%s1 + $0x298] sm:$0xff]
      %v838 = vld [vmem:[%s1 + $0x2a0] sm:$0xff]
      %v839 = vld [vmem:[%s1 + $0x2a8] sm:$0xff]
      %v840 = vld [vmem:[%s1 + $0x2b0] sm:$0xff]
      %v841 = vld [vmem:[%s1 + $0x2b8] sm:$0xff]
      %v842 = vld [vmem:[%s1 + $0x2c0] sm:$0xff]
      %v843 = vld [vmem:[%s1 + $0x2c8] sm:$0xff]
      %v844 = vld [vmem:[%s1 + $0x2d0] sm:$0xff]
      %v845 = vld [vmem:[%s1 + $0x2d8] sm:$0xff]
      %v846 = vld [vmem:[%s1 + $0x2e0] sm:$0xff]
      %v847 = vld [vmem:[%s1 + $0x2e8] sm:$0xff]
      %v848 = vld [vmem:[%s1 + $0x2f0] sm:$0xff]
      %v849 = vld [vmem:[%s1 + $0x2f8] sm:$0xff]
      %v850 = vld [vmem:[%s1 + $0x300] sm:$0xff]
      %v851 = vld [vmem:[%s1 + $0x308] sm:$0xff]
      %v852 = vld [vmem:[%s1 + $0x310] sm:$0xff]
      %v853 = vld [vmem:[%s1 + $0x318] sm:$0xff]
      %v854 = vld [vmem:[%s1 + $0x320] sm:$0xff]
      %v855 = vld [vmem:[%s1 + $0x328] sm:$0xff]
      %v856 = vld [vmem:[%s1 + $0x330] sm:$0xff]
      %v857 = vld [vmem:[%s1 + $0x338] sm:$0xff]
      %v858 = vld [vmem:[%s1 + $0x340] sm:$0xff]
      %v859 = vld [vmem:[%s1 + $0x348] sm:$0xff]
      %v860 = vld [vmem:[%s1 + $0x350] sm:$0xff]
      %v861 = vld [vmem:[%s1 + $0x358] sm:$0xff]
      %v862 = vld [vmem:[%s1 + $0x360] sm:$0xff]
      %v863 = vld [vmem:[%s1 + $0x368] sm:$0xff]
      %v864 = vld [vmem:[%s1 + $0x370] sm:$0xff]
      %v865 = vld [vmem:[%s1 + $0x378] sm:$0xff]
      %v866 = vld [vmem:[%s1 + $0x380] sm:$0xff]
      %v867 = vld [vmem:[%s1 + $0x388] sm:$0xff]
      %v868 = vld [vmem:[%s1 + $0x390] sm:$0xff]
      %v869 = vld [vmem:[%s1 + $0x398] sm:$0xff]
      %v870 = vld [vmem:[%s1 + $0x3a0] sm:$0xff]
      %v871 = vld [vmem:[%s1 + $0x3a8] sm:$0xff]
      %v872 = vld [vmem:[%s1 + $0x3b0] sm:$0xff]
      %v873 = vld [vmem:[%s1 + $0x3b8] sm:$0xff]
      %v874 = vld [vmem:[%s1 + $0x3c0] sm:$0xff]
      %v875 = vld [vmem:[%s1 + $0x3c8] sm:$0xff]
      %v876 = vld [vmem:[%s1 + $0x3d0] sm:$0xff]
      %v877 = vld [vmem:[%s1 + $0x3d8] sm:$0xff]
      %v878 = vld [vmem:[%s1 + $0x3e0] sm:$0xff]
      %v879 = vld [vmem:[%s1 + $0x3e8] sm:$0xff]
      %v880 = vld [vmem:[%s1 + $0x3f0] sm:$0xff]
      %v881 = vld [vmem:[%s1 + $0x3f8] sm:$0xff]
      %v882 = vld [vmem:[%s1 + $0x400] sm:$0xff]
      %v883 = vld [vmem:[%s1 + $0x408] sm:$0xff]
      %v884 = vld [vmem:[%s1 + $0x410] sm:$0xff]
      %v885 = vld [vmem:[%s1 + $0x418] sm:$0xff]
      %v886 = vld [vmem:[%s1 + $0x420] sm:$0xff]
      %v887 = vld [vmem:[%s1 + $0x428] sm:$0xff]
      %v888 = vld [vmem:[%s1 + $0x430] sm:$0xff]
      %v889 = vld [vmem:[%s1 + $0x438] sm:$0xff]
      %v890 = vld [vmem:[%s1 + $0x440] sm:$0xff]
      %v891 = vld [vmem:[%s1 + $0x448] sm:$0xff]
      %v892 = vld [vmem:[%s1 + $0x450] sm:$0xff]
      %v893 = vld [vmem:[%s1 + $0x458] sm:$0xff]
      %v894 = vld [vmem:[%s1 + $0x460] sm:$0xff]
      %v895 = vld [vmem:[%s1 + $0x468] sm:$0xff]
      %v896 = vld [vmem:[%s1 + $0x470] sm:$0xff]
      %v897 = vld [vmem:[%s1 + $0x478] sm:$0xff]
      %898 = vmatprep.subr.mxu0 0.0
      %899 = vmatpush1.msra.mxu0 %v754
      %900 = vmatprep.subr.mxu0 0.0
      %901 = vmatpush1.msra.mxu0 %v755
      %902 = vmatprep.subr.mxu0 0.0
      %903 = vmatpush1.msra.mxu0 %v756
      %904 = vmatprep.subr.mxu0 0.0
      %905 = vmatpush1.msra.mxu0 %v757
      %906 = vmatprep.subr.mxu0 0.0
      %907 = vmatpush1.msra.mxu0 %v758
      %908 = vmatprep.subr.mxu0 0.0
      %909 = vmatpush1.msra.mxu0 %v759
      %910 = vmatprep.subr.mxu0 0.0
      %911 = vmatpush1.msra.mxu0 %v760
      %912 = vmatprep.subr.mxu0 0.0
      %913 = vmatpush1.msra.mxu0 %v761
      %914 = vmatprep.subr.mxu0 0.0
      %915 = vmatpush1.msra.mxu0 %v762
      %916 = vmatprep.subr.mxu0 0.0
      %917 = vmatpush1.msra.mxu0 %v763
      %918 = vmatprep.subr.mxu0 0.0
      %919 = vmatpush1.msra.mxu0 %v764
      %920 = vmatprep.subr.mxu0 0.0
      %921 = vmatpush1.msra.mxu0 %v765
      %922 = vmatprep.subr.mxu0 0.0
      %923 = vmatpush1.msra.mxu0 %v766
      %924 = vmatprep.subr.mxu0 0.0
      %925 = vmatpush1.msra.mxu0 %v767
      %926 = vmatprep.subr.mxu0 0.0
      %927 = vmatpush1.msra.mxu0 %v768
      %928 = vmatprep.subr.mxu0 0.0
      %929 = vmatpush1.msra.mxu0 %v769
      %930 = vmatprep.subr.mxu0 0.0
      %931 = vmatpush1.msra.mxu0 %v770
      %932 = vmatprep.subr.mxu0 0.0
      %933 = vmatpush1.msra.mxu0 %v771
      %934 = vmatprep.subr.mxu0 0.0
      %935 = vmatpush1.msra.mxu0 %v772
      %936 = vmatprep.subr.mxu0 0.0
      %937 = vmatpush1.msra.mxu0 %v773
      %938 = vmatprep.subr.mxu0 0.0
      %939 = vmatpush1.msra.mxu0 %v774
      %940 = vmatprep.subr.mxu0 0.0
      %941 = vmatpush1.msra.mxu0 %v775
      %942 = vmatprep.subr.mxu0 0.0
      %943 = vmatpush1.msra.mxu0 %v776
      %944 = vmatprep.subr.mxu0 0.0
      %945 = vmatpush1.msra.mxu0 %v777
      %946 = vmatprep.subr.mxu0 0.0
      %947 = vmatpush1.msra.mxu0 %v778
      %948 = vmatprep.subr.mxu0 0.0
      %949 = vmatpush1.msra.mxu0 %v779
      %950 = vmatprep.subr.mxu0 0.0
      %951 = vmatpush1.msra.mxu0 %v780
      %952 = vmatprep.subr.mxu0 0.0
      %953 = vmatpush1.msra.mxu0 %v781
      %954 = vmatprep.subr.mxu0 0.0
      %955 = vmatpush1.msra.mxu0 %v782
      %956 = vmatprep.subr.mxu0 0.0
      %957 = vmatpush1.msra.mxu0 %v783
      %958 = vmatprep.subr.mxu0 0.0
      %959 = vmatpush1.msra.mxu0 %v784
      %960 = vmatprep.subr.mxu0 0.0
      %961 = vmatpush1.msra.mxu0 %v785
      %962 = vmatprep.mubr.f32.mxu0 %v497
      %963 = vmatmul.mubr.f32.gmra.mrb[0].mxu0 %v465
      %v964 = vpop.f32.mrb[0].mxu0
      %v965 = vadd.f32 0.0, %v964
      %v966 = vpop.f32.mrb[0].mxu0
      %967 = vmatprep.mubr.f32.mxu0 %v498
      %968 = vmatmul.mubr.f32.gmra.mrb[0].mxu0 %v466
      %v969 = vpop.f32.mrb[0].mxu0
      %v970 = vadd.f32 0.0, %v969
      %v971 = vpop.f32.mrb[0].mxu0
      %972 = vmatprep.mubr.f32.mxu0 %v499
      %973 = vmatmul.mubr.f32.gmra.mrb[0].mxu0 %v467
      %v974 = vpop.f32.mrb[0].mxu0
      %v975 = vadd.f32 0.0, %v974
      %v976 = vpop.f32.mrb[0].mxu0
      %977 = vmatprep.mubr.f32.mxu0 %v500
      %978 = vmatmul.mubr.f32.gmra.mrb[0].mxu0 %v468
      %v979 = vpop.f32.mrb[0].mxu0
      %v980 = vadd.f32 0.0, %v979
      %v981 = vpop.f32.mrb[0].mxu0
      %982 = vmatprep.mubr.f32.mxu0 %v501
      %983 = vmatmul.mubr.f32.gmra.mrb[0].mxu0 %v469
      %v984 = vpop.f32.mrb[0].mxu0
      %v985 = vadd.f32 0.0, %v984
      %v986 = vpop.f32.mrb[0].mxu0
      %987 = vmatprep.mubr.f32.mxu0 %v502
      %988 = vmatmul.mubr.f32.gmra.mrb[0].mxu0 %v470
      %v989 = vpop.f32.mrb[0].mxu0
      %v990 = vadd.f32 0.0, %v989
      %v991 = vpop.f32.mrb[0].mxu0
      %992 = vmatprep.mubr.f32.mxu0 %v503
      %993 = vmatmul.mubr.f32.gmra.mrb[0].mxu0 %v471
      %v994 = vpop.f32.mrb[0].mxu0
      %v995 = vadd.f32 0.0, %v994
      %v996 = vpop.f32.mrb[0].mxu0
      %997 = vmatprep.mubr.f32.mxu0 %v504
      %998 = vmatmul.mubr.f32.gmra.mrb[0].mxu0 %v472
      %v999 = vpop.f32.mrb[0].mxu0
      %v1000 = vadd.f32 0.0, %v999
      %v1001 = vpop.f32.mrb[0].mxu0
      %1002 = vmatprep.mubr.f32.mxu0 %v505
      %1003 = vmatmul.mubr.f32.gmra.mrb[0].mxu0 %v473
      %v1004 = vpop.f32.mrb[0].mxu0
      %v1005 = vadd.f32 0.0, %v1004
      %v1006 = vpop.f32.mrb[0].mxu0
      %1007 = vmatprep.mubr.f32.mxu0 %v506
      %1008 = vmatmul.mubr.f32.gmra.mrb[0].mxu0 %v474
      %v1009 = vpop.f32.mrb[0].mxu0
      %v1010 = vadd.f32 0.0, %v1009
      %v1011 = vpop.f32.mrb[0].mxu0
      %1012 = vmatprep.mubr.f32.mxu0 %v507
      %1013 = vmatmul.mubr.f32.gmra.mrb[0].mxu0 %v475
      %v1014 = vpop.f32.mrb[0].mxu0
      %v1015 = vadd.f32 0.0, %v1014
      %v1016 = vpop.f32.mrb[0].mxu0
      %1017 = vmatprep.mubr.f32.mxu0 %v508
      %1018 = vmatmul.mubr.f32.gmra.mrb[0].mxu0 %v476
      %v1019 = vpop.f32.mrb[0].mxu0
      %v1020 = vadd.f32 0.0, %v1019
      %v1021 = vpop.f32.mrb[0].mxu0
      %1022 = vmatprep.mubr.f32.mxu0 %v509
      %1023 = vmatmul.mubr.f32.gmra.mrb[0].mxu0 %v477
      %v1024 = vpop.f32.mrb[0].mxu0
      %v1025 = vadd.f32 0.0, %v1024
      %v1026 = vpop.f32.mrb[0].mxu0
      %1027 = vmatprep.mubr.f32.mxu0 %v510
      %1028 = vmatmul.mubr.f32.gmra.mrb[0].mxu0 %v478
      %v1029 = vpop.f32.mrb[0].mxu0
      %v1030 = vadd.f32 0.0, %v1029
      %v1031 = vpop.f32.mrb[0].mxu0
      %1032 = vmatprep.mubr.f32.mxu0 %v511
      %1033 = vmatmul.mubr.f32.gmra.mrb[0].mxu0 %v479
      %v1034 = vpop.f32.mrb[0].mxu0
      %v1035 = vadd.f32 0.0, %v1034
      %v1036 = vpop.f32.mrb[0].mxu0
      %1037 = vmatprep.mubr.f32.mxu0 %v512
      %1038 = vmatmul.mubr.f32.gmra.mrb[0].mxu0 %v480
      %v1039 = vpop.f32.mrb[0].mxu0
      %v1040 = vadd.f32 0.0, %v1039
      %v1041 = vpop.f32.mrb[0].mxu0
      %1042 = vmatprep.mubr.f32.mxu0 %v513
      %1043 = vmatmul.mubr.f32.gmra.mrb[0].mxu0 %v481
      %v1044 = vpop.f32.mrb[0].mxu0
      %v1045 = vadd.f32 0.0, %v1044
      %v1046 = vpop.f32.mrb[0].mxu0
      %1047 = vmatprep.mubr.f32.mxu0 %v514
      %1048 = vmatmul.mubr.f32.gmra.mrb[0].mxu0 %v482
      %v1049 = vpop.f32.mrb[0].mxu0
      %v1050 = vadd.f32 0.0, %v1049
      %v1051 = vpop.f32.mrb[0].mxu0
      %1052 = vmatprep.mubr.f32.mxu0 %v515
      %1053 = vmatmul.mubr.f32.gmra.mrb[0].mxu0 %v483
      %v1054 = vpop.f32.mrb[0].mxu0
      %v1055 = vadd.f32 0.0, %v1054
      %v1056 = vpop.f32.mrb[0].mxu0
      %1057 = vmatprep.mubr.f32.mxu0 %v516
      %1058 = vmatmul.mubr.f32.gmra.mrb[0].mxu0 %v484
      %v1059 = vpop.f32.mrb[0].mxu0
      %v1060 = vadd.f32 0.0, %v1059
      %v1061 = vpop.f32.mrb[0].mxu0
      %1062 = vmatprep.mubr.f32.mxu0 %v517
      %1063 = vmatmul.mubr.f32.gmra.mrb[0].mxu0 %v485
      %v1064 = vpop.f32.mrb[0].mxu0
      %v1065 = vadd.f32 0.0, %v1064
      %v1066 = vpop.f32.mrb[0].mxu0
      %1067 = vmatprep.mubr.f32.mxu0 %v518
      %1068 = vmatmul.mubr.f32.gmra.mrb[0].mxu0 %v486
      %v1069 = vpop.f32.mrb[0].mxu0
      %v1070 = vadd.f32 0.0, %v1069
      %v1071 = vpop.f32.mrb[0].mxu0
      %1072 = vmatprep.mubr.f32.mxu0 %v519
      %1073 = vmatmul.mubr.f32.gmra.mrb[0].mxu0 %v487
      %v1074 = vpop.f32.mrb[0].mxu0
      %v1075 = vadd.f32 0.0, %v1074
      %v1076 = vpop.f32.mrb[0].mxu0
      %1077 = vmatprep.mubr.f32.mxu0 %v520
      %1078 = vmatmul.mubr.f32.gmra.mrb[0].mxu0 %v488
      %v1079 = vpop.f32.mrb[0].mxu0
      %v1080 = vadd.f32 0.0, %v1079
      %v1081 = vpop.f32.mrb[0].mxu0
      %1082 = vmatprep.mubr.f32.mxu0 %v521
      %1083 = vmatmul.mubr.f32.gmra.mrb[0].mxu0 %v489
      %v1084 = vpop.f32.mrb[0].mxu0
      %v1085 = vadd.f32 0.0, %v1084
      %v1086 = vpop.f32.mrb[0].mxu0
      %1087 = vmatprep.mubr.f32.mxu0 %v522
      %1088 = vmatmul.mubr.f32.gmra.mrb[0].mxu0 %v490
      %v1089 = vpop.f32.mrb[0].mxu0
      %v1090 = vadd.f32 0.0, %v1089
      %v1091 = vpop.f32.mrb[0].mxu0
      %1092 = vmatprep.mubr.f32.mxu0 %v523
      %1093 = vmatmul.mubr.f32.gmra.mrb[0].mxu0 %v491
      %v1094 = vpop.f32.mrb[0].mxu0
      %v1095 = vadd.f32 0.0, %v1094
      %v1096 = vpop.f32.mrb[0].mxu0
      %1097 = vmatprep.mubr.f32.mxu0 %v524
      %1098 = vmatmul.mubr.f32.gmra.mrb[0].mxu0 %v492
      %v1099 = vpop.f32.mrb[0].mxu0
      %v1100 = vadd.f32 0.0, %v1099
      %v1101 = vpop.f32.mrb[0].mxu0
      %1102 = vmatprep.mubr.f32.mxu0 %v525
      %1103 = vmatmul.mubr.f32.gmra.mrb[0].mxu0 %v493
      %v1104 = vpop.f32.mrb[0].mxu0
      %v1105 = vadd.f32 0.0, %v1104
      %v1106 = vpop.f32.mrb[0].mxu0
      %1107 = vmatprep.mubr.f32.mxu0 %v526
      %1108 = vmatmul.mubr.f32.gmra.mrb[0].mxu0 %v494
      %v1109 = vpop.f32.mrb[0].mxu0
      %v1110 = vadd.f32 0.0, %v1109
      %v1111 = vpop.f32.mrb[0].mxu0
      %1112 = vmatprep.mubr.f32.mxu0 %v527
      %1113 = vmatmul.mubr.f32.gmra.mrb[0].mxu0 %v495
      %v1114 = vpop.f32.mrb[0].mxu0
      %v1115 = vadd.f32 0.0, %v1114
      %v1116 = vpop.f32.mrb[0].mxu0
      %1117 = vmatprep.mubr.f32.mxu0 %v528
      %1118 = vmatmul.mubr.f32.gmra.mrb[0].mxu0 %v496
      %v1119 = vpop.f32.mrb[0].mxu0
      %v1120 = vadd.f32 0.0, %v1119
      %v1121 = vpop.f32.mrb[0].mxu0
      %1122 = vdwg.mxu0
      %1123 = vmatprep.subr.mxu0 0.0
      %1124 = vmatpush1.msra.mxu0 %v786
      %1125 = vmatprep.subr.mxu0 0.0
      %1126 = vmatpush1.msra.mxu0 %v787
      %1127 = vmatprep.subr.mxu0 0.0
      %1128 = vmatpush1.msra.mxu0 %v788
      %1129 = vmatprep.subr.mxu0 0.0
      %1130 = vmatpush1.msra.mxu0 %v789
      %1131 = vmatprep.subr.mxu0 0.0
      %1132 = vmatpush1.msra.mxu0 %v790
      %1133 = vmatprep.subr.mxu0 0.0
      %1134 = vmatpush1.msra.mxu0 %v791
      %1135 = vmatprep.subr.mxu0 0.0
      %1136 = vmatpush1.msra.mxu0 %v792
      %1137 = vmatprep.subr.mxu0 0.0
      %1138 = vmatpush1.msra.mxu0 %v793
      %1139 = vmatprep.subr.mxu0 0.0
      %1140 = vmatpush1.msra.mxu0 %v794
      %1141 = vmatprep.subr.mxu0 0.0
      %1142 = vmatpush1.msra.mxu0 %v795
      %1143 = vmatprep.subr.mxu0 0.0
      %1144 = vmatpush1.msra.mxu0 %v796
      %1145 = vmatprep.subr.mxu0 0.0
      %1146 = vmatpush1.msra.mxu0 %v797
      %1147 = vmatprep.subr.mxu0 0.0
      %1148 = vmatpush1.msra.mxu0 %v798
      %1149 = vmatprep.subr.mxu0 0.0
      %1150 = vmatpush1.msra.mxu0 %v799
      %1151 = vmatprep.subr.mxu0 0.0
      %1152 = vmatpush1.msra.mxu0 %v800
      %1153 = vmatprep.subr.mxu0 0.0
      %1154 = vmatpush1.msra.mxu0 %v801
      %1155 = vmatprep.subr.mxu0 0.0
      %1156 = vmatpush1.msra.mxu0 %v802
      %1157 = vmatprep.subr.mxu0 0.0
      %1158 = vmatpush1.msra.mxu0 %v803
      %1159 = vmatprep.subr.mxu0 0.0
      %1160 = vmatpush1.msra.mxu0 %v804
      %1161 = vmatprep.subr.mxu0 0.0
      %1162 = vmatpush1.msra.mxu0 %v805
      %1163 = vmatprep.subr.mxu0 0.0
      %1164 = vmatpush1.msra.mxu0 %v806
      %1165 = vmatprep.subr.mxu0 0.0
      %1166 = vmatpush1.msra.mxu0 %v807
      %1167 = vmatprep.subr.mxu0 0.0
      %1168 = vmatpush1.msra.mxu0 %v808
      %1169 = vmatprep.subr.mxu0 0.0
      %1170 = vmatpush1.msra.mxu0 %v809
      %1171 = vmatprep.subr.mxu0 0.0
      %1172 = vmatpush1.msra.mxu0 %v810
      %1173 = vmatprep.subr.mxu0 0.0
      %1174 = vmatpush1.msra.mxu0 %v811
      %1175 = vmatprep.subr.mxu0 0.0
      %1176 = vmatpush1.msra.mxu0 %v812
      %1177 = vmatprep.subr.mxu0 0.0
      %1178 = vmatpush1.msra.mxu0 %v813
      %1179 = vmatprep.subr.mxu0 0.0
      %1180 = vmatpush1.msra.mxu0 %v814
      %1181 = vmatprep.subr.mxu0 0.0
      %1182 = vmatpush1.msra.mxu0 %v815
      %1183 = vmatprep.subr.mxu0 0.0
      %1184 = vmatpush1.msra.mxu0 %v816
      %1185 = vmatprep.subr.mxu0 0.0
      %1186 = vmatpush1.msra.mxu0 %v817
      %1187 = vmatprep.mubr.f32.mxu0 %v561
      %1188 = vmatmul.mubr.f32.gmra.mrb[0].mxu0 %v529
      %v1189 = vpop.f32.mrb[0].mxu0
      %v1190 = vadd.f32 %v965, %v1189
      %v1191 = vpop.f32.mrb[0].mxu0
      %1192 = vmatprep.mubr.f32.mxu0 %v562
      %1193 = vmatmul.mubr.f32.gmra.mrb[0].mxu0 %v530
      %v1194 = vpop.f32.mrb[0].mxu0
      %v1195 = vadd.f32 %v970, %v1194
      %v1196 = vpop.f32.mrb[0].mxu0
      %1197 = vmatprep.mubr.f32.mxu0 %v563
      %1198 = vmatmul.mubr.f32.gmra.mrb[0].mxu0 %v531
      %v1199 = vpop.f32.mrb[0].mxu0
      %v1200 = vadd.f32 %v975, %v1199
      %v1201 = vpop.f32.mrb[0].mxu0
      %1202 = vmatprep.mubr.f32.mxu0 %v564
      %1203 = vmatmul.mubr.f32.gmra.mrb[0].mxu0 %v532
      %v1204 = vpop.f32.mrb[0].mxu0
      %v1205 = vadd.f32 %v980, %v1204
      %v1206 = vpop.f32.mrb[0].mxu0
      %1207 = vmatprep.mubr.f32.mxu0 %v565
      %1208 = vmatmul.mubr.f32.gmra.mrb[0].mxu0 %v533
      %v1209 = vpop.f32.mrb[0].mxu0
      %v1210 = vadd.f32 %v985, %v1209
      %v1211 = vpop.f32.mrb[0].mxu0
      %1212 = vmatprep.mubr.f32.mxu0 %v566
      %1213 = vmatmul.mubr.f32.gmra.mrb[0].mxu0 %v534
      %v1214 = vpop.f32.mrb[0].mxu0
      %v1215 = vadd.f32 %v990, %v1214
      %v1216 = vpop.f32.mrb[0].mxu0
      %1217 = vmatprep.mubr.f32.mxu0 %v567
      %1218 = vmatmul.mubr.f32.gmra.mrb[0].mxu0 %v535
      %v1219 = vpop.f32.mrb[0].mxu0
      %v1220 = vadd.f32 %v995, %v1219
      %v1221 = vpop.f32.mrb[0].mxu0
      %1222 = vmatprep.mubr.f32.mxu0 %v568
      %1223 = vmatmul.mubr.f32.gmra.mrb[0].mxu0 %v536
      %v1224 = vpop.f32.mrb[0].mxu0
      %v1225 = vadd.f32 %v1000, %v1224
      %v1226 = vpop.f32.mrb[0].mxu0
      %1227 = vmatprep.mubr.f32.mxu0 %v569
      %1228 = vmatmul.mubr.f32.gmra.mrb[0].mxu0 %v537
      %v1229 = vpop.f32.mrb[0].mxu0
      %v1230 = vadd.f32 %v1005, %v1229
      %v1231 = vpop.f32.mrb[0].mxu0
      %1232 = vmatprep.mubr.f32.mxu0 %v570
      %1233 = vmatmul.mubr.f32.gmra.mrb[0].mxu0 %v538
      %v1234 = vpop.f32.mrb[0].mxu0
      %v1235 = vadd.f32 %v1010, %v1234
      %v1236 = vpop.f32.mrb[0].mxu0
      %1237 = vmatprep.mubr.f32.mxu0 %v571
      %1238 = vmatmul.mubr.f32.gmra.mrb[0].mxu0 %v539
      %v1239 = vpop.f32.mrb[0].mxu0
      %v1240 = vadd.f32 %v1015, %v1239
      %v1241 = vpop.f32.mrb[0].mxu0
      %1242 = vmatprep.mubr.f32.mxu0 %v572
      %1243 = vmatmul.mubr.f32.gmra.mrb[0].mxu0 %v540
      %v1244 = vpop.f32.mrb[0].mxu0
      %v1245 = vadd.f32 %v1020, %v1244
      %v1246 = vpop.f32.mrb[0].mxu0
      %1247 = vmatprep.mubr.f32.mxu0 %v573
      %1248 = vmatmul.mubr.f32.gmra.mrb[0].mxu0 %v541
      %v1249 = vpop.f32.mrb[0].mxu0
      %v1250 = vadd.f32 %v1025, %v1249
      %v1251 = vpop.f32.mrb[0].mxu0
      %1252 = vmatprep.mubr.f32.mxu0 %v574
      %1253 = vmatmul.mubr.f32.gmra.mrb[0].mxu0 %v542
      %v1254 = vpop.f32.mrb[0].mxu0
      %v1255 = vadd.f32 %v1030, %v1254
      %v1256 = vpop.f32.mrb[0].mxu0
      %1257 = vmatprep.mubr.f32.mxu0 %v575
      %1258 = vmatmul.mubr.f32.gmra.mrb[0].mxu0 %v543
      %v1259 = vpop.f32.mrb[0].mxu0
      %v1260 = vadd.f32 %v1035, %v1259
      %v1261 = vpop.f32.mrb[0].mxu0
      %1262 = vmatprep.mubr.f32.mxu0 %v576
      %1263 = vmatmul.mubr.f32.gmra.mrb[0].mxu0 %v544
      %v1264 = vpop.f32.mrb[0].mxu0
      %v1265 = vadd.f32 %v1040, %v1264
      %v1266 = vpop.f32.mrb[0].mxu0
      %1267 = vmatprep.mubr.f32.mxu0 %v577
      %1268 = vmatmul.mubr.f32.gmra.mrb[0].mxu0 %v545
      %v1269 = vpop.f32.mrb[0].mxu0
      %v1270 = vadd.f32 %v1045, %v1269
      %v1271 = vpop.f32.mrb[0].mxu0
      %1272 = vmatprep.mubr.f32.mxu0 %v578
      %1273 = vmatmul.mubr.f32.gmra.mrb[0].mxu0 %v546
      %v1274 = vpop.f32.mrb[0].mxu0
      %v1275 = vadd.f32 %v1050, %v1274
      %v1276 = vpop.f32.mrb[0].mxu0
      %1277 = vmatprep.mubr.f32.mxu0 %v579
      %1278 = vmatmul.mubr.f32.gmra.mrb[0].mxu0 %v547
      %v1279 = vpop.f32.mrb[0].mxu0
      %v1280 = vadd.f32 %v1055, %v1279
      %v1281 = vpop.f32.mrb[0].mxu0
      %1282 = vmatprep.mubr.f32.mxu0 %v580
      %1283 = vmatmul.mubr.f32.gmra.mrb[0].mxu0 %v548
      %v1284 = vpop.f32.mrb[0].mxu0
      %v1285 = vadd.f32 %v1060, %v1284
      %v1286 = vpop.f32.mrb[0].mxu0
      %1287 = vmatprep.mubr.f32.mxu0 %v581
      %1288 = vmatmul.mubr.f32.gmra.mrb[0].mxu0 %v549
      %v1289 = vpop.f32.mrb[0].mxu0
      %v1290 = vadd.f32 %v1065, %v1289
      %v1291 = vpop.f32.mrb[0].mxu0
      %1292 = vmatprep.mubr.f32.mxu0 %v582
      %1293 = vmatmul.mubr.f32.gmra.mrb[0].mxu0 %v550
      %v1294 = vpop.f32.mrb[0].mxu0
      %v1295 = vadd.f32 %v1070, %v1294
      %v1296 = vpop.f32.mrb[0].mxu0
      %1297 = vmatprep.mubr.f32.mxu0 %v583
      %1298 = vmatmul.mubr.f32.gmra.mrb[0].mxu0 %v551
      %v1299 = vpop.f32.mrb[0].mxu0
      %v1300 = vadd.f32 %v1075, %v1299
      %v1301 = vpop.f32.mrb[0].mxu0
      %1302 = vmatprep.mubr.f32.mxu0 %v584
      %1303 = vmatmul.mubr.f32.gmra.mrb[0].mxu0 %v552
      %v1304 = vpop.f32.mrb[0].mxu0
      %v1305 = vadd.f32 %v1080, %v1304
      %v1306 = vpop.f32.mrb[0].mxu0
      %1307 = vmatprep.mubr.f32.mxu0 %v585
      %1308 = vmatmul.mubr.f32.gmra.mrb[0].mxu0 %v553
      %v1309 = vpop.f32.mrb[0].mxu0
      %v1310 = vadd.f32 %v1085, %v1309
      %v1311 = vpop.f32.mrb[0].mxu0
      %1312 = vmatprep.mubr.f32.mxu0 %v586
      %1313 = vmatmul.mubr.f32.gmra.mrb[0].mxu0 %v554
      %v1314 = vpop.f32.mrb[0].mxu0
      %v1315 = vadd.f32 %v1090, %v1314
      %v1316 = vpop.f32.mrb[0].mxu0
      %1317 = vmatprep.mubr.f32.mxu0 %v587
      %1318 = vmatmul.mubr.f32.gmra.mrb[0].mxu0 %v555
      %v1319 = vpop.f32.mrb[0].mxu0
      %v1320 = vadd.f32 %v1095, %v1319
      %v1321 = vpop.f32.mrb[0].mxu0
      %1322 = vmatprep.mubr.f32.mxu0 %v588
      %1323 = vmatmul.mubr.f32.gmra.mrb[0].mxu0 %v556
      %v1324 = vpop.f32.mrb[0].mxu0
      %v1325 = vadd.f32 %v1100, %v1324
      %v1326 = vpop.f32.mrb[0].mxu0
      %1327 = vmatprep.mubr.f32.mxu0 %v589
      %1328 = vmatmul.mubr.f32.gmra.mrb[0].mxu0 %v557
      %v1329 = vpop.f32.mrb[0].mxu0
      %v1330 = vadd.f32 %v1105, %v1329
      %v1331 = vpop.f32.mrb[0].mxu0
      %1332 = vmatprep.mubr.f32.mxu0 %v590
      %1333 = vmatmul.mubr.f32.gmra.mrb[0].mxu0 %v558
      %v1334 = vpop.f32.mrb[0].mxu0
      %v1335 = vadd.f32 %v1110, %v1334
      %v1336 = vpop.f32.mrb[0].mxu0
      %1337 = vmatprep.mubr.f32.mxu0 %v591
      %1338 = vmatmul.mubr.f32.gmra.mrb[0].mxu0 %v559
      %v1339 = vpop.f32.mrb[0].mxu0
      %v1340 = vadd.f32 %v1115, %v1339
      %v1341 = vpop.f32.mrb[0].mxu0
      %1342 = vmatprep.mubr.f32.mxu0 %v592
      %1343 = vmatmul.mubr.f32.gmra.mrb[0].mxu0 %v560
      %v1344 = vpop.f32.mrb[0].mxu0
      %v1345 = vadd.f32 %v1120, %v1344
      %v1346 = vpop.f32.mrb[0].mxu0
      %1347 = vdwg.mxu0
      %1348 = vmatprep.subr.mxu0 0.0
      %1349 = vmatpush1.msra.mxu0 %v818
      %1350 = vmatprep.subr.mxu0 0.0
      %1351 = vmatpush1.msra.mxu0 %v819
      %1352 = vmatprep.subr.mxu0 0.0
      %1353 = vmatpush1.msra.mxu0 %v820
      %1354 = vmatprep.subr.mxu0 0.0
      %1355 = vmatpush1.msra.mxu0 %v821
      %1356 = vmatprep.subr.mxu0 0.0
      %1357 = vmatpush1.msra.mxu0 %v822
      %1358 = vmatprep.subr.mxu0 0.0
      %1359 = vmatpush1.msra.mxu0 %v823
      %1360 = vmatprep.subr.mxu0 0.0
      %1361 = vmatpush1.msra.mxu0 %v824
      %1362 = vmatprep.subr.mxu0 0.0
      %1363 = vmatpush1.msra.mxu0 %v825
      %1364 = vmatprep.subr.mxu0 0.0
      %1365 = vmatpush1.msra.mxu0 %v826
      %1366 = vmatprep.subr.mxu0 0.0
      %1367 = vmatpush1.msra.mxu0 %v827
      %1368 = vmatprep.subr.mxu0 0.0
      %1369 = vmatpush1.msra.mxu0 %v828
      %1370 = vmatprep.subr.mxu0 0.0
      %1371 = vmatpush1.msra.mxu0 %v829
      %1372 = vmatprep.subr.mxu0 0.0
      %1373 = vmatpush1.msra.mxu0 %v830
      %1374 = vmatprep.subr.mxu0 0.0
      %1375 = vmatpush1.msra.mxu0 %v831
      %1376 = vmatprep.subr.mxu0 0.0
      %1377 = vmatpush1.msra.mxu0 %v832
      %1378 = vmatprep.subr.mxu0 0.0
      %1379 = vmatpush1.msra.mxu0 %v833
      %1380 = vmatprep.subr.mxu0 0.0
      %1381 = vmatpush1.msra.mxu0 %v834
      %1382 = vmatprep.subr.mxu0 0.0
      %1383 = vmatpush1.msra.mxu0 %v835
      %1384 = vmatprep.subr.mxu0 0.0
      %1385 = vmatpush1.msra.mxu0 %v836
      %1386 = vmatprep.subr.mxu0 0.0
      %1387 = vmatpush1.msra.mxu0 %v837
      %1388 = vmatprep.subr.mxu0 0.0
      %1389 = vmatpush1.msra.mxu0 %v838
      %1390 = vmatprep.subr.mxu0 0.0
      %1391 = vmatpush1.msra.mxu0 %v839
      %1392 = vmatprep.subr.mxu0 0.0
      %1393 = vmatpush1.msra.mxu0 %v840
      %1394 = vmatprep.subr.mxu0 0.0
      %1395 = vmatpush1.msra.mxu0 %v841
      %1396 = vmatprep.subr.mxu0 0.0
      %1397 = vmatpush1.msra.mxu0 %v842
      %1398 = vmatprep.subr.mxu0 0.0
      %1399 = vmatpush1.msra.mxu0 %v843
      %1400 = vmatprep.subr.mxu0 0.0
      %1401 = vmatpush1.msra.mxu0 %v844
      %1402 = vmatprep.subr.mxu0 0.0
      %1403 = vmatpush1.msra.mxu0 %v845
      %1404 = vmatprep.subr.mxu0 0.0
      %1405 = vmatpush1.msra.mxu0 %v846
      %1406 = vmatprep.subr.mxu0 0.0
      %1407 = vmatpush1.msra.mxu0 %v847
      %1408 = vmatprep.subr.mxu0 0.0
      %1409 = vmatpush1.msra.mxu0 %v848
      %1410 = vmatprep.subr.mxu0 0.0
      %1411 = vmatpush1.msra.mxu0 %v849
      %1412 = vmatprep.mubr.f32.mxu0 %v625
      %1413 = vmatmul.mubr.f32.gmra.mrb[0].mxu0 %v593
      %v1414 = vpop.f32.mrb[0].mxu0
      %v1415 = vadd.f32 %v1190, %v1414
      %v1416 = vpop.f32.mrb[0].mxu0
      %1417 = vmatprep.mubr.f32.mxu0 %v626
      %1418 = vmatmul.mubr.f32.gmra.mrb[0].mxu0 %v594
      %v1419 = vpop.f32.mrb[0].mxu0
      %v1420 = vadd.f32 %v1195, %v1419
      %v1421 = vpop.f32.mrb[0].mxu0
      %1422 = vmatprep.mubr.f32.mxu0 %v627
      %1423 = vmatmul.mubr.f32.gmra.mrb[0].mxu0 %v595
      %v1424 = vpop.f32.mrb[0].mxu0
      %v1425 = vadd.f32 %v1200, %v1424
      %v1426 = vpop.f32.mrb[0].mxu0
      %1427 = vmatprep.mubr.f32.mxu0 %v628
      %1428 = vmatmul.mubr.f32.gmra.mrb[0].mxu0 %v596
      %v1429 = vpop.f32.mrb[0].mxu0
      %v1430 = vadd.f32 %v1205, %v1429
      %v1431 = vpop.f32.mrb[0].mxu0
      %1432 = vmatprep.mubr.f32.mxu0 %v629
      %1433 = vmatmul.mubr.f32.gmra.mrb[0].mxu0 %v597
      %v1434 = vpop.f32.mrb[0].mxu0
      %v1435 = vadd.f32 %v1210, %v1434
      %v1436 = vpop.f32.mrb[0].mxu0
      %1437 = vmatprep.mubr.f32.mxu0 %v630
      %1438 = vmatmul.mubr.f32.gmra.mrb[0].mxu0 %v598
      %v1439 = vpop.f32.mrb[0].mxu0
      %v1440 = vadd.f32 %v1215, %v1439
      %v1441 = vpop.f32.mrb[0].mxu0
      %1442 = vmatprep.mubr.f32.mxu0 %v631
      %1443 = vmatmul.mubr.f32.gmra.mrb[0].mxu0 %v599
      %v1444 = vpop.f32.mrb[0].mxu0
      %v1445 = vadd.f32 %v1220, %v1444
      %v1446 = vpop.f32.mrb[0].mxu0
      %1447 = vmatprep.mubr.f32.mxu0 %v632
      %1448 = vmatmul.mubr.f32.gmra.mrb[0].mxu0 %v600
      %v1449 = vpop.f32.mrb[0].mxu0
      %v1450 = vadd.f32 %v1225, %v1449
      %v1451 = vpop.f32.mrb[0].mxu0
      %1452 = vmatprep.mubr.f32.mxu0 %v633
      %1453 = vmatmul.mubr.f32.gmra.mrb[0].mxu0 %v601
      %v1454 = vpop.f32.mrb[0].mxu0
      %v1455 = vadd.f32 %v1230, %v1454
      %v1456 = vpop.f32.mrb[0].mxu0
      %1457 = vmatprep.mubr.f32.mxu0 %v634
      %1458 = vmatmul.mubr.f32.gmra.mrb[0].mxu0 %v602
      %v1459 = vpop.f32.mrb[0].mxu0
      %v1460 = vadd.f32 %v1235, %v1459
      %v1461 = vpop.f32.mrb[0].mxu0
      %1462 = vmatprep.mubr.f32.mxu0 %v635
      %1463 = vmatmul.mubr.f32.gmra.mrb[0].mxu0 %v603
      %v1464 = vpop.f32.mrb[0].mxu0
      %v1465 = vadd.f32 %v1240, %v1464
      %v1466 = vpop.f32.mrb[0].mxu0
      %1467 = vmatprep.mubr.f32.mxu0 %v636
      %1468 = vmatmul.mubr.f32.gmra.mrb[0].mxu0 %v604
      %v1469 = vpop.f32.mrb[0].mxu0
      %v1470 = vadd.f32 %v1245, %v1469
      %v1471 = vpop.f32.mrb[0].mxu0
      %1472 = vmatprep.mubr.f32.mxu0 %v637
      %1473 = vmatmul.mubr.f32.gmra.mrb[0].mxu0 %v605
      %v1474 = vpop.f32.mrb[0].mxu0
      %v1475 = vadd.f32 %v1250, %v1474
      %v1476 = vpop.f32.mrb[0].mxu0
      %1477 = vmatprep.mubr.f32.mxu0 %v638
      %1478 = vmatmul.mubr.f32.gmra.mrb[0].mxu0 %v606
      %v1479 = vpop.f32.mrb[0].mxu0
      %v1480 = vadd.f32 %v1255, %v1479
      %v1481 = vpop.f32.mrb[0].mxu0
      %1482 = vmatprep.mubr.f32.mxu0 %v639
      %1483 = vmatmul.mubr.f32.gmra.mrb[0].mxu0 %v607
      %v1484 = vpop.f32.mrb[0].mxu0
      %v1485 = vadd.f32 %v1260, %v1484
      %v1486 = vpop.f32.mrb[0].mxu0
      %1487 = vmatprep.mubr.f32.mxu0 %v640
      %1488 = vmatmul.mubr.f32.gmra.mrb[0].mxu0 %v608
      %v1489 = vpop.f32.mrb[0].mxu0
      %v1490 = vadd.f32 %v1265, %v1489
      %v1491 = vpop.f32.mrb[0].mxu0
      %1492 = vmatprep.mubr.f32.mxu0 %v641
      %1493 = vmatmul.mubr.f32.gmra.mrb[0].mxu0 %v609
      %v1494 = vpop.f32.mrb[0].mxu0
      %v1495 = vadd.f32 %v1270, %v1494
      %v1496 = vpop.f32.mrb[0].mxu0
      %1497 = vmatprep.mubr.f32.mxu0 %v642
      %1498 = vmatmul.mubr.f32.gmra.mrb[0].mxu0 %v610
      %v1499 = vpop.f32.mrb[0].mxu0
      %v1500 = vadd.f32 %v1275, %v1499
      %v1501 = vpop.f32.mrb[0].mxu0
      %1502 = vmatprep.mubr.f32.mxu0 %v643
      %1503 = vmatmul.mubr.f32.gmra.mrb[0].mxu0 %v611
      %v1504 = vpop.f32.mrb[0].mxu0
      %v1505 = vadd.f32 %v1280, %v1504
      %v1506 = vpop.f32.mrb[0].mxu0
      %1507 = vmatprep.mubr.f32.mxu0 %v644
      %1508 = vmatmul.mubr.f32.gmra.mrb[0].mxu0 %v612
      %v1509 = vpop.f32.mrb[0].mxu0
      %v1510 = vadd.f32 %v1285, %v1509
      %v1511 = vpop.f32.mrb[0].mxu0
      %1512 = vmatprep.mubr.f32.mxu0 %v645
      %1513 = vmatmul.mubr.f32.gmra.mrb[0].mxu0 %v613
      %v1514 = vpop.f32.mrb[0].mxu0
      %v1515 = vadd.f32 %v1290, %v1514
      %v1516 = vpop.f32.mrb[0].mxu0
      %1517 = vmatprep.mubr.f32.mxu0 %v646
      %1518 = vmatmul.mubr.f32.gmra.mrb[0].mxu0 %v614
      %v1519 = vpop.f32.mrb[0].mxu0
      %v1520 = vadd.f32 %v1295, %v1519
      %v1521 = vpop.f32.mrb[0].mxu0
      %1522 = vmatprep.mubr.f32.mxu0 %v647
      %1523 = vmatmul.mubr.f32.gmra.mrb[0].mxu0 %v615
      %v1524 = vpop.f32.mrb[0].mxu0
      %v1525 = vadd.f32 %v1300, %v1524
      %v1526 = vpop.f32.mrb[0].mxu0
      %1527 = vmatprep.mubr.f32.mxu0 %v648
      %1528 = vmatmul.mubr.f32.gmra.mrb[0].mxu0 %v616
      %v1529 = vpop.f32.mrb[0].mxu0
      %v1530 = vadd.f32 %v1305, %v1529
      %v1531 = vpop.f32.mrb[0].mxu0
      %1532 = vmatprep.mubr.f32.mxu0 %v649
      %1533 = vmatmul.mubr.f32.gmra.mrb[0].mxu0 %v617
      %v1534 = vpop.f32.mrb[0].mxu0
      %v1535 = vadd.f32 %v1310, %v1534
      %v1536 = vpop.f32.mrb[0].mxu0
      %1537 = vmatprep.mubr.f32.mxu0 %v650
      %1538 = vmatmul.mubr.f32.gmra.mrb[0].mxu0 %v618
      %v1539 = vpop.f32.mrb[0].mxu0
      %v1540 = vadd.f32 %v1315, %v1539
      %v1541 = vpop.f32.mrb[0].mxu0
      %1542 = vmatprep.mubr.f32.mxu0 %v651
      %1543 = vmatmul.mubr.f32.gmra.mrb[0].mxu0 %v619
      %v1544 = vpop.f32.mrb[0].mxu0
      %v1545 = vadd.f32 %v1320, %v1544
      %v1546 = vpop.f32.mrb[0].mxu0
      %1547 = vmatprep.mubr.f32.mxu0 %v652
      %1548 = vmatmul.mubr.f32.gmra.mrb[0].mxu0 %v620
      %v1549 = vpop.f32.mrb[0].mxu0
      %v1550 = vadd.f32 %v1325, %v1549
      %v1551 = vpop.f32.mrb[0].mxu0
      %1552 = vmatprep.mubr.f32.mxu0 %v653
      %1553 = vmatmul.mubr.f32.gmra.mrb[0].mxu0 %v621
      %v1554 = vpop.f32.mrb[0].mxu0
      %v1555 = vadd.f32 %v1330, %v1554
      %v1556 = vpop.f32.mrb[0].mxu0
      %1557 = vmatprep.mubr.f32.mxu0 %v654
      %1558 = vmatmul.mubr.f32.gmra.mrb[0].mxu0 %v622
      %v1559 = vpop.f32.mrb[0].mxu0
      %v1560 = vadd.f32 %v1335, %v1559
      %v1561 = vpop.f32.mrb[0].mxu0
      %1562 = vmatprep.mubr.f32.mxu0 %v655
      %1563 = vmatmul.mubr.f32.gmra.mrb[0].mxu0 %v623
      %v1564 = vpop.f32.mrb[0].mxu0
      %v1565 = vadd.f32 %v1340, %v1564
      %v1566 = vpop.f32.mrb[0].mxu0
      %1567 = vmatprep.mubr.f32.mxu0 %v656
      %1568 = vmatmul.mubr.f32.gmra.mrb[0].mxu0 %v624
      %v1569 = vpop.f32.mrb[0].mxu0
      %v1570 = vadd.f32 %v1345, %v1569
      %v1571 = vpop.f32.mrb[0].mxu0
      %1572 = vdwg.mxu0
      %1573 = vmatprep.subr.mxu0 0.0
      %1574 = vmatpush1.msra.mxu0 %v850
      %1575 = vmatprep.subr.mxu0 0.0
      %1576 = vmatpush1.msra.mxu0 %v851
      %1577 = vmatprep.subr.mxu0 0.0
      %1578 = vmatpush1.msra.mxu0 %v852
      %1579 = vmatprep.subr.mxu0 0.0
      %1580 = vmatpush1.msra.mxu0 %v853
      %1581 = vmatprep.subr.mxu0 0.0
      %1582 = vmatpush1.msra.mxu0 %v854
      %1583 = vmatprep.subr.mxu0 0.0
      %1584 = vmatpush1.msra.mxu0 %v855
      %1585 = vmatprep.subr.mxu0 0.0
      %1586 = vmatpush1.msra.mxu0 %v856
      %1587 = vmatprep.subr.mxu0 0.0
      %1588 = vmatpush1.msra.mxu0 %v857
      %1589 = vmatprep.subr.mxu0 0.0
      %1590 = vmatpush1.msra.mxu0 %v858
      %1591 = vmatprep.subr.mxu0 0.0
      %1592 = vmatpush1.msra.mxu0 %v859
      %1593 = vmatprep.subr.mxu0 0.0
      %1594 = vmatpush1.msra.mxu0 %v860
      %1595 = vmatprep.subr.mxu0 0.0
      %1596 = vmatpush1.msra.mxu0 %v861
      %1597 = vmatprep.subr.mxu0 0.0
      %1598 = vmatpush1.msra.mxu0 %v862
      %1599 = vmatprep.subr.mxu0 0.0
      %1600 = vmatpush1.msra.mxu0 %v863
      %1601 = vmatprep.subr.mxu0 0.0
      %1602 = vmatpush1.msra.mxu0 %v864
      %1603 = vmatprep.subr.mxu0 0.0
      %1604 = vmatpush1.msra.mxu0 %v865
      %1605 = vmatprep.subr.mxu0 0.0
      %1606 = vmatpush1.msra.mxu0 %v866
      %1607 = vmatprep.subr.mxu0 0.0
      %1608 = vmatpush1.msra.mxu0 %v867
      %1609 = vmatprep.subr.mxu0 0.0
      %1610 = vmatpush1.msra.mxu0 %v868
      %1611 = vmatprep.subr.mxu0 0.0
      %1612 = vmatpush1.msra.mxu0 %v869
      %1613 = vmatprep.subr.mxu0 0.0
      %1614 = vmatpush1.msra.mxu0 %v870
      %1615 = vmatprep.subr.mxu0 0.0
      %1616 = vmatpush1.msra.mxu0 %v871
      %1617 = vmatprep.subr.mxu0 0.0
      %1618 = vmatpush1.msra.mxu0 %v872
      %1619 = vmatprep.subr.mxu0 0.0
      %1620 = vmatpush1.msra.mxu0 %v873
      %1621 = vmatprep.subr.mxu0 0.0
      %1622 = vmatpush1.msra.mxu0 %v874
      %1623 = vmatprep.subr.mxu0 0.0
      %1624 = vmatpush1.msra.mxu0 %v875
      %1625 = vmatprep.subr.mxu0 0.0
      %1626 = vmatpush1.msra.mxu0 %v876
      %1627 = vmatprep.subr.mxu0 0.0
      %1628 = vmatpush1.msra.mxu0 %v877
      %1629 = vmatprep.subr.mxu0 0.0
      %1630 = vmatpush1.msra.mxu0 %v878
      %1631 = vmatprep.subr.mxu0 0.0
      %1632 = vmatpush1.msra.mxu0 %v879
      %1633 = vmatprep.subr.mxu0 0.0
      %1634 = vmatpush1.msra.mxu0 %v880
      %1635 = vmatprep.subr.mxu0 0.0
      %1636 = vmatpush1.msra.mxu0 %v881
      %1637 = vmatprep.mubr.f32.mxu0 %v690
      %1638 = vmatmul.mubr.f32.gmra.mrb[0].mxu0 %v658
      %v1639 = vpop.f32.mrb[0].mxu0
      %v1640 = vadd.f32 %v1415, %v1639
      %v1641 = vpop.f32.mrb[0].mxu0
      %1642 = vmatprep.mubr.f32.mxu0 %v691
      %1643 = vmatmul.mubr.f32.gmra.mrb[0].mxu0 %v659
      %v1644 = vpop.f32.mrb[0].mxu0
      %v1645 = vadd.f32 %v1420, %v1644
      %v1646 = vpop.f32.mrb[0].mxu0
      %1647 = vmatprep.mubr.f32.mxu0 %v692
      %1648 = vmatmul.mubr.f32.gmra.mrb[0].mxu0 %v660
      %v1649 = vpop.f32.mrb[0].mxu0
      %v1650 = vadd.f32 %v1425, %v1649
      %v1651 = vpop.f32.mrb[0].mxu0
      %1652 = vmatprep.mubr.f32.mxu0 %v693
      %1653 = vmatmul.mubr.f32.gmra.mrb[0].mxu0 %v661
      %v1654 = vpop.f32.mrb[0].mxu0
      %v1655 = vadd.f32 %v1430, %v1654
      %v1656 = vpop.f32.mrb[0].mxu0
      %1657 = vmatprep.mubr.f32.mxu0 %v694
      %1658 = vmatmul.mubr.f32.gmra.mrb[0].mxu0 %v662
      %v1659 = vpop.f32.mrb[0].mxu0
      %v1660 = vadd.f32 %v1435, %v1659
      %v1661 = vpop.f32.mrb[0].mxu0
      %1662 = vmatprep.mubr.f32.mxu0 %v695
      %1663 = vmatmul.mubr.f32.gmra.mrb[0].mxu0 %v663
      %v1664 = vpop.f32.mrb[0].mxu0
      %v1665 = vadd.f32 %v1440, %v1664
      %v1666 = vpop.f32.mrb[0].mxu0
      %1667 = vmatprep.mubr.f32.mxu0 %v696
      %1668 = vmatmul.mubr.f32.gmra.mrb[0].mxu0 %v664
      %v1669 = vpop.f32.mrb[0].mxu0
      %v1670 = vadd.f32 %v1445, %v1669
      %v1671 = vpop.f32.mrb[0].mxu0
      %1672 = vmatprep.mubr.f32.mxu0 %v697
      %1673 = vmatmul.mubr.f32.gmra.mrb[0].mxu0 %v665
      %v1674 = vpop.f32.mrb[0].mxu0
      %v1675 = vadd.f32 %v1450, %v1674
      %v1676 = vpop.f32.mrb[0].mxu0
      %1677 = vmatprep.mubr.f32.mxu0 %v698
      %1678 = vmatmul.mubr.f32.gmra.mrb[0].mxu0 %v666
      %v1679 = vpop.f32.mrb[0].mxu0
      %v1680 = vadd.f32 %v1455, %v1679
      %v1681 = vpop.f32.mrb[0].mxu0
      %1682 = vmatprep.mubr.f32.mxu0 %v699
      %1683 = vmatmul.mubr.f32.gmra.mrb[0].mxu0 %v667
      %v1684 = vpop.f32.mrb[0].mxu0
      %v1685 = vadd.f32 %v1460, %v1684
      %v1686 = vpop.f32.mrb[0].mxu0
      %1687 = vmatprep.mubr.f32.mxu0 %v700
      %1688 = vmatmul.mubr.f32.gmra.mrb[0].mxu0 %v668
      %v1689 = vpop.f32.mrb[0].mxu0
      %v1690 = vadd.f32 %v1465, %v1689
      %v1691 = vpop.f32.mrb[0].mxu0
      %1692 = vmatprep.mubr.f32.mxu0 %v701
      %1693 = vmatmul.mubr.f32.gmra.mrb[0].mxu0 %v669
      %v1694 = vpop.f32.mrb[0].mxu0
      %v1695 = vadd.f32 %v1470, %v1694
      %v1696 = vpop.f32.mrb[0].mxu0
      %1697 = vmatprep.mubr.f32.mxu0 %v702
      %1698 = vmatmul.mubr.f32.gmra.mrb[0].mxu0 %v670
      %v1699 = vpop.f32.mrb[0].mxu0
      %v1700 = vadd.f32 %v1475, %v1699
      %v1701 = vpop.f32.mrb[0].mxu0
      %1702 = vmatprep.mubr.f32.mxu0 %v703
      %1703 = vmatmul.mubr.f32.gmra.mrb[0].mxu0 %v671
      %v1704 = vpop.f32.mrb[0].mxu0
      %v1705 = vadd.f32 %v1480, %v1704
      %v1706 = vpop.f32.mrb[0].mxu0
      %1707 = vmatprep.mubr.f32.mxu0 %v704
      %1708 = vmatmul.mubr.f32.gmra.mrb[0].mxu0 %v672
      %v1709 = vpop.f32.mrb[0].mxu0
      %v1710 = vadd.f32 %v1485, %v1709
      %v1711 = vpop.f32.mrb[0].mxu0
      %1712 = vmatprep.mubr.f32.mxu0 %v705
      %1713 = vmatmul.mubr.f32.gmra.mrb[0].mxu0 %v673
      %v1714 = vpop.f32.mrb[0].mxu0
      %v1715 = vadd.f32 %v1490, %v1714
      %v1716 = vpop.f32.mrb[0].mxu0
      %1717 = vmatprep.mubr.f32.mxu0 %v706
      %1718 = vmatmul.mubr.f32.gmra.mrb[0].mxu0 %v674
      %v1719 = vpop.f32.mrb[0].mxu0
      %v1720 = vadd.f32 %v1495, %v1719
      %v1721 = vpop.f32.mrb[0].mxu0
      %1722 = vmatprep.mubr.f32.mxu0 %v707
      %1723 = vmatmul.mubr.f32.gmra.mrb[0].mxu0 %v675
      %v1724 = vpop.f32.mrb[0].mxu0
      %v1725 = vadd.f32 %v1500, %v1724
      %v1726 = vpop.f32.mrb[0].mxu0
      %1727 = vmatprep.mubr.f32.mxu0 %v708
      %1728 = vmatmul.mubr.f32.gmra.mrb[0].mxu0 %v676
      %v1729 = vpop.f32.mrb[0].mxu0
      %v1730 = vadd.f32 %v1505, %v1729
      %v1731 = vpop.f32.mrb[0].mxu0
      %1732 = vmatprep.mubr.f32.mxu0 %v709
      %1733 = vmatmul.mubr.f32.gmra.mrb[0].mxu0 %v677
      %v1734 = vpop.f32.mrb[0].mxu0
      %v1735 = vadd.f32 %v1510, %v1734
      %v1736 = vpop.f32.mrb[0].mxu0
      %1737 = vmatprep.mubr.f32.mxu0 %v710
      %1738 = vmatmul.mubr.f32.gmra.mrb[0].mxu0 %v678
      %v1739 = vpop.f32.mrb[0].mxu0
      %v1740 = vadd.f32 %v1515, %v1739
      %v1741 = vpop.f32.mrb[0].mxu0
      %1742 = vmatprep.mubr.f32.mxu0 %v711
      %1743 = vmatmul.mubr.f32.gmra.mrb[0].mxu0 %v679
      %v1744 = vpop.f32.mrb[0].mxu0
      %v1745 = vadd.f32 %v1520, %v1744
      %v1746 = vpop.f32.mrb[0].mxu0
      %1747 = vmatprep.mubr.f32.mxu0 %v712
      %1748 = vmatmul.mubr.f32.gmra.mrb[0].mxu0 %v680
      %v1749 = vpop.f32.mrb[0].mxu0
      %v1750 = vadd.f32 %v1525, %v1749
      %v1751 = vpop.f32.mrb[0].mxu0
      %1752 = vmatprep.mubr.f32.mxu0 %v713
      %1753 = vmatmul.mubr.f32.gmra.mrb[0].mxu0 %v681
      %v1754 = vpop.f32.mrb[0].mxu0
      %v1755 = vadd.f32 %v1530, %v1754
      %v1756 = vpop.f32.mrb[0].mxu0
      %1757 = vmatprep.mubr.f32.mxu0 %v714
      %1758 = vmatmul.mubr.f32.gmra.mrb[0].mxu0 %v682
      %v1759 = vpop.f32.mrb[0].mxu0
      %v1760 = vadd.f32 %v1535, %v1759
      %v1761 = vpop.f32.mrb[0].mxu0
      %1762 = vmatprep.mubr.f32.mxu0 %v715
      %1763 = vmatmul.mubr.f32.gmra.mrb[0].mxu0 %v683
      %v1764 = vpop.f32.mrb[0].mxu0
      %v1765 = vadd.f32 %v1540, %v1764
      %v1766 = vpop.f32.mrb[0].mxu0
      %1767 = vmatprep.mubr.f32.mxu0 %v716
      %1768 = vmatmul.mubr.f32.gmra.mrb[0].mxu0 %v684
      %v1769 = vpop.f32.mrb[0].mxu0
      %v1770 = vadd.f32 %v1545, %v1769
      %v1771 = vpop.f32.mrb[0].mxu0
      %1772 = vmatprep.mubr.f32.mxu0 %v717
      %1773 = vmatmul.mubr.f32.gmra.mrb[0].mxu0 %v685
      %v1774 = vpop.f32.mrb[0].mxu0
      %v1775 = vadd.f32 %v1550, %v1774
      %v1776 = vpop.f32.mrb[0].mxu0
      %1777 = vmatprep.mubr.f32.mxu0 %v718
      %1778 = vmatmul.mubr.f32.gmra.mrb[0].mxu0 %v686
      %v1779 = vpop.f32.mrb[0].mxu0
      %v1780 = vadd.f32 %v1555, %v1779
      %v1781 = vpop.f32.mrb[0].mxu0
      %1782 = vmatprep.mubr.f32.mxu0 %v719
      %1783 = vmatmul.mubr.f32.gmra.mrb[0].mxu0 %v687
      %v1784 = vpop.f32.mrb[0].mxu0
      %v1785 = vadd.f32 %v1560, %v1784
      %v1786 = vpop.f32.mrb[0].mxu0
      %1787 = vmatprep.mubr.f32.mxu0 %v720
      %1788 = vmatmul.mubr.f32.gmra.mrb[0].mxu0 %v688
      %v1789 = vpop.f32.mrb[0].mxu0
      %v1790 = vadd.f32 %v1565, %v1789
      %v1791 = vpop.f32.mrb[0].mxu0
      %1792 = vmatprep.mubr.f32.mxu0 %v721
      %1793 = vmatmul.mubr.f32.gmra.mrb[0].mxu0 %v689
      %v1794 = vpop.f32.mrb[0].mxu0
      %v1795 = vadd.f32 %v1570, %v1794
      %v1796 = vpop.f32.mrb[0].mxu0
      %1797 = vdwg.mxu0
      %1798 = vmatprep.subr.mxu0 0.0
      %1799 = vmatpush1.msra.mxu0 %v882
      %1800 = vmatprep.subr.mxu0 0.0
      %1801 = vmatpush1.msra.mxu0 %v883
      %1802 = vmatprep.subr.mxu0 0.0
      %1803 = vmatpush1.msra.mxu0 %v884
      %1804 = vmatprep.subr.mxu0 0.0
      %1805 = vmatpush1.msra.mxu0 %v885
      %1806 = vmatprep.subr.mxu0 0.0
      %1807 = vmatpush1.msra.mxu0 %v886
      %1808 = vmatprep.subr.mxu0 0.0
      %1809 = vmatpush1.msra.mxu0 %v887
      %1810 = vmatprep.subr.mxu0 0.0
      %1811 = vmatpush1.msra.mxu0 %v888
      %1812 = vmatprep.subr.mxu0 0.0
      %1813 = vmatpush1.msra.mxu0 %v889
      %1814 = vmatprep.subr.mxu0 0.0
      %1815 = vmatpush1.msra.mxu0 %v890
      %1816 = vmatprep.subr.mxu0 0.0
      %1817 = vmatpush1.msra.mxu0 %v891
      %1818 = vmatprep.subr.mxu0 0.0
      %1819 = vmatpush1.msra.mxu0 %v892
      %1820 = vmatprep.subr.mxu0 0.0
      %1821 = vmatpush1.msra.mxu0 %v893
      %1822 = vmatprep.subr.mxu0 0.0
      %1823 = vmatpush1.msra.mxu0 %v894
      %1824 = vmatprep.subr.mxu0 0.0
      %1825 = vmatpush1.msra.mxu0 %v895
      %1826 = vmatprep.subr.mxu0 0.0
      %1827 = vmatpush1.msra.mxu0 %v896
      %1828 = vmatprep.subr.mxu0 0.0
      %1829 = vmatpush1.msra.mxu0 %v897
      %1830 = vmatprep.subr.mxu0 0.0
      %1831 = vmatpush1.msra.mxu0 0.0
      %1832 = vmatprep.subr.mxu0 0.0
      %1833 = vmatpush1.msra.mxu0 0.0
      %1834 = vmatprep.subr.mxu0 0.0
      %1835 = vmatpush1.msra.mxu0 0.0
      %1836 = vmatprep.subr.mxu0 0.0
      %1837 = vmatpush1.msra.mxu0 0.0
      %1838 = vmatprep.subr.mxu0 0.0
      %1839 = vmatpush1.msra.mxu0 0.0
      %1840 = vmatprep.subr.mxu0 0.0
      %1841 = vmatpush1.msra.mxu0 0.0
      %1842 = vmatprep.subr.mxu0 0.0
      %1843 = vmatpush1.msra.mxu0 0.0
      %1844 = vmatprep.subr.mxu0 0.0
      %1845 = vmatpush1.msra.mxu0 0.0
      %1846 = vmatprep.subr.mxu0 0.0
      %1847 = vmatpush1.msra.mxu0 0.0
      %1848 = vmatprep.subr.mxu0 0.0
      %1849 = vmatpush1.msra.mxu0 0.0
      %1850 = vmatprep.subr.mxu0 0.0
      %1851 = vmatpush1.msra.mxu0 0.0
      %1852 = vmatprep.subr.mxu0 0.0
      %1853 = vmatpush1.msra.mxu0 0.0
      %1854 = vmatprep.subr.mxu0 0.0
      %1855 = vmatpush1.msra.mxu0 0.0
      %1856 = vmatprep.subr.mxu0 0.0
      %1857 = vmatpush1.msra.mxu0 0.0
      %1858 = vmatprep.subr.mxu0 0.0
      %1859 = vmatpush1.msra.mxu0 0.0
      %1860 = vmatprep.subr.mxu0 0.0
      %1861 = vmatpush1.msra.mxu0 0.0
      %1862 = vmatprep.mubr.f32.mxu0 0.0
      %1863 = vmatmul.mubr.f32.gmra.mrb[0].mxu0 %v722
      %v1864 = vpop.f32.mrb[0].mxu0
      %v1865 = vadd.f32 %v1640, %v1864
      %v1866 = vpop.f32.mrb[0].mxu0
      %1867 = vmatprep.mubr.f32.mxu0 0.0
      %1868 = vmatmul.mubr.f32.gmra.mrb[0].mxu0 %v723
      %v1869 = vpop.f32.mrb[0].mxu0
      %v1870 = vadd.f32 %v1645, %v1869
      %v1871 = vpop.f32.mrb[0].mxu0
      %1872 = vmatprep.mubr.f32.mxu0 0.0
      %1873 = vmatmul.mubr.f32.gmra.mrb[0].mxu0 %v724
      %v1874 = vpop.f32.mrb[0].mxu0
      %v1875 = vadd.f32 %v1650, %v1874
      %v1876 = vpop.f32.mrb[0].mxu0
      %1877 = vmatprep.mubr.f32.mxu0 0.0
      %1878 = vmatmul.mubr.f32.gmra.mrb[0].mxu0 %v725
      %v1879 = vpop.f32.mrb[0].mxu0
      %v1880 = vadd.f32 %v1655, %v1879
      %v1881 = vpop.f32.mrb[0].mxu0
      %1882 = vmatprep.mubr.f32.mxu0 0.0
      %1883 = vmatmul.mubr.f32.gmra.mrb[0].mxu0 %v726
      %v1884 = vpop.f32.mrb[0].mxu0
      %v1885 = vadd.f32 %v1660, %v1884
      %v1886 = vpop.f32.mrb[0].mxu0
      %1887 = vmatprep.mubr.f32.mxu0 0.0
      %1888 = vmatmul.mubr.f32.gmra.mrb[0].mxu0 %v727
      %v1889 = vpop.f32.mrb[0].mxu0
      %v1890 = vadd.f32 %v1665, %v1889
      %v1891 = vpop.f32.mrb[0].mxu0
      %1892 = vmatprep.mubr.f32.mxu0 0.0
      %1893 = vmatmul.mubr.f32.gmra.mrb[0].mxu0 %v728
      %v1894 = vpop.f32.mrb[0].mxu0
      %v1895 = vadd.f32 %v1670, %v1894
      %v1896 = vpop.f32.mrb[0].mxu0
      %1897 = vmatprep.mubr.f32.mxu0 0.0
      %1898 = vmatmul.mubr.f32.gmra.mrb[0].mxu0 %v729
      %v1899 = vpop.f32.mrb[0].mxu0
      %v1900 = vadd.f32 %v1675, %v1899
      %v1901 = vpop.f32.mrb[0].mxu0
      %1902 = vmatprep.mubr.f32.mxu0 0.0
      %1903 = vmatmul.mubr.f32.gmra.mrb[0].mxu0 %v730
      %v1904 = vpop.f32.mrb[0].mxu0
      %v1905 = vadd.f32 %v1680, %v1904
      %v1906 = vpop.f32.mrb[0].mxu0
      %1907 = vmatprep.mubr.f32.mxu0 0.0
      %1908 = vmatmul.mubr.f32.gmra.mrb[0].mxu0 %v731
      %v1909 = vpop.f32.mrb[0].mxu0
      %v1910 = vadd.f32 %v1685, %v1909
      %v1911 = vpop.f32.mrb[0].mxu0
      %1912 = vmatprep.mubr.f32.mxu0 0.0
      %1913 = vmatmul.mubr.f32.gmra.mrb[0].mxu0 %v732
      %v1914 = vpop.f32.mrb[0].mxu0
      %v1915 = vadd.f32 %v1690, %v1914
      %v1916 = vpop.f32.mrb[0].mxu0
      %1917 = vmatprep.mubr.f32.mxu0 0.0
      %1918 = vmatmul.mubr.f32.gmra.mrb[0].mxu0 %v733
      %v1919 = vpop.f32.mrb[0].mxu0
      %v1920 = vadd.f32 %v1695, %v1919
      %v1921 = vpop.f32.mrb[0].mxu0
      %1922 = vmatprep.mubr.f32.mxu0 0.0
      %1923 = vmatmul.mubr.f32.gmra.mrb[0].mxu0 %v734
      %v1924 = vpop.f32.mrb[0].mxu0
      %v1925 = vadd.f32 %v1700, %v1924
      %v1926 = vpop.f32.mrb[0].mxu0
      %1927 = vmatprep.mubr.f32.mxu0 0.0
      %1928 = vmatmul.mubr.f32.gmra.mrb[0].mxu0 %v735
      %v1929 = vpop.f32.mrb[0].mxu0
      %v1930 = vadd.f32 %v1705, %v1929
      %v1931 = vpop.f32.mrb[0].mxu0
      %1932 = vmatprep.mubr.f32.mxu0 0.0
      %1933 = vmatmul.mubr.f32.gmra.mrb[0].mxu0 %v736
      %v1934 = vpop.f32.mrb[0].mxu0
      %v1935 = vadd.f32 %v1710, %v1934
      %v1936 = vpop.f32.mrb[0].mxu0
      %1937 = vmatprep.mubr.f32.mxu0 0.0
      %1938 = vmatmul.mubr.f32.gmra.mrb[0].mxu0 %v737
      %v1939 = vpop.f32.mrb[0].mxu0
      %v1940 = vadd.f32 %v1715, %v1939
      %v1941 = vpop.f32.mrb[0].mxu0
      %1942 = vmatprep.mubr.f32.mxu0 0.0
      %1943 = vmatmul.mubr.f32.gmra.mrb[0].mxu0 %v738
      %v1944 = vpop.f32.mrb[0].mxu0
      %v1945 = vadd.f32 %v1720, %v1944
      %v1946 = vpop.f32.mrb[0].mxu0
      %1947 = vmatprep.mubr.f32.mxu0 0.0
      %1948 = vmatmul.mubr.f32.gmra.mrb[0].mxu0 %v739
      %v1949 = vpop.f32.mrb[0].mxu0
      %v1950 = vadd.f32 %v1725, %v1949
      %v1951 = vpop.f32.mrb[0].mxu0
      %1952 = vmatprep.mubr.f32.mxu0 0.0
      %1953 = vmatmul.mubr.f32.gmra.mrb[0].mxu0 %v740
      %v1954 = vpop.f32.mrb[0].mxu0
      %v1955 = vadd.f32 %v1730, %v1954
      %v1956 = vpop.f32.mrb[0].mxu0
      %1957 = vmatprep.mubr.f32.mxu0 0.0
      %1958 = vmatmul.mubr.f32.gmra.mrb[0].mxu0 %v741
      %v1959 = vpop.f32.mrb[0].mxu0
      %v1960 = vadd.f32 %v1735, %v1959
      %v1961 = vpop.f32.mrb[0].mxu0
      %1962 = vmatprep.mubr.f32.mxu0 0.0
      %1963 = vmatmul.mubr.f32.gmra.mrb[0].mxu0 %v742
      %v1964 = vpop.f32.mrb[0].mxu0
      %v1965 = vadd.f32 %v1740, %v1964
      %v1966 = vpop.f32.mrb[0].mxu0
      %1967 = vmatprep.mubr.f32.mxu0 0.0
      %1968 = vmatmul.mubr.f32.gmra.mrb[0].mxu0 %v743
      %v1969 = vpop.f32.mrb[0].mxu0
      %v1970 = vadd.f32 %v1745, %v1969
      %v1971 = vpop.f32.mrb[0].mxu0
      %1972 = vmatprep.mubr.f32.mxu0 0.0
      %1973 = vmatmul.mubr.f32.gmra.mrb[0].mxu0 %v744
      %v1974 = vpop.f32.mrb[0].mxu0
      %v1975 = vadd.f32 %v1750, %v1974
      %v1976 = vpop.f32.mrb[0].mxu0
      %1977 = vmatprep.mubr.f32.mxu0 0.0
      %1978 = vmatmul.mubr.f32.gmra.mrb[0].mxu0 %v745
      %v1979 = vpop.f32.mrb[0].mxu0
      %v1980 = vadd.f32 %v1755, %v1979
      %v1981 = vpop.f32.mrb[0].mxu0
      %1982 = vmatprep.mubr.f32.mxu0 0.0
      %1983 = vmatmul.mubr.f32.gmra.mrb[0].mxu0 %v746
      %v1984 = vpop.f32.mrb[0].mxu0
      %v1985 = vadd.f32 %v1760, %v1984
      %v1986 = vpop.f32.mrb[0].mxu0
      %1987 = vmatprep.mubr.f32.mxu0 0.0
      %1988 = vmatmul.mubr.f32.gmra.mrb[0].mxu0 %v747
      %v1989 = vpop.f32.mrb[0].mxu0
      %v1990 = vadd.f32 %v1765, %v1989
      %v1991 = vpop.f32.mrb[0].mxu0
      %1992 = vmatprep.mubr.f32.mxu0 0.0
      %1993 = vmatmul.mubr.f32.gmra.mrb[0].mxu0 %v748
      %v1994 = vpop.f32.mrb[0].mxu0
      %v1995 = vadd.f32 %v1770, %v1994
      %v1996 = vpop.f32.mrb[0].mxu0
      %1997 = vmatprep.mubr.f32.mxu0 0.0
      %1998 = vmatmul.mubr.f32.gmra.mrb[0].mxu0 %v749
      %v1999 = vpop.f32.mrb[0].mxu0
      %v2000 = vadd.f32 %v1775, %v1999
      %v2001 = vpop.f32.mrb[0].mxu0
      %2002 = vmatprep.mubr.f32.mxu0 0.0
      %2003 = vmatmul.mubr.f32.gmra.mrb[0].mxu0 %v750
      %v2004 = vpop.f32.mrb[0].mxu0
      %v2005 = vadd.f32 %v1780, %v2004
      %v2006 = vpop.f32.mrb[0].mxu0
      %2007 = vmatprep.mubr.f32.mxu0 0.0
      %2008 = vmatmul.mubr.f32.gmra.mrb[0].mxu0 %v751
      %v2009 = vpop.f32.mrb[0].mxu0
      %v2010 = vadd.f32 %v1785, %v2009
      %v2011 = vpop.f32.mrb[0].mxu0
      %2012 = vmatprep.mubr.f32.mxu0 0.0
      %2013 = vmatmul.mubr.f32.gmra.mrb[0].mxu0 %v752
      %v2014 = vpop.f32.mrb[0].mxu0
      %v2015 = vadd.f32 %v1790, %v2014
      %v2016 = vpop.f32.mrb[0].mxu0
      %2017 = vmatprep.mubr.f32.mxu0 0.0
      %2018 = vmatmul.mubr.f32.gmra.mrb[0].mxu0 %v753
      %v2019 = vpop.f32.mrb[0].mxu0
      %v2020 = vadd.f32 %v1795, %v2019
      %v2021 = vpop.f32.mrb[0].mxu0
      %2022 = vdwg.mxu0
      %2023 = vst [vmem:[%s231] sm:$0xff] %v1865
      %2024 = vst [vmem:[%s231 + $0x8] sm:$0xff] %v1870
      %2025 = vst [vmem:[%s231 + $0x10] sm:$0xff] %v1875
      %2026 = vst [vmem:[%s231 + $0x18] sm:$0xff] %v1880
      %2027 = vst [vmem:[%s231 + $0x20] sm:$0xff] %v1885
      %2028 = vst [vmem:[%s231 + $0x28] sm:$0xff] %v1890
      %2029 = vst [vmem:[%s231 + $0x30] sm:$0xff] %v1895
      %2030 = vst [vmem:[%s231 + $0x38] sm:$0xff] %v1900
      %2031 = vst [vmem:[%s231 + $0x40] sm:$0xff] %v1905
      %2032 = vst [vmem:[%s231 + $0x48] sm:$0xff] %v1910
      %2033 = vst [vmem:[%s231 + $0x50] sm:$0xff] %v1915
      %2034 = vst [vmem:[%s231 + $0x58] sm:$0xff] %v1920
      %2035 = vst [vmem:[%s231 + $0x60] sm:$0xff] %v1925
      %2036 = vst [vmem:[%s231 + $0x68] sm:$0xff] %v1930
      %2037 = vst [vmem:[%s231 + $0x70] sm:$0xff] %v1935
      %2038 = vst [vmem:[%s231 + $0x78] sm:$0xff] %v1940
      %2039 = vst [vmem:[%s231 + $0x80] sm:$0xff] %v1945
      %2040 = vst [vmem:[%s231 + $0x88] sm:$0xff] %v1950
      %2041 = vst [vmem:[%s231 + $0x90] sm:$0xff] %v1955
      %2042 = vst [vmem:[%s231 + $0x98] sm:$0xff] %v1960
      %2043 = vst [vmem:[%s231 + $0xa0] sm:$0xff] %v1965
      %2044 = vst [vmem:[%s231 + $0xa8] sm:$0xff] %v1970
      %2045 = vst [vmem:[%s231 + $0xb0] sm:$0xff] %v1975
      %2046 = vst [vmem:[%s231 + $0xb8] sm:$0xff] %v1980
      %2047 = vst [vmem:[%s231 + $0xc0] sm:$0xff] %v1985
      %2048 = vst [vmem:[%s231 + $0xc8] sm:$0xff] %v1990
      %2049 = vst [vmem:[%s231 + $0xd0] sm:$0xff] %v1995
      %2050 = vst [vmem:[%s231 + $0xd8] sm:$0xff] %v2000
      %2051 = vst [vmem:[%s231 + $0xe0] sm:$0xff] %v2005
      %2052 = vst [vmem:[%s231 + $0xe8] sm:$0xff] %v2010
      %2053 = vst [vmem:[%s231 + $0xf0] sm:$0xff] %v2015
      %2054 = vst [vmem:[%s231 + $0xf8] sm:$0xff] %v2020
      %v2055 = vadd.f32 %v1865, %v1870
      %v2056 = vadd.f32 %v2055, %v1875
      %v2057 = vadd.f32 %v2056, %v1880
      %v2058 = vadd.f32 %v2057, %v1885
      %v2059 = vadd.f32 %v2058, %v1890
      %v2060 = vadd.f32 %v2059, %v1895
      %v2061 = vadd.f32 %v2060, %v1900
      %v2062 = vadd.f32 %v2061, %v1905
      %v2063 = vadd.f32 %v2062, %v1910
      %v2064 = vadd.f32 %v2063, %v1915
      %v2065 = vadd.f32 %v2064, %v1920
      %v2066 = vadd.f32 %v2065, %v1925
      %v2067 = vadd.f32 %v2066, %v1930
      %v2068 = vadd.f32 %v2067, %v1935
      %v2069 = vadd.f32 %v2068, %v1940
      %v2070 = vadd.f32 %v2069, %v1945
      %v2071 = vadd.f32 %v2070, %v1950
      %v2072 = vadd.f32 %v2071, %v1955
      %v2073 = vadd.f32 %v2072, %v1960
      %v2074 = vadd.f32 %v2073, %v1965
      %v2075 = vadd.f32 %v2074, %v1970
      %v2076 = vadd.f32 %v2075, %v1975
      %v2077 = vadd.f32 %v2076, %v1980
      %v2078 = vadd.f32 %v2077, %v1985
      %v2079 = vadd.f32 %v2078, %v1990
      %v2080 = vadd.f32 %v2079, %v1995
      %v2081 = vadd.f32 %v2080, %v2000
      %v2082 = vadd.f32 %v2081, %v2005
      %v2083 = vadd.f32 %v2082, %v2010
      %v2084 = vadd.f32 %v2083, %v2015
      %v2085 = vadd.f32 %v2084, %v2020
      %v2086 = vrot.slane %v2085, 4
      %v2087 = vadd.f32 %v2085, %v2086
      %v2088 = vrot.slane %v2087, 2
      %v2089 = vadd.f32 %v2087, %v2088
      %v2090 = vrot.slane %v2089, 1
      %v2091 = vadd.f32 %v2089, %v2090
      %2092 = vst [vmem:[%s235] sm:$0x1] %v2091
      %v2093 = vmul.f32 %v1865, %v1865
      %v2094 = vmul.f32 %v1870, %v1870
      %v2095 = vmul.f32 %v1875, %v1875
      %v2096 = vmul.f32 %v1880, %v1880
      %v2097 = vmul.f32 %v1885, %v1885
      %v2098 = vmul.f32 %v1890, %v1890
      %v2099 = vmul.f32 %v1895, %v1895
      %v2100 = vmul.f32 %v1900, %v1900
      %v2101 = vmul.f32 %v1905, %v1905
      %v2102 = vmul.f32 %v1910, %v1910
      %v2103 = vmul.f32 %v1915, %v1915
      %v2104 = vmul.f32 %v1920, %v1920
      %v2105 = vmul.f32 %v1925, %v1925
      %v2106 = vmul.f32 %v1930, %v1930
      %v2107 = vmul.f32 %v1935, %v1935
      %v2108 = vmul.f32 %v1940, %v1940
      %v2109 = vmul.f32 %v1945, %v1945
      %v2110 = vmul.f32 %v1950, %v1950
      %v2111 = vmul.f32 %v1955, %v1955
      %v2112 = vmul.f32 %v1960, %v1960
      %v2113 = vmul.f32 %v1965, %v1965
      %v2114 = vmul.f32 %v1970, %v1970
      %v2115 = vmul.f32 %v1975, %v1975
      %v2116 = vmul.f32 %v1980, %v1980
      %v2117 = vmul.f32 %v1985, %v1985
      %v2118 = vmul.f32 %v1990, %v1990
      %v2119 = vmul.f32 %v1995, %v1995
      %v2120 = vmul.f32 %v2000, %v2000
      %v2121 = vmul.f32 %v2005, %v2005
      %v2122 = vmul.f32 %v2010, %v2010
      %v2123 = vmul.f32 %v2015, %v2015
      %v2124 = vmul.f32 %v2020, %v2020
      %v2125 = vadd.f32 %v2093, %v2094
      %v2126 = vadd.f32 %v2125, %v2095
      %v2127 = vadd.f32 %v2126, %v2096
      %v2128 = vadd.f32 %v2127, %v2097
      %v2129 = vadd.f32 %v2128, %v2098
      %v2130 = vadd.f32 %v2129, %v2099
      %v2131 = vadd.f32 %v2130, %v2100
      %v2132 = vadd.f32 %v2131, %v2101
      %v2133 = vadd.f32 %v2132, %v2102
      %v2134 = vadd.f32 %v2133, %v2103
      %v2135 = vadd.f32 %v2134, %v2104
      %v2136 = vadd.f32 %v2135, %v2105
      %v2137 = vadd.f32 %v2136, %v2106
      %v2138 = vadd.f32 %v2137, %v2107
      %v2139 = vadd.f32 %v2138, %v2108
      %v2140 = vadd.f32 %v2139, %v2109
      %v2141 = vadd.f32 %v2140, %v2110
      %v2142 = vadd.f32 %v2141, %v2111
      %v2143 = vadd.f32 %v2142, %v2112
      %v2144 = vadd.f32 %v2143, %v2113
      %v2145 = vadd.f32 %v2144, %v2114
      %v2146 = vadd.f32 %v2145, %v2115
      %v2147 = vadd.f32 %v2146, %v2116
      %v2148 = vadd.f32 %v2147, %v2117
      %v2149 = vadd.f32 %v2148, %v2118
      %v2150 = vadd.f32 %v2149, %v2119
      %v2151 = vadd.f32 %v2150, %v2120
      %v2152 = vadd.f32 %v2151, %v2121
      %v2153 = vadd.f32 %v2152, %v2122
      %v2154 = vadd.f32 %v2153, %v2123
      %v2155 = vadd.f32 %v2154, %v2124
      %v2156 = vrot.slane %v2155, 4
      %v2157 = vadd.f32 %v2155, %v2156
      %v2158 = vrot.slane %v2157, 2
      %v2159 = vadd.f32 %v2157, %v2158
      %v2160 = vrot.slane %v2159, 1
      %v2161 = vadd.f32 %v2159, %v2160
      %2162 = vst [vmem:[%s235 + $0x1] sm:$0x1] %v2161
      %p2163 = scmp.lt.s32.totalorder %s17, 1
      %s2164 = scalar_select %p2163, %s17, 1
      %s2165 = smul.addr %s2164, 32
      %s2166 = smul.addr %s2165, 8
      %s2167 = scalar_lea.vmem %s4, %s2166
      %p2168 = scmp.lt.s32.totalorder %s17, 1
      %s2169 = scalar_select %p2168, %s17, 1
      %s2170 = smul.addr %s2169, 2
      %s2171 = scalar_lea.vmem %s5, %s2170
      // Predicated region
      $region37: #{_bottleneck_forward.5} parent=35 // pred_check
        %p2172 = pneg %p124
      $region38: #{_bottleneck_forward.5} parent=35 // pred_check_branch
        %2174 = sbr.rel (%p2172) target = $region40
      $region39: #{_bottleneck_forward.5} parent=35 // pred_region
        _
      $region40: #{_bottleneck_forward.5} parent=35 // pred_fallthru
        _
      // Predicated region
      $region41: #{_bottleneck_forward.5} parent=35 // pred_check
        %p2175 = pneg %p150
      $region42: #{_bottleneck_forward.5} parent=35 // pred_check_branch
        %2177 = sbr.rel (%p2175) target = $region44
      $region43: #{_bottleneck_forward.5} parent=35 // pred_region
        _
      $region44: #{_bottleneck_forward.5} parent=35 // pred_fallthru
        _
    $region36: #{_bottleneck_forward.5} parent=5 // pred_fallthru
      _
    %p2178 = scmp.le.s32.totalorder 2, %s12
    // Predicated region
    $region45: #{_bottleneck_forward.5} parent=5 // pred_check
      %p2179 = pneg %p2178
    $region46: #{_bottleneck_forward.5} parent=5 // pred_check_branch
      %2181 = sbr.rel (%p2179) target = $region48
    $region47: #{_bottleneck_forward.5} parent=5 // pred_region
      %s2182 = ssub.s32 %s12, 2
      // Predicated region
      $region49: #{_bottleneck_forward.5} parent=47 // pred_check
        %p2183 = pneg %p130
      $region50: #{_bottleneck_forward.5} parent=47 // pred_check_branch
        %2185 = sbr.rel (%p2183) target = $region52
      $region51: #{_bottleneck_forward.5} parent=47 // pred_region
        %p2186 = scmp.lt.s32.totalorder %s18, 1
        %s2187 = scalar_select %p2186, %s18, 1
        %s2188 = smul.addr %s2187, 32
        %s2189 = smul.addr %s2188, 8
        %s2190 = scalar_lea.vmem %s4, %s2189
      $region52: #{_bottleneck_forward.5} parent=47 // pred_fallthru
        _
      // Predicated region
      $region53: #{_bottleneck_forward.5} parent=47 // pred_check
        %p2191 = pneg %p156
      $region54: #{_bottleneck_forward.5} parent=47 // pred_check_branch
        %2193 = sbr.rel (%p2191) target = $region56
      $region55: #{_bottleneck_forward.5} parent=47 // pred_region
        %p2194 = scmp.lt.s32.totalorder %s18, 1
        %s2195 = scalar_select %p2194, %s18, 1
        %s2196 = smul.addr %s2195, 2
        %s2197 = scalar_lea.vmem %s5, %s2196
      $region56: #{_bottleneck_forward.5} parent=47 // pred_fallthru
        _
    $region48: #{_bottleneck_forward.5} parent=5 // pred_fallthru
      _
  $region6: #{_bottleneck_forward.5} parent=0 // loop_footer
    %s16 = sadd.s32 1, %s12
  $region7: #{_bottleneck_forward.5} parent=0 // loop_footer_branch
    %11 = sbr.rel target = $region3
  $region8: #{_bottleneck_forward.5} parent=0 // loop_exit
    _

</llo_original>
